<compile_context>
chip_gen: v7x
topology: tpu7x:2x2x1
jax: 0.10.0
libtpu: 0.0.40
codegen_flags: <defaults>
</compile_context>

<pallas_src>
import jax
import jax.numpy as jnp
from jax.experimental import pallas as pl
from jax.experimental.pallas import tpu as pltpu

KERNEL_SIZE = 2
SEQ_LEN = 160  # the torch module hardcodes lin_dim = num_channels[-1] * 160


# ----------------------------------------------------------------------------
# Fused Pallas kernel (whole network, one batch element per grid step)
# ----------------------------------------------------------------------------
def _make_fused_tcn_kernel(block_cfg, ksize, seq_len, c_last):
    """block_cfg: list of {"dilation": int, "has_ds": bool} (static config)."""

    def kernel(*refs):
        # ---- unpack refs: inputs..., output, scratch ----
        it = iter(refs)
        x_ref = next(it)                                   # (1, Cin0, T)
        blk_refs = []
        for cfg in block_cfg:
            names = ["w1", "b1", "w2", "b2"] + (["wd", "bd"] if cfg["has_ds"] else [])
            blk_refs.append({n: next(it) for n in names})
        w_fc1_ref = next(it)                               # (C_last, T, ff)
        b_fc1_ref = next(it)                               # (1, ff)
        w_fc2_ref = next(it)                               # (ff, n_classes)
        b_fc2_ref = next(it)                               # (1, n_classes)
        o_ref = next(it)                                   # (1, 1, n_classes)
        h_scratch = next(it)                               # VMEM (C_last, T)

        def shift_matrix(s):
            # S[t', t] = 1 iff t' == t - s, so (h @ S)[:, t] == h[:, t - s]
            # (zeros for t < s).  Entries are exactly 0/1 -> the "shift" matmul
            # is numerically exact; this implements causal pad + chomp.
            row = jax.lax.broadcasted_iota(jnp.int32, (seq_len, seq_len), 0)
            col = jax.lax.broadcasted_iota(jnp.int32, (seq_len, seq_len), 1)
            return jnp.where(row + s == col, 1.0, 0.0).astype(jnp.float32)

        def causal_conv(h, w_ref, b_ref, smats):
            # h: (Cin, T); w_ref: (K, Cout, Cin); b_ref: (Cout, 1) -> (Cout, T)
            out = b_ref[...] + jax.lax.dot_general(        # unshifted tap (j = K-1)
                w_ref[ksize - 1], h, (((1,), (0,)), ((), ())),
                preferred_element_type=jnp.float32)
            for j in range(ksize - 1):                     # dilated (shifted) taps
                tap = jax.lax.dot_general(                 # (Cin, T) causal shift
                    h, smats[j], (((1,), (0,)), ((), ())),
                    preferred_element_type=jnp.float32)
                out = out + jax.lax.dot_general(
                    w_ref[j], tap, (((1,), (0,)), ((), ())),
                    preferred_element_type=jnp.float32)
            return out

        h = x_ref[0].astype(jnp.float32)                   # (Cin0, T)
        for cfg, r in zip(block_cfg, blk_refs):
            d = cfg["dilation"]
            # one set of shift matrices per block, shared by conv1/conv2
            smats = [shift_matrix(d * (ksize - 1 - j)) for j in range(ksize - 1)]
            inp = h
            h1 = jnp.maximum(causal_conv(inp, r["w1"], r["b1"], smats), 0.0)
            h2 = jnp.maximum(causal_conv(h1, r["w2"], r["b2"], smats), 0.0)
            if cfg["has_ds"]:                              # fused 1x1 downsample
                res = jax.lax.dot_general(
                    r["wd"][...], inp, (((1,), (0,)), ((), ())),
                    preferred_element_type=jnp.float32) + r["bd"][...]
            else:
                res = inp
            h = jnp.maximum(h2 + res, 0.0)                 # (C, T)

        # ---- classifier: Linear(C*T -> ff) -> ReLU -> Linear(ff -> classes) ----
        # torch flattens (B, C, T) row-major; h is already (C, T), so row c of h
        # contracts with w_fc1[c] (T, ff): no transpose / reshape required.
        h_scratch[...] = h
        hid = b_fc1_ref[...]                               # (1, ff)
        for c in range(c_last):
            hid = hid + jnp.dot(h_scratch[c:c + 1, :], w_fc1_ref[c],
                                preferred_element_type=jnp.float32)
        hid = jnp.maximum(hid, 0.0)
        out = jnp.dot(hid, w_fc2_ref[...],
                      preferred_element_type=jnp.float32) + b_fc2_ref[...]
        o_ref[0] = out.astype(o_ref.dtype)

    return kernel


# ----------------------------------------------------------------------------
# Wrapper: weight re-layout (free, parameter-build-time) + pallas_call plumbing
# ----------------------------------------------------------------------------
def _prepare_inputs(params, seq_len):
    block_cfg, flat = [], []
    for blk in params["blocks"]:
        cout = blk["w1"].shape[2]
        has_ds = blk["wd"] is not None
        block_cfg.append({"dilation": blk["dilation"], "has_ds": has_ds})
        flat.append(jnp.transpose(blk["w1"], (0, 2, 1)))   # (K, Cout, Cin)
        flat.append(blk["b1"].reshape(cout, 1))
        flat.append(jnp.transpose(blk["w2"], (0, 2, 1)))   # (K, Cout, Cout)
        flat.append(blk["b2"].reshape(cout, 1))
        if has_ds:
            flat.append(blk["wd"].T)                       # (Cout, Cin)
            flat.append(blk["bd"].reshape(cout, 1))
    c_last = params["blocks"][-1]["w1"].shape[2]
    ff = params["w_fc1"].shape[1]
    n_classes = params["w_fc2"].shape[1]
    flat += [params["w_fc1"].reshape(c_last, seq_len, ff), # (C_last, T, ff)
             params["b_fc1"].reshape(1, ff),
             params["w_fc2"],                              # (ff, n_classes)
             params["b_fc2"].reshape(1, n_classes)]
    return block_cfg, flat, c_last, n_classes


def temporal_conv_net_forward(x, params):
    """x: (B, T, C) float32 — the same tensor the torch module receives
    (torch permutes to (B, C, T) internally; we transpose once here)."""
    B, T, _ = x.shape
    ksize = params["blocks"][0]["w1"].shape[0]
    block_cfg, weights, c_last, n_classes = _prepare_inputs(params, T)
    x_cbt = jnp.transpose(x, (0, 2, 1))                    # (B, Cin0, T), tiny

    kernel = _make_fused_tcn_kernel(block_cfg, ksize, T, c_last)

    in_specs = [pl.BlockSpec((1,) + x_cbt.shape[1:], lambda b: (b, 0, 0))]
    for w in weights:                                      # full-array blocks
        in_specs.append(pl.BlockSpec(w.shape, lambda b, _nd=w.ndim: (0,) * _nd))

    out = pl.pallas_call(
        kernel,
        out_shape=jax.ShapeDtypeStruct((B, 1, n_classes), x.dtype),
        grid=(B,),
        in_specs=in_specs,
        out_specs=pl.BlockSpec((1, 1, n_classes), lambda b: (b, 0, 0)),
        scratch_shapes=[pltpu.VMEM((c_last, T), jnp.float32)],
        compiler_params=pltpu.CompilerParams(
            dimension_semantics=("parallel",)),            # 2 TCs on v7x
    )(x_cbt, *weights)
    return out.reshape(B, n_classes)


# ----------------------------------------------------------------------------
# Parameter init (storage layouts: conv w (K, Cin, Cout), linear (in, out))
# ----------------------------------------------------------------------------
def init_params(key, num_inputs, num_channels, num_classes, ff, kernel_size):
    blocks = []
    cin = num_inputs
    for i, cout in enumerate(num_channels):
        key, k1, k2, k3, k4, k5, k6 = jax.random.split(key, 7)
        blk = {
            "dilation": 2 ** i,
            "w1": 0.01 * jax.random.normal(k1, (kernel_size, cin, cout), jnp.float32),
            "b1": 0.01 * jax.random.normal(k2, (cout,), jnp.float32),
            "w2": 0.01 * jax.random.normal(k3, (kernel_size, cout, cout), jnp.float32),
            "b2": 0.01 * jax.random.normal(k4, (cout,), jnp.float32),
            "wd": (0.01 * jax.random.normal(k5, (cin, cout), jnp.float32)
                   if cin != cout else None),
            "bd": (0.01 * jax.random.normal(k6, (cout,), jnp.float32)
                   if cin != cout else None),
        }
        blocks.append(blk)
        cin = cout
    lin_dim = num_channels[-1] * SEQ_LEN
    key, k1, k2, k3, k4 = jax.random.split(key, 5)
    return {
        "blocks": blocks,
        "w_fc1": 0.05 * jax.random.normal(k1, (lin_dim, ff), jnp.float32),
        "b_fc1": 0.05 * jax.random.normal(k2, (ff,), jnp.float32),
        "w_fc2": 0.05 * jax.random.normal(k3, (ff, num_classes), jnp.float32),
        "b_fc2": 0.05 * jax.random.normal(k4, (num_classes,), jnp.float32),
    }


# ----------------------------------------------------------------------------
# Pure-JAX reference (for correctness check)
# ----------------------------------------------------------------------------
def _ref_conv(x, w, b, d):
    K = w.shape[0]
    L = x.shape[1]
    xpad = jnp.pad(x, ((0, 0), (d * (K - 1), 0), (0, 0)))
    out = sum(jnp.einsum("btc,cd->btd", xpad[:, j * d: j * d + L, :], w[j])
              for j in range(K)) + b
    return out


def reference_forward(x, params):
    h = x
    for blk in params["blocks"]:
        inp = h
        d = blk["dilation"]
        h1 = jnp.maximum(_ref_conv(inp, blk["w1"], blk["b1"], d), 0.0)
        h2 = jnp.maximum(_ref_conv(h1, blk["w2"], blk["b2"], d), 0.0)
        res = inp if blk["wd"] is None else jnp.einsum(
            "btc,cd->btd", inp, blk["wd"]) + blk["bd"]
        h = jnp.maximum(h2 + res, 0.0)
    B, T, C = h.shape
    flat = jnp.transpose(h, (0, 2, 1)).reshape(B, C * T)
    hid = jnp.maximum(flat @ params["w_fc1"] + params["b_fc1"], 0.0)
    return hid @ params["w_fc2"] + params["b_fc2"]


# ----------------------------------------------------------------------------
if __name__ == "__main__":
    B = 2
    num_inputs = 4
    num_channels = [8, 8]
    num_classes = 5
    ff = 32

    key = jax.random.PRNGKey(0)
    key, kp, kx = jax.random.split(key, 3)
    params = init_params(kp, num_inputs, num_channels, num_classes, ff, KERNEL_SIZE)
    x = jax.random.normal(kx, (B, SEQ_LEN, num_inputs), jnp.float32)

    out = temporal_conv_net_forward(x, params)
    out = jax.block_until_ready(out)
    assert out.shape == (B, num_classes), out.shape

    ref = jax.block_until_ready(reference_forward(x, params))
    assert jnp.allclose(out, ref, rtol=1e-4, atol=1e-5), \
        f"max abs diff {jnp.max(jnp.abs(out - ref))}"

    print("KERNEL_OK")
</pallas_src>

<mosaic_0001>
module attributes {stable_mosaic.version = 11 : i64} {
  func.func @kernel(%arg0: i32, %arg1: memref<1x4x160xf32, #tpu.memory_space<vmem>>, %arg2: memref<2x8x4xf32, #tpu.memory_space<vmem>>, %arg3: memref<8x1xf32, #tpu.memory_space<vmem>>, %arg4: memref<2x8x8xf32, #tpu.memory_space<vmem>>, %arg5: memref<8x1xf32, #tpu.memory_space<vmem>>, %arg6: memref<8x4xf32, #tpu.memory_space<vmem>>, %arg7: memref<8x1xf32, #tpu.memory_space<vmem>>, %arg8: memref<2x8x8xf32, #tpu.memory_space<vmem>>, %arg9: memref<8x1xf32, #tpu.memory_space<vmem>>, %arg10: memref<2x8x8xf32, #tpu.memory_space<vmem>>, %arg11: memref<8x1xf32, #tpu.memory_space<vmem>>, %arg12: memref<8x160x32xf32, #tpu.memory_space<vmem>>, %arg13: memref<1x32xf32, #tpu.memory_space<vmem>>, %arg14: memref<32x5xf32, #tpu.memory_space<vmem>>, %arg15: memref<1x5xf32, #tpu.memory_space<vmem>>, %arg16: memref<1x1x5xf32, #tpu.memory_space<vmem>>, %arg17: memref<8x160xf32, #tpu.memory_space<vmem>>) attributes {dimension_semantics = [#tpu.dimension_semantics<parallel>], iteration_bounds = array<i64: 2>, scalar_prefetch = 0 : i64, scratch_operands = 1 : i64, tpu.core_type = #tpu.core_type<tc>, window_params = [{transform_indices = @transform_0, window_bounds = array<i64: 1, 4, 160>}, {pipeline_mode = #tpu.pipeline_mode<synchronous>, transform_indices = @transform_1, window_bounds = array<i64: 2, 8, 4>}, {pipeline_mode = #tpu.pipeline_mode<synchronous>, transform_indices = @transform_2, window_bounds = array<i64: 8, 1>}, {pipeline_mode = #tpu.pipeline_mode<synchronous>, transform_indices = @transform_3, window_bounds = array<i64: 2, 8, 8>}, {pipeline_mode = #tpu.pipeline_mode<synchronous>, transform_indices = @transform_4, window_bounds = array<i64: 8, 1>}, {pipeline_mode = #tpu.pipeline_mode<synchronous>, transform_indices = @transform_5, window_bounds = array<i64: 8, 4>}, {pipeline_mode = #tpu.pipeline_mode<synchronous>, transform_indices = @transform_6, window_bounds = array<i64: 8, 1>}, {pipeline_mode = #tpu.pipeline_mode<synchronous>, transform_indices = @transform_7, window_bounds = array<i64: 2, 8, 8>}, {pipeline_mode = #tpu.pipeline_mode<synchronous>, transform_indices = @transform_8, window_bounds = array<i64: 8, 1>}, {pipeline_mode = #tpu.pipeline_mode<synchronous>, transform_indices = @transform_9, window_bounds = array<i64: 2, 8, 8>}, {pipeline_mode = #tpu.pipeline_mode<synchronous>, transform_indices = @transform_10, window_bounds = array<i64: 8, 1>}, {pipeline_mode = #tpu.pipeline_mode<synchronous>, transform_indices = @transform_11, window_bounds = array<i64: 8, 160, 32>}, {pipeline_mode = #tpu.pipeline_mode<synchronous>, transform_indices = @transform_12, window_bounds = array<i64: 1, 32>}, {pipeline_mode = #tpu.pipeline_mode<synchronous>, transform_indices = @transform_13, window_bounds = array<i64: 32, 5>}, {pipeline_mode = #tpu.pipeline_mode<synchronous>, transform_indices = @transform_14, window_bounds = array<i64: 1, 5>}, {transform_indices = @transform_15, window_bounds = array<i64: 1, 1, 5>}]} {
    %c0 = arith.constant 0 : index
    %c0_0 = arith.constant 0 : index
    %c0_1 = arith.constant 0 : index
    %0 = vector.load %arg1[%c0, %c0_0, %c0_1] : memref<1x4x160xf32, #tpu.memory_space<vmem>>, vector<1x4x160xf32>
    %1 = vector.shape_cast %0 : vector<1x4x160xf32> to vector<4x160xf32>
    %2 = tpu.iota {dimensions = array<i32: 0>} : vector<160x160xi32>
    %3 = tpu.iota {dimensions = array<i32: 1>} : vector<160x160xi32>
    %c1_i32 = arith.constant 1 : i32
    %4 = vector.broadcast %c1_i32 : i32 to vector<160x160xi32>
    %5 = arith.addi %2, %4 : vector<160x160xi32>
    %6 = arith.cmpi eq, %5, %3 : vector<160x160xi32>
    %cst = arith.constant 1.000000e+00 : f32
    %cst_2 = arith.constant 0.000000e+00 : f32
    %7 = vector.broadcast %cst : f32 to vector<160x160xf32>
    %8 = vector.broadcast %cst_2 : f32 to vector<160x160xf32>
    %9 = arith.select %6, %7, %8 : vector<160x160xi1>, vector<160x160xf32>
    %c0_3 = arith.constant 0 : index
    %c0_4 = arith.constant 0 : index
    %10 = vector.load %arg3[%c0_3, %c0_4] : memref<8x1xf32, #tpu.memory_space<vmem>>, vector<8x1xf32>
    %c1 = arith.constant 1 : index
    %c0_5 = arith.constant 0 : index
    %c0_6 = arith.constant 0 : index
    %11 = vector.load %arg2[%c1, %c0_5, %c0_6] : memref<2x8x4xf32, #tpu.memory_space<vmem>>, vector<1x8x4xf32>
    %12 = vector.shape_cast %11 : vector<1x8x4xf32> to vector<8x4xf32>
    %cst_7 = arith.constant dense<0.000000e+00> : vector<8x160xf32>
    %13 = tpu.matmul %12, %1, %cst_7 {dimension_numbers = #tpu.dot_dimension_numbers<[1], [0], [0], [1], [0, 0, 1, 1], [], []>} : vector<8x4xf32>, vector<4x160xf32>, vector<8x160xf32> -> vector<8x160xf32>
    %14 = vector.broadcast %10 : vector<8x1xf32> to vector<8x160xf32>
    %15 = arith.addf %14, %13 : vector<8x160xf32>
    %cst_8 = arith.constant dense<0.000000e+00> : vector<4x160xf32>
    %16 = tpu.matmul %1, %9, %cst_8 {dimension_numbers = #tpu.dot_dimension_numbers<[1], [0], [0], [1], [0, 0, 1, 1], [], []>} : vector<4x160xf32>, vector<160x160xf32>, vector<4x160xf32> -> vector<4x160xf32>
    %c0_9 = arith.constant 0 : index
    %c0_10 = arith.constant 0 : index
    %c0_11 = arith.constant 0 : index
    %17 = vector.load %arg2[%c0_9, %c0_10, %c0_11] : memref<2x8x4xf32, #tpu.memory_space<vmem>>, vector<1x8x4xf32>
    %18 = vector.shape_cast %17 : vector<1x8x4xf32> to vector<8x4xf32>
    %cst_12 = arith.constant dense<0.000000e+00> : vector<8x160xf32>
    %19 = tpu.matmul %18, %16, %cst_12 {dimension_numbers = #tpu.dot_dimension_numbers<[1], [0], [0], [1], [0, 0, 1, 1], [], []>} : vector<8x4xf32>, vector<4x160xf32>, vector<8x160xf32> -> vector<8x160xf32>
    %20 = arith.addf %15, %19 : vector<8x160xf32>
    %cst_13 = arith.constant 0.000000e+00 : f32
    %21 = vector.broadcast %cst_13 : f32 to vector<8x160xf32>
    %22 = arith.maximumf %20, %21 : vector<8x160xf32>
    %c0_14 = arith.constant 0 : index
    %c0_15 = arith.constant 0 : index
    %23 = vector.load %arg5[%c0_14, %c0_15] : memref<8x1xf32, #tpu.memory_space<vmem>>, vector<8x1xf32>
    %c1_16 = arith.constant 1 : index
    %c0_17 = arith.constant 0 : index
    %c0_18 = arith.constant 0 : index
    %24 = vector.load %arg4[%c1_16, %c0_17, %c0_18] : memref<2x8x8xf32, #tpu.memory_space<vmem>>, vector<1x8x8xf32>
    %25 = vector.shape_cast %24 : vector<1x8x8xf32> to vector<8x8xf32>
    %cst_19 = arith.constant dense<0.000000e+00> : vector<8x160xf32>
    %26 = tpu.matmul %25, %22, %cst_19 {dimension_numbers = #tpu.dot_dimension_numbers<[1], [0], [0], [1], [0, 0, 1, 1], [], []>} : vector<8x8xf32>, vector<8x160xf32>, vector<8x160xf32> -> vector<8x160xf32>
    %27 = vector.broadcast %23 : vector<8x1xf32> to vector<8x160xf32>
    %28 = arith.addf %27, %26 : vector<8x160xf32>
    %cst_20 = arith.constant dense<0.000000e+00> : vector<8x160xf32>
    %29 = tpu.matmul %22, %9, %cst_20 {dimension_numbers = #tpu.dot_dimension_numbers<[1], [0], [0], [1], [0, 0, 1, 1], [], []>} : vector<8x160xf32>, vector<160x160xf32>, vector<8x160xf32> -> vector<8x160xf32>
    %c0_21 = arith.constant 0 : index
    %c0_22 = arith.constant 0 : index
    %c0_23 = arith.constant 0 : index
    %30 = vector.load %arg4[%c0_21, %c0_22, %c0_23] : memref<2x8x8xf32, #tpu.memory_space<vmem>>, vector<1x8x8xf32>
    %31 = vector.shape_cast %30 : vector<1x8x8xf32> to vector<8x8xf32>
    %cst_24 = arith.constant dense<0.000000e+00> : vector<8x160xf32>
    %32 = tpu.matmul %31, %29, %cst_24 {dimension_numbers = #tpu.dot_dimension_numbers<[1], [0], [0], [1], [0, 0, 1, 1], [], []>} : vector<8x8xf32>, vector<8x160xf32>, vector<8x160xf32> -> vector<8x160xf32>
    %33 = arith.addf %28, %32 : vector<8x160xf32>
    %cst_25 = arith.constant 0.000000e+00 : f32
    %34 = vector.broadcast %cst_25 : f32 to vector<8x160xf32>
    %35 = arith.maximumf %33, %34 : vector<8x160xf32>
    %c0_26 = arith.constant 0 : index
    %c0_27 = arith.constant 0 : index
    %36 = vector.load %arg6[%c0_26, %c0_27] : memref<8x4xf32, #tpu.memory_space<vmem>>, vector<8x4xf32>
    %cst_28 = arith.constant dense<0.000000e+00> : vector<8x160xf32>
    %37 = tpu.matmul %36, %1, %cst_28 {dimension_numbers = #tpu.dot_dimension_numbers<[1], [0], [0], [1], [0, 0, 1, 1], [], []>} : vector<8x4xf32>, vector<4x160xf32>, vector<8x160xf32> -> vector<8x160xf32>
    %c0_29 = arith.constant 0 : index
    %c0_30 = arith.constant 0 : index
    %38 = vector.load %arg7[%c0_29, %c0_30] : memref<8x1xf32, #tpu.memory_space<vmem>>, vector<8x1xf32>
    %39 = vector.broadcast %38 : vector<8x1xf32> to vector<8x160xf32>
    %40 = arith.addf %37, %39 : vector<8x160xf32>
    %41 = arith.addf %35, %40 : vector<8x160xf32>
    %cst_31 = arith.constant 0.000000e+00 : f32
    %42 = vector.broadcast %cst_31 : f32 to vector<8x160xf32>
    %43 = arith.maximumf %41, %42 : vector<8x160xf32>
    %44 = tpu.iota {dimensions = array<i32: 0>} : vector<160x160xi32>
    %45 = tpu.iota {dimensions = array<i32: 1>} : vector<160x160xi32>
    %c2_i32 = arith.constant 2 : i32
    %46 = vector.broadcast %c2_i32 : i32 to vector<160x160xi32>
    %47 = arith.addi %44, %46 : vector<160x160xi32>
    %48 = arith.cmpi eq, %47, %45 : vector<160x160xi32>
    %cst_32 = arith.constant 1.000000e+00 : f32
    %cst_33 = arith.constant 0.000000e+00 : f32
    %49 = vector.broadcast %cst_32 : f32 to vector<160x160xf32>
    %50 = vector.broadcast %cst_33 : f32 to vector<160x160xf32>
    %51 = arith.select %48, %49, %50 : vector<160x160xi1>, vector<160x160xf32>
    %c0_34 = arith.constant 0 : index
    %c0_35 = arith.constant 0 : index
    %52 = vector.load %arg9[%c0_34, %c0_35] : memref<8x1xf32, #tpu.memory_space<vmem>>, vector<8x1xf32>
    %c1_36 = arith.constant 1 : index
    %c0_37 = arith.constant 0 : index
    %c0_38 = arith.constant 0 : index
    %53 = vector.load %arg8[%c1_36, %c0_37, %c0_38] : memref<2x8x8xf32, #tpu.memory_space<vmem>>, vector<1x8x8xf32>
    %54 = vector.shape_cast %53 : vector<1x8x8xf32> to vector<8x8xf32>
    %cst_39 = arith.constant dense<0.000000e+00> : vector<8x160xf32>
    %55 = tpu.matmul %54, %43, %cst_39 {dimension_numbers = #tpu.dot_dimension_numbers<[1], [0], [0], [1], [0, 0, 1, 1], [], []>} : vector<8x8xf32>, vector<8x160xf32>, vector<8x160xf32> -> vector<8x160xf32>
    %56 = vector.broadcast %52 : vector<8x1xf32> to vector<8x160xf32>
    %57 = arith.addf %56, %55 : vector<8x160xf32>
    %cst_40 = arith.constant dense<0.000000e+00> : vector<8x160xf32>
    %58 = tpu.matmul %43, %51, %cst_40 {dimension_numbers = #tpu.dot_dimension_numbers<[1], [0], [0], [1], [0, 0, 1, 1], [], []>} : vector<8x160xf32>, vector<160x160xf32>, vector<8x160xf32> -> vector<8x160xf32>
    %c0_41 = arith.constant 0 : index
    %c0_42 = arith.constant 0 : index
    %c0_43 = arith.constant 0 : index
    %59 = vector.load %arg8[%c0_41, %c0_42, %c0_43] : memref<2x8x8xf32, #tpu.memory_space<vmem>>, vector<1x8x8xf32>
    %60 = vector.shape_cast %59 : vector<1x8x8xf32> to vector<8x8xf32>
    %cst_44 = arith.constant dense<0.000000e+00> : vector<8x160xf32>
    %61 = tpu.matmul %60, %58, %cst_44 {dimension_numbers = #tpu.dot_dimension_numbers<[1], [0], [0], [1], [0, 0, 1, 1], [], []>} : vector<8x8xf32>, vector<8x160xf32>, vector<8x160xf32> -> vector<8x160xf32>
    %62 = arith.addf %57, %61 : vector<8x160xf32>
    %cst_45 = arith.constant 0.000000e+00 : f32
    %63 = vector.broadcast %cst_45 : f32 to vector<8x160xf32>
    %64 = arith.maximumf %62, %63 : vector<8x160xf32>
    %c0_46 = arith.constant 0 : index
    %c0_47 = arith.constant 0 : index
    %65 = vector.load %arg11[%c0_46, %c0_47] : memref<8x1xf32, #tpu.memory_space<vmem>>, vector<8x1xf32>
    %c1_48 = arith.constant 1 : index
    %c0_49 = arith.constant 0 : index
    %c0_50 = arith.constant 0 : index
    %66 = vector.load %arg10[%c1_48, %c0_49, %c0_50] : memref<2x8x8xf32, #tpu.memory_space<vmem>>, vector<1x8x8xf32>
    %67 = vector.shape_cast %66 : vector<1x8x8xf32> to vector<8x8xf32>
    %cst_51 = arith.constant dense<0.000000e+00> : vector<8x160xf32>
    %68 = tpu.matmul %67, %64, %cst_51 {dimension_numbers = #tpu.dot_dimension_numbers<[1], [0], [0], [1], [0, 0, 1, 1], [], []>} : vector<8x8xf32>, vector<8x160xf32>, vector<8x160xf32> -> vector<8x160xf32>
    %69 = vector.broadcast %65 : vector<8x1xf32> to vector<8x160xf32>
    %70 = arith.addf %69, %68 : vector<8x160xf32>
    %cst_52 = arith.constant dense<0.000000e+00> : vector<8x160xf32>
    %71 = tpu.matmul %64, %51, %cst_52 {dimension_numbers = #tpu.dot_dimension_numbers<[1], [0], [0], [1], [0, 0, 1, 1], [], []>} : vector<8x160xf32>, vector<160x160xf32>, vector<8x160xf32> -> vector<8x160xf32>
    %c0_53 = arith.constant 0 : index
    %c0_54 = arith.constant 0 : index
    %c0_55 = arith.constant 0 : index
    %72 = vector.load %arg10[%c0_53, %c0_54, %c0_55] : memref<2x8x8xf32, #tpu.memory_space<vmem>>, vector<1x8x8xf32>
    %73 = vector.shape_cast %72 : vector<1x8x8xf32> to vector<8x8xf32>
    %cst_56 = arith.constant dense<0.000000e+00> : vector<8x160xf32>
    %74 = tpu.matmul %73, %71, %cst_56 {dimension_numbers = #tpu.dot_dimension_numbers<[1], [0], [0], [1], [0, 0, 1, 1], [], []>} : vector<8x8xf32>, vector<8x160xf32>, vector<8x160xf32> -> vector<8x160xf32>
    %75 = arith.addf %70, %74 : vector<8x160xf32>
    %cst_57 = arith.constant 0.000000e+00 : f32
    %76 = vector.broadcast %cst_57 : f32 to vector<8x160xf32>
    %77 = arith.maximumf %75, %76 : vector<8x160xf32>
    %78 = arith.addf %77, %43 : vector<8x160xf32>
    %cst_58 = arith.constant 0.000000e+00 : f32
    %79 = vector.broadcast %cst_58 : f32 to vector<8x160xf32>
    %80 = arith.maximumf %78, %79 : vector<8x160xf32>
    %c0_59 = arith.constant 0 : index
    %c0_60 = arith.constant 0 : index
    %81 = vector.load %arg17[%c0_59, %c0_60] : memref<8x160xf32, #tpu.memory_space<vmem>>, vector<8x160xf32>
    tpu.vector_store %arg17[%c0_59, %c0_60], %80 {strides = array<i32>} : memref<8x160xf32, #tpu.memory_space<vmem>>, vector<8x160xf32>,
    %c0_61 = arith.constant 0 : index
    %c0_62 = arith.constant 0 : index
    %82 = vector.load %arg13[%c0_61, %c0_62] : memref<1x32xf32, #tpu.memory_space<vmem>>, vector<1x32xf32>
    %c0_63 = arith.constant 0 : index
    %c0_64 = arith.constant 0 : index
    %83 = vector.load %arg17[%c0_63, %c0_64] : memref<8x160xf32, #tpu.memory_space<vmem>>, vector<1x160xf32>
    %c0_65 = arith.constant 0 : index
    %c0_66 = arith.constant 0 : index
    %c0_67 = arith.constant 0 : index
    %84 = vector.load %arg12[%c0_65, %c0_66, %c0_67] : memref<8x160x32xf32, #tpu.memory_space<vmem>>, vector<1x160x32xf32>
    %85 = vector.shape_cast %84 : vector<1x160x32xf32> to vector<160x32xf32>
    %cst_68 = arith.constant dense<0.000000e+00> : vector<1x32xf32>
    %86 = tpu.matmul %83, %85, %cst_68 {dimension_numbers = #tpu.dot_dimension_numbers<[1], [0], [0], [1], [0, 0, 1, 1], [], []>} : vector<1x160xf32>, vector<160x32xf32>, vector<1x32xf32> -> vector<1x32xf32>
    %87 = arith.addf %82, %86 : vector<1x32xf32>
    %c1_69 = arith.constant 1 : index
    %c0_70 = arith.constant 0 : index
    %88 = vector.load %arg17[%c1_69, %c0_70] : memref<8x160xf32, #tpu.memory_space<vmem>>, vector<1x160xf32>
    %c1_71 = arith.constant 1 : index
    %c0_72 = arith.constant 0 : index
    %c0_73 = arith.constant 0 : index
    %89 = vector.load %arg12[%c1_71, %c0_72, %c0_73] : memref<8x160x32xf32, #tpu.memory_space<vmem>>, vector<1x160x32xf32>
    %90 = vector.shape_cast %89 : vector<1x160x32xf32> to vector<160x32xf32>
    %cst_74 = arith.constant dense<0.000000e+00> : vector<1x32xf32>
    %91 = tpu.matmul %88, %90, %cst_74 {dimension_numbers = #tpu.dot_dimension_numbers<[1], [0], [0], [1], [0, 0, 1, 1], [], []>} : vector<1x160xf32>, vector<160x32xf32>, vector<1x32xf32> -> vector<1x32xf32>
    %92 = arith.addf %87, %91 : vector<1x32xf32>
    %c2 = arith.constant 2 : index
    %c0_75 = arith.constant 0 : index
    %93 = vector.load %arg17[%c2, %c0_75] : memref<8x160xf32, #tpu.memory_space<vmem>>, vector<1x160xf32>
    %c2_76 = arith.constant 2 : index
    %c0_77 = arith.constant 0 : index
    %c0_78 = arith.constant 0 : index
    %94 = vector.load %arg12[%c2_76, %c0_77, %c0_78] : memref<8x160x32xf32, #tpu.memory_space<vmem>>, vector<1x160x32xf32>
    %95 = vector.shape_cast %94 : vector<1x160x32xf32> to vector<160x32xf32>
    %cst_79 = arith.constant dense<0.000000e+00> : vector<1x32xf32>
    %96 = tpu.matmul %93, %95, %cst_79 {dimension_numbers = #tpu.dot_dimension_numbers<[1], [0], [0], [1], [0, 0, 1, 1], [], []>} : vector<1x160xf32>, vector<160x32xf32>, vector<1x32xf32> -> vector<1x32xf32>
    %97 = arith.addf %92, %96 : vector<1x32xf32>
    %c3 = arith.constant 3 : index
    %c0_80 = arith.constant 0 : index
    %98 = vector.load %arg17[%c3, %c0_80] : memref<8x160xf32, #tpu.memory_space<vmem>>, vector<1x160xf32>
    %c3_81 = arith.constant 3 : index
    %c0_82 = arith.constant 0 : index
    %c0_83 = arith.constant 0 : index
    %99 = vector.load %arg12[%c3_81, %c0_82, %c0_83] : memref<8x160x32xf32, #tpu.memory_space<vmem>>, vector<1x160x32xf32>
    %100 = vector.shape_cast %99 : vector<1x160x32xf32> to vector<160x32xf32>
    %cst_84 = arith.constant dense<0.000000e+00> : vector<1x32xf32>
    %101 = tpu.matmul %98, %100, %cst_84 {dimension_numbers = #tpu.dot_dimension_numbers<[1], [0], [0], [1], [0, 0, 1, 1], [], []>} : vector<1x160xf32>, vector<160x32xf32>, vector<1x32xf32> -> vector<1x32xf32>
    %102 = arith.addf %97, %101 : vector<1x32xf32>
    %c4 = arith.constant 4 : index
    %c0_85 = arith.constant 0 : index
    %103 = vector.load %arg17[%c4, %c0_85] : memref<8x160xf32, #tpu.memory_space<vmem>>, vector<1x160xf32>
    %c4_86 = arith.constant 4 : index
    %c0_87 = arith.constant 0 : index
    %c0_88 = arith.constant 0 : index
    %104 = vector.load %arg12[%c4_86, %c0_87, %c0_88] : memref<8x160x32xf32, #tpu.memory_space<vmem>>, vector<1x160x32xf32>
    %105 = vector.shape_cast %104 : vector<1x160x32xf32> to vector<160x32xf32>
    %cst_89 = arith.constant dense<0.000000e+00> : vector<1x32xf32>
    %106 = tpu.matmul %103, %105, %cst_89 {dimension_numbers = #tpu.dot_dimension_numbers<[1], [0], [0], [1], [0, 0, 1, 1], [], []>} : vector<1x160xf32>, vector<160x32xf32>, vector<1x32xf32> -> vector<1x32xf32>
    %107 = arith.addf %102, %106 : vector<1x32xf32>
    %c5 = arith.constant 5 : index
    %c0_90 = arith.constant 0 : index
    %108 = vector.load %arg17[%c5, %c0_90] : memref<8x160xf32, #tpu.memory_space<vmem>>, vector<1x160xf32>
    %c5_91 = arith.constant 5 : index
    %c0_92 = arith.constant 0 : index
    %c0_93 = arith.constant 0 : index
    %109 = vector.load %arg12[%c5_91, %c0_92, %c0_93] : memref<8x160x32xf32, #tpu.memory_space<vmem>>, vector<1x160x32xf32>
    %110 = vector.shape_cast %109 : vector<1x160x32xf32> to vector<160x32xf32>
    %cst_94 = arith.constant dense<0.000000e+00> : vector<1x32xf32>
    %111 = tpu.matmul %108, %110, %cst_94 {dimension_numbers = #tpu.dot_dimension_numbers<[1], [0], [0], [1], [0, 0, 1, 1], [], []>} : vector<1x160xf32>, vector<160x32xf32>, vector<1x32xf32> -> vector<1x32xf32>
    %112 = arith.addf %107, %111 : vector<1x32xf32>
    %c6 = arith.constant 6 : index
    %c0_95 = arith.constant 0 : index
    %113 = vector.load %arg17[%c6, %c0_95] : memref<8x160xf32, #tpu.memory_space<vmem>>, vector<1x160xf32>
    %c6_96 = arith.constant 6 : index
    %c0_97 = arith.constant 0 : index
    %c0_98 = arith.constant 0 : index
    %114 = vector.load %arg12[%c6_96, %c0_97, %c0_98] : memref<8x160x32xf32, #tpu.memory_space<vmem>>, vector<1x160x32xf32>
    %115 = vector.shape_cast %114 : vector<1x160x32xf32> to vector<160x32xf32>
    %cst_99 = arith.constant dense<0.000000e+00> : vector<1x32xf32>
    %116 = tpu.matmul %113, %115, %cst_99 {dimension_numbers = #tpu.dot_dimension_numbers<[1], [0], [0], [1], [0, 0, 1, 1], [], []>} : vector<1x160xf32>, vector<160x32xf32>, vector<1x32xf32> -> vector<1x32xf32>
    %117 = arith.addf %112, %116 : vector<1x32xf32>
    %c7 = arith.constant 7 : index
    %c0_100 = arith.constant 0 : index
    %118 = vector.load %arg17[%c7, %c0_100] : memref<8x160xf32, #tpu.memory_space<vmem>>, vector<1x160xf32>
    %c7_101 = arith.constant 7 : index
    %c0_102 = arith.constant 0 : index
    %c0_103 = arith.constant 0 : index
    %119 = vector.load %arg12[%c7_101, %c0_102, %c0_103] : memref<8x160x32xf32, #tpu.memory_space<vmem>>, vector<1x160x32xf32>
    %120 = vector.shape_cast %119 : vector<1x160x32xf32> to vector<160x32xf32>
    %cst_104 = arith.constant dense<0.000000e+00> : vector<1x32xf32>
    %121 = tpu.matmul %118, %120, %cst_104 {dimension_numbers = #tpu.dot_dimension_numbers<[1], [0], [0], [1], [0, 0, 1, 1], [], []>} : vector<1x160xf32>, vector<160x32xf32>, vector<1x32xf32> -> vector<1x32xf32>
    %122 = arith.addf %117, %121 : vector<1x32xf32>
    %cst_105 = arith.constant 0.000000e+00 : f32
    %123 = vector.broadcast %cst_105 : f32 to vector<1x32xf32>
    %124 = arith.maximumf %122, %123 : vector<1x32xf32>
    %c0_106 = arith.constant 0 : index
    %c0_107 = arith.constant 0 : index
    %125 = vector.load %arg14[%c0_106, %c0_107] : memref<32x5xf32, #tpu.memory_space<vmem>>, vector<32x5xf32>
    %cst_108 = arith.constant dense<0.000000e+00> : vector<1x5xf32>
    %126 = tpu.matmul %124, %125, %cst_108 {dimension_numbers = #tpu.dot_dimension_numbers<[1], [0], [0], [1], [0, 0, 1, 1], [], []>} : vector<1x32xf32>, vector<32x5xf32>, vector<1x5xf32> -> vector<1x5xf32>
    %c0_109 = arith.constant 0 : index
    %c0_110 = arith.constant 0 : index
    %127 = vector.load %arg15[%c0_109, %c0_110] : memref<1x5xf32, #tpu.memory_space<vmem>>, vector<1x5xf32>
    %128 = arith.addf %126, %127 : vector<1x5xf32>
    %c0_111 = arith.constant 0 : index
    %c0_112 = arith.constant 0 : index
    %c0_113 = arith.constant 0 : index
    %129 = vector.load %arg16[%c0_111, %c0_112, %c0_113] : memref<1x1x5xf32, #tpu.memory_space<vmem>>, vector<1x1x5xf32>
    %130 = vector.shape_cast %129 : vector<1x1x5xf32> to vector<1x5xf32>
    %131 = vector.shape_cast %128 : vector<1x5xf32> to vector<1x1x5xf32>
    tpu.vector_store %arg16[%c0_111, %c0_112, %c0_113], %131 {strides = array<i32>} : memref<1x1x5xf32, #tpu.memory_space<vmem>>, vector<1x1x5xf32>,
    return
  }
  func.func @transform_0(%arg0: i32) -> (i32, i32, i32) {
    %c0_i32 = arith.constant 0 : i32
    %c0_i32_0 = arith.constant 0 : i32
    %c0_i32_1 = arith.constant 0 : i32
    return %arg0, %c0_i32, %c0_i32_0 : i32, i32, i32
  }
  func.func @transform_1(%arg0: i32) -> (i32, i32, i32) {
    %c0_i32 = arith.constant 0 : i32
    %c0_i32_0 = arith.constant 0 : i32
    %c0_i32_1 = arith.constant 0 : i32
    %c0_i32_2 = arith.constant 0 : i32
    return %c0_i32, %c0_i32_0, %c0_i32_1 : i32, i32, i32
  }
  func.func @transform_2(%arg0: i32) -> (i32, i32) {
    %c0_i32 = arith.constant 0 : i32
    %c0_i32_0 = arith.constant 0 : i32
    %c0_i32_1 = arith.constant 0 : i32
    return %c0_i32, %c0_i32_0 : i32, i32
  }
  func.func @transform_3(%arg0: i32) -> (i32, i32, i32) {
    %c0_i32 = arith.constant 0 : i32
    %c0_i32_0 = arith.constant 0 : i32
    %c0_i32_1 = arith.constant 0 : i32
    %c0_i32_2 = arith.constant 0 : i32
    return %c0_i32, %c0_i32_0, %c0_i32_1 : i32, i32, i32
  }
  func.func @transform_4(%arg0: i32) -> (i32, i32) {
    %c0_i32 = arith.constant 0 : i32
    %c0_i32_0 = arith.constant 0 : i32
    %c0_i32_1 = arith.constant 0 : i32
    return %c0_i32, %c0_i32_0 : i32, i32
  }
  func.func @transform_5(%arg0: i32) -> (i32, i32) {
    %c0_i32 = arith.constant 0 : i32
    %c0_i32_0 = arith.constant 0 : i32
    %c0_i32_1 = arith.constant 0 : i32
    return %c0_i32, %c0_i32_0 : i32, i32
  }
  func.func @transform_6(%arg0: i32) -> (i32, i32) {
    %c0_i32 = arith.constant 0 : i32
    %c0_i32_0 = arith.constant 0 : i32
    %c0_i32_1 = arith.constant 0 : i32
    return %c0_i32, %c0_i32_0 : i32, i32
  }
  func.func @transform_7(%arg0: i32) -> (i32, i32, i32) {
    %c0_i32 = arith.constant 0 : i32
    %c0_i32_0 = arith.constant 0 : i32
    %c0_i32_1 = arith.constant 0 : i32
    %c0_i32_2 = arith.constant 0 : i32
    return %c0_i32, %c0_i32_0, %c0_i32_1 : i32, i32, i32
  }
  func.func @transform_8(%arg0: i32) -> (i32, i32) {
    %c0_i32 = arith.constant 0 : i32
    %c0_i32_0 = arith.constant 0 : i32
    %c0_i32_1 = arith.constant 0 : i32
    return %c0_i32, %c0_i32_0 : i32, i32
  }
  func.func @transform_9(%arg0: i32) -> (i32, i32, i32) {
    %c0_i32 = arith.constant 0 : i32
    %c0_i32_0 = arith.constant 0 : i32
    %c0_i32_1 = arith.constant 0 : i32
    %c0_i32_2 = arith.constant 0 : i32
    return %c0_i32, %c0_i32_0, %c0_i32_1 : i32, i32, i32
  }
  func.func @transform_10(%arg0: i32) -> (i32, i32) {
    %c0_i32 = arith.constant 0 : i32
    %c0_i32_0 = arith.constant 0 : i32
    %c0_i32_1 = arith.constant 0 : i32
    return %c0_i32, %c0_i32_0 : i32, i32
  }
  func.func @transform_11(%arg0: i32) -> (i32, i32, i32) {
    %c0_i32 = arith.constant 0 : i32
    %c0_i32_0 = arith.constant 0 : i32
    %c0_i32_1 = arith.constant 0 : i32
    %c0_i32_2 = arith.constant 0 : i32
    return %c0_i32, %c0_i32_0, %c0_i32_1 : i32, i32, i32
  }
  func.func @transform_12(%arg0: i32) -> (i32, i32) {
    %c0_i32 = arith.constant 0 : i32
    %c0_i32_0 = arith.constant 0 : i32
    %c0_i32_1 = arith.constant 0 : i32
    return %c0_i32, %c0_i32_0 : i32, i32
  }
  func.func @transform_13(%arg0: i32) -> (i32, i32) {
    %c0_i32 = arith.constant 0 : i32
    %c0_i32_0 = arith.constant 0 : i32
    %c0_i32_1 = arith.constant 0 : i32
    return %c0_i32, %c0_i32_0 : i32, i32
  }
  func.func @transform_14(%arg0: i32) -> (i32, i32) {
    %c0_i32 = arith.constant 0 : i32
    %c0_i32_0 = arith.constant 0 : i32
    %c0_i32_1 = arith.constant 0 : i32
    return %c0_i32, %c0_i32_0 : i32, i32
  }
  func.func @transform_15(%arg0: i32) -> (i32, i32, i32) {
    %c0_i32 = arith.constant 0 : i32
    %c0_i32_0 = arith.constant 0 : i32
    %c0_i32_1 = arith.constant 0 : i32
    return %arg0, %c0_i32, %c0_i32_0 : i32, i32, i32
  }
}

</mosaic_0001>

<llo_original>
// kernel: tpu_custom_call.1
$region0: #{tpu_custom_call.1}
  #allocation0 [shape = 'u32[]', space=smem, size = 0x4, offset = 0x4, fixed_abs, tag = 'smem constant byte address 0x4 - core index']
  #allocation1 [shape = 'u32[144,128]{1,0:T(1,128)}', space=vmem, size = 0x12000, scoped, tag = 'internal scratch']
  #allocation2 [shape = 'f32[8,160]{1,0:T(8,128)}', space=vmem, size = 0x2000, scoped, tag = 'scratch operand']
  %s0 = inlined_call_operand.vmem [shape: f32[2,4,160], index: 0, kind: input, shape index: {}]
  %s1 = inlined_call_operand.vmem [shape: f32[2,8,4], index: 1, kind: input, shape index: {}]
  %s2 = inlined_call_operand.vmem [shape: f32[8,1], index: 2, kind: input, shape index: {}]
  %s3 = inlined_call_operand.vmem [shape: f32[2,8,8], index: 3, kind: input, shape index: {}]
  %s4 = inlined_call_operand.vmem [shape: f32[8,1], index: 4, kind: input, shape index: {}]
  %s5 = inlined_call_operand.vmem [shape: f32[8,4], index: 5, kind: input, shape index: {}]
  %s6 = inlined_call_operand.vmem [shape: f32[8,1], index: 6, kind: input, shape index: {}]
  %s7 = inlined_call_operand.vmem [shape: f32[2,8,8], index: 7, kind: input, shape index: {}]
  %s8 = inlined_call_operand.vmem [shape: f32[8,1], index: 8, kind: input, shape index: {}]
  %s9 = inlined_call_operand.vmem [shape: f32[2,8,8], index: 9, kind: input, shape index: {}]
  %s10 = inlined_call_operand.vmem [shape: f32[8,1], index: 10, kind: input, shape index: {}]
  %s11 = inlined_call_operand.vmem [shape: f32[8,160,32], index: 11, kind: input, shape index: {}]
  %s12 = inlined_call_operand.vmem [shape: f32[1,32], index: 12, kind: input, shape index: {}]
  %s13 = inlined_call_operand.vmem [shape: f32[32,5], index: 13, kind: input, shape index: {}]
  %s14 = inlined_call_operand.vmem [shape: f32[1,5], index: 14, kind: input, shape index: {}]
  %s15 = inlined_call_operand.hbm [shape: f32[2,1,5], index: 15, kind: output, shape index: {}]
  %s16 = sld [smem:[#allocation0]]
  $region93: #{tpu_custom_call.1} parent=0
    _
  %s18 = ssub.s32 1, %s16
  %s19 = scalar_select 0, %s18, %s16
  $region1: #{tpu_custom_call.1} parent=0
    #allocation3 [shape = 'u8[1024]{0}', space=vmem, size = 0x400, scoped, tag = 'output window, operand 0']
    #allocation4 [shape = 's32[2]{0}', space=sflag, size = 0x8, scoped, tag = 'scoped memory for tpu_custom_call.1']
    %20 = vsyncpa [#allocation4], 0
    %s21 = scalar_lea.sflag [#allocation4], 1
    %22 = vsyncpa %s21, 0
    loop: start=0, step=1, limit=4
    $region2: #{tpu_custom_call.1} parent=1 // loop_pre_header
      _
    $region3: #{tpu_custom_call.1} parent=1 // loop_header
      %s24 = sphi 0, %s28
      %p25 = scmp.ge.s32.totalorder %s24, 4
      %s34 = sphi 0, %s36
      %s37 = sphi 0, %s34
      %s38 = sphi 0, %s37
      %s54 = sphi 0, %s38
      %s58 = sphi 0, %s58
      %s60 = sphi 0, %s58
      %s61 = sphi 0, %s60
      %s75 = sphi 0, %s61
      %s79 = sphi 0, %s79
      %s81 = sphi 0, %s79
      %s82 = sphi 0, %s81
      %s96 = sphi 0, %s82
      %s100 = sphi 0, %s100
      %s102 = sphi 0, %s100
      %s103 = sphi 0, %s102
      %s117 = sphi 0, %s103
      %s121 = sphi 0, %s121
      %s123 = sphi 0, %s121
      %s124 = sphi 0, %s123
      %s138 = sphi 0, %s124
      %s142 = sphi 0, %s142
      %s144 = sphi 0, %s142
      %s145 = sphi 0, %s144
      %s159 = sphi 0, %s145
      %s163 = sphi 0, %s163
      %s165 = sphi 0, %s163
      %s166 = sphi 0, %s165
      %s180 = sphi 0, %s166
      %s184 = sphi 0, %s184
      %s186 = sphi 0, %s184
      %s187 = sphi 0, %s186
      %s201 = sphi 0, %s187
      %s205 = sphi 0, %s205
      %s207 = sphi 0, %s205
      %s208 = sphi 0, %s207
      %s222 = sphi 0, %s208
      %s226 = sphi 0, %s226
      %s228 = sphi 0, %s226
      %s229 = sphi 0, %s228
      %s243 = sphi 0, %s229
      %s247 = sphi 0, %s247
      %s249 = sphi 0, %s247
      %s250 = sphi 0, %s249
      %s264 = sphi 0, %s250
      %s268 = sphi 0, %s268
      %s270 = sphi 0, %s268
      %s271 = sphi 0, %s270
      %s285 = sphi 0, %s271
      %s289 = sphi 0, %s289
      %s291 = sphi 0, %s289
      %s292 = sphi 0, %s291
      %s306 = sphi 0, %s292
      %s310 = sphi 0, %s310
      %s312 = sphi 0, %s310
      %s313 = sphi 0, %s312
      %s327 = sphi 0, %s313
      %s331 = sphi 0, %s331
      %s333 = sphi 0, %s331
      %s334 = sphi 0, %s333
      %s348 = sphi 0, %s334
      %s354 = sphi 0, %s356
      %s357 = sphi 0, %s354
      %s358 = sphi 0, %s357
      %s374 = sphi 0, %s358
    $region4: #{tpu_custom_call.1} parent=1 // loop_header_branch
      %27 = sbr.rel (%p25) target = $region8
    $region5: #{tpu_custom_call.1} parent=1 // loop_body
      %s29 = ssub.s32 %s24, 1
      %s30 = ssub.s32 %s24, 2
      %s31 = sadd.s32 %s24, 1
      %s32 = ssub.s32 %s24, %s31
      %p33 = scmp.eq.s32.totalorder %s32, 0
      %s35 = sadd.s32 %s34, 1
      %s36 = scalar_select %p33, %s34, %s35
      %p39 = pneg %p33
      %p40 = scmp.eq.s32.totalorder %s24, 1
      %p41 = por %p39, %p40
      %p42 = scmp.ne.s32.totalorder %s34, %s37
      %p43 = scmp.eq.s32.totalorder %s24, 0
      %p44 = por %p42, %p43
      %p45 = scmp.ne.s32.totalorder %s34, %s37
      %p46 = scmp.eq.s32.totalorder %s29, 1
      %p47 = por %p45, %p46
      %p48 = scmp.ne.s32.totalorder %s37, %s38
      %p49 = scmp.eq.s32.totalorder %s29, 0
      %p50 = por %p48, %p49
      %p51 = scmp.ne.s32.totalorder %s37, %s38
      %p52 = scmp.eq.s32.totalorder %s30, 1
      %p53 = por %p51, %p52
      %p55 = scmp.ne.s32.totalorder %s38, %s54
      %p56 = scmp.eq.s32.totalorder %s30, 0
      %p57 = por %p55, %p56
      %s59 = sadd.s32 %s58, 1
      %p62 = scmp.eq.s32.totalorder %s24, 1
      %p63 = scmp.ne.s32.totalorder %s58, %s60
      %p64 = scmp.eq.s32.totalorder %s24, 0
      %p65 = por %p63, %p64
      %p66 = scmp.ne.s32.totalorder %s58, %s60
      %p67 = scmp.eq.s32.totalorder %s29, 1
      %p68 = por %p66, %p67
      %p69 = scmp.ne.s32.totalorder %s60, %s61
      %p70 = scmp.eq.s32.totalorder %s29, 0
      %p71 = por %p69, %p70
      %p72 = scmp.ne.s32.totalorder %s60, %s61
      %p73 = scmp.eq.s32.totalorder %s30, 1
      %p74 = por %p72, %p73
      %p76 = scmp.ne.s32.totalorder %s61, %s75
      %p77 = scmp.eq.s32.totalorder %s30, 0
      %p78 = por %p76, %p77
      %s80 = sadd.s32 %s79, 1
      %p83 = scmp.eq.s32.totalorder %s24, 1
      %p84 = scmp.ne.s32.totalorder %s79, %s81
      %p85 = scmp.eq.s32.totalorder %s24, 0
      %p86 = por %p84, %p85
      %p87 = scmp.ne.s32.totalorder %s79, %s81
      %p88 = scmp.eq.s32.totalorder %s29, 1
      %p89 = por %p87, %p88
      %p90 = scmp.ne.s32.totalorder %s81, %s82
      %p91 = scmp.eq.s32.totalorder %s29, 0
      %p92 = por %p90, %p91
      %p93 = scmp.ne.s32.totalorder %s81, %s82
      %p94 = scmp.eq.s32.totalorder %s30, 1
      %p95 = por %p93, %p94
      %p97 = scmp.ne.s32.totalorder %s82, %s96
      %p98 = scmp.eq.s32.totalorder %s30, 0
      %p99 = por %p97, %p98
      %s101 = sadd.s32 %s100, 1
      %p104 = scmp.eq.s32.totalorder %s24, 1
      %p105 = scmp.ne.s32.totalorder %s100, %s102
      %p106 = scmp.eq.s32.totalorder %s24, 0
      %p107 = por %p105, %p106
      %p108 = scmp.ne.s32.totalorder %s100, %s102
      %p109 = scmp.eq.s32.totalorder %s29, 1
      %p110 = por %p108, %p109
      %p111 = scmp.ne.s32.totalorder %s102, %s103
      %p112 = scmp.eq.s32.totalorder %s29, 0
      %p113 = por %p111, %p112
      %p114 = scmp.ne.s32.totalorder %s102, %s103
      %p115 = scmp.eq.s32.totalorder %s30, 1
      %p116 = por %p114, %p115
      %p118 = scmp.ne.s32.totalorder %s103, %s117
      %p119 = scmp.eq.s32.totalorder %s30, 0
      %p120 = por %p118, %p119
      %s122 = sadd.s32 %s121, 1
      %p125 = scmp.eq.s32.totalorder %s24, 1
      %p126 = scmp.ne.s32.totalorder %s121, %s123
      %p127 = scmp.eq.s32.totalorder %s24, 0
      %p128 = por %p126, %p127
      %p129 = scmp.ne.s32.totalorder %s121, %s123
      %p130 = scmp.eq.s32.totalorder %s29, 1
      %p131 = por %p129, %p130
      %p132 = scmp.ne.s32.totalorder %s123, %s124
      %p133 = scmp.eq.s32.totalorder %s29, 0
      %p134 = por %p132, %p133
      %p135 = scmp.ne.s32.totalorder %s123, %s124
      %p136 = scmp.eq.s32.totalorder %s30, 1
      %p137 = por %p135, %p136
      %p139 = scmp.ne.s32.totalorder %s124, %s138
      %p140 = scmp.eq.s32.totalorder %s30, 0
      %p141 = por %p139, %p140
      %s143 = sadd.s32 %s142, 1
      %p146 = scmp.eq.s32.totalorder %s24, 1
      %p147 = scmp.ne.s32.totalorder %s142, %s144
      %p148 = scmp.eq.s32.totalorder %s24, 0
      %p149 = por %p147, %p148
      %p150 = scmp.ne.s32.totalorder %s142, %s144
      %p151 = scmp.eq.s32.totalorder %s29, 1
      %p152 = por %p150, %p151
      %p153 = scmp.ne.s32.totalorder %s144, %s145
      %p154 = scmp.eq.s32.totalorder %s29, 0
      %p155 = por %p153, %p154
      %p156 = scmp.ne.s32.totalorder %s144, %s145
      %p157 = scmp.eq.s32.totalorder %s30, 1
      %p158 = por %p156, %p157
      %p160 = scmp.ne.s32.totalorder %s145, %s159
      %p161 = scmp.eq.s32.totalorder %s30, 0
      %p162 = por %p160, %p161
      %s164 = sadd.s32 %s163, 1
      %p167 = scmp.eq.s32.totalorder %s24, 1
      %p168 = scmp.ne.s32.totalorder %s163, %s165
      %p169 = scmp.eq.s32.totalorder %s24, 0
      %p170 = por %p168, %p169
      %p171 = scmp.ne.s32.totalorder %s163, %s165
      %p172 = scmp.eq.s32.totalorder %s29, 1
      %p173 = por %p171, %p172
      %p174 = scmp.ne.s32.totalorder %s165, %s166
      %p175 = scmp.eq.s32.totalorder %s29, 0
      %p176 = por %p174, %p175
      %p177 = scmp.ne.s32.totalorder %s165, %s166
      %p178 = scmp.eq.s32.totalorder %s30, 1
      %p179 = por %p177, %p178
      %p181 = scmp.ne.s32.totalorder %s166, %s180
      %p182 = scmp.eq.s32.totalorder %s30, 0
      %p183 = por %p181, %p182
      %s185 = sadd.s32 %s184, 1
      %p188 = scmp.eq.s32.totalorder %s24, 1
      %p189 = scmp.ne.s32.totalorder %s184, %s186
      %p190 = scmp.eq.s32.totalorder %s24, 0
      %p191 = por %p189, %p190
      %p192 = scmp.ne.s32.totalorder %s184, %s186
      %p193 = scmp.eq.s32.totalorder %s29, 1
      %p194 = por %p192, %p193
      %p195 = scmp.ne.s32.totalorder %s186, %s187
      %p196 = scmp.eq.s32.totalorder %s29, 0
      %p197 = por %p195, %p196
      %p198 = scmp.ne.s32.totalorder %s186, %s187
      %p199 = scmp.eq.s32.totalorder %s30, 1
      %p200 = por %p198, %p199
      %p202 = scmp.ne.s32.totalorder %s187, %s201
      %p203 = scmp.eq.s32.totalorder %s30, 0
      %p204 = por %p202, %p203
      %s206 = sadd.s32 %s205, 1
      %p209 = scmp.eq.s32.totalorder %s24, 1
      %p210 = scmp.ne.s32.totalorder %s205, %s207
      %p211 = scmp.eq.s32.totalorder %s24, 0
      %p212 = por %p210, %p211
      %p213 = scmp.ne.s32.totalorder %s205, %s207
      %p214 = scmp.eq.s32.totalorder %s29, 1
      %p215 = por %p213, %p214
      %p216 = scmp.ne.s32.totalorder %s207, %s208
      %p217 = scmp.eq.s32.totalorder %s29, 0
      %p218 = por %p216, %p217
      %p219 = scmp.ne.s32.totalorder %s207, %s208
      %p220 = scmp.eq.s32.totalorder %s30, 1
      %p221 = por %p219, %p220
      %p223 = scmp.ne.s32.totalorder %s208, %s222
      %p224 = scmp.eq.s32.totalorder %s30, 0
      %p225 = por %p223, %p224
      %s227 = sadd.s32 %s226, 1
      %p230 = scmp.eq.s32.totalorder %s24, 1
      %p231 = scmp.ne.s32.totalorder %s226, %s228
      %p232 = scmp.eq.s32.totalorder %s24, 0
      %p233 = por %p231, %p232
      %p234 = scmp.ne.s32.totalorder %s226, %s228
      %p235 = scmp.eq.s32.totalorder %s29, 1
      %p236 = por %p234, %p235
      %p237 = scmp.ne.s32.totalorder %s228, %s229
      %p238 = scmp.eq.s32.totalorder %s29, 0
      %p239 = por %p237, %p238
      %p240 = scmp.ne.s32.totalorder %s228, %s229
      %p241 = scmp.eq.s32.totalorder %s30, 1
      %p242 = por %p240, %p241
      %p244 = scmp.ne.s32.totalorder %s229, %s243
      %p245 = scmp.eq.s32.totalorder %s30, 0
      %p246 = por %p244, %p245
      %s248 = sadd.s32 %s247, 1
      %p251 = scmp.eq.s32.totalorder %s24, 1
      %p252 = scmp.ne.s32.totalorder %s247, %s249
      %p253 = scmp.eq.s32.totalorder %s24, 0
      %p254 = por %p252, %p253
      %p255 = scmp.ne.s32.totalorder %s247, %s249
      %p256 = scmp.eq.s32.totalorder %s29, 1
      %p257 = por %p255, %p256
      %p258 = scmp.ne.s32.totalorder %s249, %s250
      %p259 = scmp.eq.s32.totalorder %s29, 0
      %p260 = por %p258, %p259
      %p261 = scmp.ne.s32.totalorder %s249, %s250
      %p262 = scmp.eq.s32.totalorder %s30, 1
      %p263 = por %p261, %p262
      %p265 = scmp.ne.s32.totalorder %s250, %s264
      %p266 = scmp.eq.s32.totalorder %s30, 0
      %p267 = por %p265, %p266
      %s269 = sadd.s32 %s268, 1
      %p272 = scmp.eq.s32.totalorder %s24, 1
      %p273 = scmp.ne.s32.totalorder %s268, %s270
      %p274 = scmp.eq.s32.totalorder %s24, 0
      %p275 = por %p273, %p274
      %p276 = scmp.ne.s32.totalorder %s268, %s270
      %p277 = scmp.eq.s32.totalorder %s29, 1
      %p278 = por %p276, %p277
      %p279 = scmp.ne.s32.totalorder %s270, %s271
      %p280 = scmp.eq.s32.totalorder %s29, 0
      %p281 = por %p279, %p280
      %p282 = scmp.ne.s32.totalorder %s270, %s271
      %p283 = scmp.eq.s32.totalorder %s30, 1
      %p284 = por %p282, %p283
      %p286 = scmp.ne.s32.totalorder %s271, %s285
      %p287 = scmp.eq.s32.totalorder %s30, 0
      %p288 = por %p286, %p287
      %s290 = sadd.s32 %s289, 1
      %p293 = scmp.eq.s32.totalorder %s24, 1
      %p294 = scmp.ne.s32.totalorder %s289, %s291
      %p295 = scmp.eq.s32.totalorder %s24, 0
      %p296 = por %p294, %p295
      %p297 = scmp.ne.s32.totalorder %s289, %s291
      %p298 = scmp.eq.s32.totalorder %s29, 1
      %p299 = por %p297, %p298
      %p300 = scmp.ne.s32.totalorder %s291, %s292
      %p301 = scmp.eq.s32.totalorder %s29, 0
      %p302 = por %p300, %p301
      %p303 = scmp.ne.s32.totalorder %s291, %s292
      %p304 = scmp.eq.s32.totalorder %s30, 1
      %p305 = por %p303, %p304
      %p307 = scmp.ne.s32.totalorder %s292, %s306
      %p308 = scmp.eq.s32.totalorder %s30, 0
      %p309 = por %p307, %p308
      %s311 = sadd.s32 %s310, 1
      %p314 = scmp.eq.s32.totalorder %s24, 1
      %p315 = scmp.ne.s32.totalorder %s310, %s312
      %p316 = scmp.eq.s32.totalorder %s24, 0
      %p317 = por %p315, %p316
      %p318 = scmp.ne.s32.totalorder %s310, %s312
      %p319 = scmp.eq.s32.totalorder %s29, 1
      %p320 = por %p318, %p319
      %p321 = scmp.ne.s32.totalorder %s312, %s313
      %p322 = scmp.eq.s32.totalorder %s29, 0
      %p323 = por %p321, %p322
      %p324 = scmp.ne.s32.totalorder %s312, %s313
      %p325 = scmp.eq.s32.totalorder %s30, 1
      %p326 = por %p324, %p325
      %p328 = scmp.ne.s32.totalorder %s313, %s327
      %p329 = scmp.eq.s32.totalorder %s30, 0
      %p330 = por %p328, %p329
      %s332 = sadd.s32 %s331, 1
      %p335 = scmp.eq.s32.totalorder %s24, 1
      %p336 = scmp.ne.s32.totalorder %s331, %s333
      %p337 = scmp.eq.s32.totalorder %s24, 0
      %p338 = por %p336, %p337
      %p339 = scmp.ne.s32.totalorder %s331, %s333
      %p340 = scmp.eq.s32.totalorder %s29, 1
      %p341 = por %p339, %p340
      %p342 = scmp.ne.s32.totalorder %s333, %s334
      %p343 = scmp.eq.s32.totalorder %s29, 0
      %p344 = por %p342, %p343
      %p345 = scmp.ne.s32.totalorder %s333, %s334
      %p346 = scmp.eq.s32.totalorder %s30, 1
      %p347 = por %p345, %p346
      %p349 = scmp.ne.s32.totalorder %s334, %s348
      %p350 = scmp.eq.s32.totalorder %s30, 0
      %p351 = por %p349, %p350
      %s352 = ssub.s32 %s24, %s31
      %p353 = scmp.eq.s32.totalorder %s352, 0
      %s355 = sadd.s32 %s354, 1
      %s356 = scalar_select %p353, %s354, %s355
      %p359 = pneg %p353
      %p360 = scmp.eq.s32.totalorder %s24, 1
      %p361 = por %p359, %p360
      %p362 = scmp.ne.s32.totalorder %s354, %s357
      %p363 = scmp.eq.s32.totalorder %s24, 0
      %p364 = por %p362, %p363
      %p365 = scmp.ne.s32.totalorder %s354, %s357
      %p366 = scmp.eq.s32.totalorder %s29, 1
      %p367 = por %p365, %p366
      %p368 = scmp.ne.s32.totalorder %s357, %s358
      %p369 = scmp.eq.s32.totalorder %s29, 0
      %p370 = por %p368, %p369
      %p371 = scmp.ne.s32.totalorder %s357, %s358
      %p372 = scmp.eq.s32.totalorder %s30, 1
      %p373 = por %p371, %p372
      %p375 = scmp.ne.s32.totalorder %s358, %s374
      %p376 = scmp.eq.s32.totalorder %s30, 0
      %p377 = por %p375, %p376
      %p378 = scmp.le.s32.totalorder 1, %s24
      %p379 = scmp.lt.s32.totalorder %s24, 3
      %p380 = pnand %p378, %p379
      %p381 = pneg %p380
      // Predicated region
      $region9: #{tpu_custom_call.1} parent=5 // pred_check
        _
      $region10: #{tpu_custom_call.1} parent=5 // pred_check_branch
        %383 = sbr.rel (%p380) target = $region12
      $region11: #{tpu_custom_call.1} parent=5 // pred_region
        %s384 = ssub.s32 %s24, 1
        // Predicated region
        $region13: #{tpu_custom_call.1} parent=11 // pred_check
          %p385 = pneg %p71
        $region14: #{tpu_custom_call.1} parent=11 // pred_check_branch
          %387 = sbr.rel (%p385) target = $region16
        $region15: #{tpu_custom_call.1} parent=11 // pred_region
          _
        $region16: #{tpu_custom_call.1} parent=11 // pred_fallthru
          _
        // Predicated region
        $region17: #{tpu_custom_call.1} parent=11 // pred_check
          %p388 = pneg %p92
        $region18: #{tpu_custom_call.1} parent=11 // pred_check_branch
          %390 = sbr.rel (%p388) target = $region20
        $region19: #{tpu_custom_call.1} parent=11 // pred_region
          _
        $region20: #{tpu_custom_call.1} parent=11 // pred_fallthru
          _
        // Predicated region
        $region21: #{tpu_custom_call.1} parent=11 // pred_check
          %p391 = pneg %p113
        $region22: #{tpu_custom_call.1} parent=11 // pred_check_branch
          %393 = sbr.rel (%p391) target = $region24
        $region23: #{tpu_custom_call.1} parent=11 // pred_region
          _
        $region24: #{tpu_custom_call.1} parent=11 // pred_fallthru
          _
        // Predicated region
        $region25: #{tpu_custom_call.1} parent=11 // pred_check
          %p394 = pneg %p134
        $region26: #{tpu_custom_call.1} parent=11 // pred_check_branch
          %396 = sbr.rel (%p394) target = $region28
        $region27: #{tpu_custom_call.1} parent=11 // pred_region
          _
        $region28: #{tpu_custom_call.1} parent=11 // pred_fallthru
          _
        // Predicated region
        $region29: #{tpu_custom_call.1} parent=11 // pred_check
          %p397 = pneg %p155
        $region30: #{tpu_custom_call.1} parent=11 // pred_check_branch
          %399 = sbr.rel (%p397) target = $region32
        $region31: #{tpu_custom_call.1} parent=11 // pred_region
          _
        $region32: #{tpu_custom_call.1} parent=11 // pred_fallthru
          _
        // Predicated region
        $region33: #{tpu_custom_call.1} parent=11 // pred_check
          %p400 = pneg %p176
        $region34: #{tpu_custom_call.1} parent=11 // pred_check_branch
          %402 = sbr.rel (%p400) target = $region36
        $region35: #{tpu_custom_call.1} parent=11 // pred_region
          _
        $region36: #{tpu_custom_call.1} parent=11 // pred_fallthru
          _
        // Predicated region
        $region37: #{tpu_custom_call.1} parent=11 // pred_check
          %p403 = pneg %p197
        $region38: #{tpu_custom_call.1} parent=11 // pred_check_branch
          %405 = sbr.rel (%p403) target = $region40
        $region39: #{tpu_custom_call.1} parent=11 // pred_region
          _
        $region40: #{tpu_custom_call.1} parent=11 // pred_fallthru
          _
        // Predicated region
        $region41: #{tpu_custom_call.1} parent=11 // pred_check
          %p406 = pneg %p218
        $region42: #{tpu_custom_call.1} parent=11 // pred_check_branch
          %408 = sbr.rel (%p406) target = $region44
        $region43: #{tpu_custom_call.1} parent=11 // pred_region
          _
        $region44: #{tpu_custom_call.1} parent=11 // pred_fallthru
          _
        // Predicated region
        $region45: #{tpu_custom_call.1} parent=11 // pred_check
          %p409 = pneg %p239
        $region46: #{tpu_custom_call.1} parent=11 // pred_check_branch
          %411 = sbr.rel (%p409) target = $region48
        $region47: #{tpu_custom_call.1} parent=11 // pred_region
          _
        $region48: #{tpu_custom_call.1} parent=11 // pred_fallthru
          _
        // Predicated region
        $region49: #{tpu_custom_call.1} parent=11 // pred_check
          %p412 = pneg %p260
        $region50: #{tpu_custom_call.1} parent=11 // pred_check_branch
          %414 = sbr.rel (%p412) target = $region52
        $region51: #{tpu_custom_call.1} parent=11 // pred_region
          _
        $region52: #{tpu_custom_call.1} parent=11 // pred_fallthru
          _
        // Predicated region
        $region53: #{tpu_custom_call.1} parent=11 // pred_check
          %p415 = pneg %p281
        $region54: #{tpu_custom_call.1} parent=11 // pred_check_branch
          %417 = sbr.rel (%p415) target = $region56
        $region55: #{tpu_custom_call.1} parent=11 // pred_region
          _
        $region56: #{tpu_custom_call.1} parent=11 // pred_fallthru
          _
        // Predicated region
        $region57: #{tpu_custom_call.1} parent=11 // pred_check
          %p418 = pneg %p302
        $region58: #{tpu_custom_call.1} parent=11 // pred_check_branch
          %420 = sbr.rel (%p418) target = $region60
        $region59: #{tpu_custom_call.1} parent=11 // pred_region
          _
        $region60: #{tpu_custom_call.1} parent=11 // pred_fallthru
          _
        // Predicated region
        $region61: #{tpu_custom_call.1} parent=11 // pred_check
          %p421 = pneg %p323
        $region62: #{tpu_custom_call.1} parent=11 // pred_check_branch
          %423 = sbr.rel (%p421) target = $region64
        $region63: #{tpu_custom_call.1} parent=11 // pred_region
          _
        $region64: #{tpu_custom_call.1} parent=11 // pred_fallthru
          _
        // Predicated region
        $region65: #{tpu_custom_call.1} parent=11 // pred_check
          %p424 = pneg %p344
        $region66: #{tpu_custom_call.1} parent=11 // pred_check_branch
          %426 = sbr.rel (%p424) target = $region68
        $region67: #{tpu_custom_call.1} parent=11 // pred_region
          _
        $region68: #{tpu_custom_call.1} parent=11 // pred_fallthru
          _
      $region12: #{tpu_custom_call.1} parent=5 // pred_fallthru
        _
      %p427 = scmp.lt.s32.totalorder %s24, 2
      // Predicated region
      $region69: #{tpu_custom_call.1} parent=5 // pred_check
        %p428 = pneg %p427
      $region70: #{tpu_custom_call.1} parent=5 // pred_check_branch
        %430 = sbr.rel (%p428) target = $region72
      $region71: #{tpu_custom_call.1} parent=5 // pred_region
        // Predicated region
        $region73: #{tpu_custom_call.1} parent=71 // pred_check
          %p431 = pneg %p44
        $region74: #{tpu_custom_call.1} parent=71 // pred_check_branch
          %433 = sbr.rel (%p431) target = $region76
        $region75: #{tpu_custom_call.1} parent=71 // pred_region
          %p434 = scmp.lt.s32.totalorder %s24, 1
          %s435 = scalar_select %p434, %s24, 1
          %s436 = smul.addr %s435, 2
          %s437 = smul.addr %s436, 4
          %s438 = scalar_lea.vmem %s0, %s437
        $region76: #{tpu_custom_call.1} parent=71 // pred_fallthru
          _
      $region72: #{tpu_custom_call.1} parent=5 // pred_fallthru
        _
      %p439 = scmp.le.s32.totalorder 1, %s24
      %p440 = scmp.lt.s32.totalorder %s24, 3
      %p441 = pnand %p439, %p440
      %p442 = pneg %p441
      // Predicated region
      $region77: #{tpu_custom_call.1} parent=5 // pred_check
        _
      $region78: #{tpu_custom_call.1} parent=5 // pred_check_branch
        %444 = sbr.rel (%p441) target = $region80
      $region79: #{tpu_custom_call.1} parent=5 // pred_region
        %s445 = ssub.s32 %s24, 1
        %p446 = scmp.lt.s32.totalorder %s29, 1
        %s447 = scalar_select %p446, %s29, 1
        %s448 = smul.addr %s447, 2
        %s449 = smul.addr %s448, 4
        %s450 = scalar_lea.vmem %s0, %s449
        %p451 = pneg %p50
        %p452 = pneg %p47
        %p453 = pneg %p71
        %p454 = pneg %p68
        %p455 = pneg %p92
        %p456 = pneg %p89
        %p457 = pneg %p113
        %p458 = pneg %p110
        %p459 = pneg %p134
        %p460 = pneg %p131
        %p461 = pneg %p155
        %p462 = pneg %p152
        %p463 = pneg %p176
        %p464 = pneg %p173
        %p465 = pneg %p197
        %p466 = pneg %p194
        %p467 = pneg %p218
        %p468 = pneg %p215
        %p469 = pneg %p239
        %p470 = pneg %p236
        %p471 = pneg %p260
        %p472 = pneg %p257
        %p473 = pneg %p281
        %p474 = pneg %p278
        %p475 = pneg %p302
        %p476 = pneg %p299
        %p477 = pneg %p323
        %p478 = pneg %p320
        %p479 = pneg %p344
        %p480 = pneg %p341
        %p481 = pneg %p370
        %p482 = pneg %p367
        %s483 = sand.u32 %s357, 1
        %s484 = scalar_lea.sflag [#allocation4], %s483
        %s485 = sand.u32 %s357, 1
        %s486 = scalar_lea.vmem [#allocation3], %s485
        %p487 = scmp.lt.s32.totalorder %s29, 1
        %s488 = scalar_select %p487, %s29, 1
        %s489 = smul.addr %s488, 2
        %s490 = smul.addr %s489, 4
        %s491 = scalar_lea.vmem %s0, %s490
        %v492 = vld [vmem:[%s491] sm:$0xff]
        %v493 = vlaneseq
        %v494 = vshrl.u32 %v493, 7
        %v495 = vadd.s32 %v494, 8
        %v496 = vadd.s32 %v494, 16
        %v497 = vadd.s32 %v494, 24
        %v498 = vadd.s32 %v494, 32
        %v499 = vadd.s32 %v494, 40
        %v500 = vadd.s32 %v494, 48
        %v501 = vadd.s32 %v494, 56
        %v502 = vadd.s32 %v494, 64
        %v503 = vadd.s32 %v494, 72
        %v504 = vadd.s32 %v494, 80
        %v505 = vadd.s32 %v494, 88
        %v506 = vadd.s32 %v494, 96
        %v507 = vadd.s32 %v494, 104
        %v508 = vadd.s32 %v494, 112
        %v509 = vadd.s32 %v494, 120
        %v510 = vadd.s32 %v494, 128
        %v511 = vadd.s32 %v494, 136
        %v512 = vadd.s32 %v494, 144
        %v513 = vadd.s32 %v494, 152
        %v514 = vlaneseq
        %v515 = vand.u32 %v514, 127
        %v516 = vadd.s32 %v515, 128
        %v517 = vadd.s32 %v494, 1
        %v518 = vadd.s32 %v495, 1
        %v519 = vadd.s32 %v496, 1
        %v520 = vadd.s32 %v497, 1
        %v521 = vadd.s32 %v498, 1
        %v522 = vadd.s32 %v499, 1
        %v523 = vadd.s32 %v500, 1
        %v524 = vadd.s32 %v501, 1
        %v525 = vadd.s32 %v502, 1
        %v526 = vadd.s32 %v503, 1
        %v527 = vadd.s32 %v504, 1
        %v528 = vadd.s32 %v505, 1
        %v529 = vadd.s32 %v506, 1
        %v530 = vadd.s32 %v507, 1
        %v531 = vadd.s32 %v508, 1
        %v532 = vadd.s32 %v509, 1
        %v533 = vadd.s32 %v510, 1
        %v534 = vadd.s32 %v511, 1
        %v535 = vadd.s32 %v512, 1
        %v536 = vadd.s32 %v513, 1
        %vm537 = vcmp.eq.s32.totalorder %v517, %v515
        %vm538 = vcmp.eq.s32.totalorder %v517, %v516
        %vm539 = vcmp.eq.s32.totalorder %v518, %v515
        %vm540 = vcmp.eq.s32.totalorder %v518, %v516
        %vm541 = vcmp.eq.s32.totalorder %v519, %v515
        %vm542 = vcmp.eq.s32.totalorder %v519, %v516
        %vm543 = vcmp.eq.s32.totalorder %v520, %v515
        %vm544 = vcmp.eq.s32.totalorder %v520, %v516
        %vm545 = vcmp.eq.s32.totalorder %v521, %v515
        %vm546 = vcmp.eq.s32.totalorder %v521, %v516
        %vm547 = vcmp.eq.s32.totalorder %v522, %v515
        %vm548 = vcmp.eq.s32.totalorder %v522, %v516
        %vm549 = vcmp.eq.s32.totalorder %v523, %v515
        %vm550 = vcmp.eq.s32.totalorder %v523, %v516
        %vm551 = vcmp.eq.s32.totalorder %v524, %v515
        %vm552 = vcmp.eq.s32.totalorder %v524, %v516
        %vm553 = vcmp.eq.s32.totalorder %v525, %v515
        %vm554 = vcmp.eq.s32.totalorder %v525, %v516
        %vm555 = vcmp.eq.s32.totalorder %v526, %v515
        %vm556 = vcmp.eq.s32.totalorder %v526, %v516
        %vm557 = vcmp.eq.s32.totalorder %v527, %v515
        %vm558 = vcmp.eq.s32.totalorder %v527, %v516
        %vm559 = vcmp.eq.s32.totalorder %v528, %v515
        %vm560 = vcmp.eq.s32.totalorder %v528, %v516
        %vm561 = vcmp.eq.s32.totalorder %v529, %v515
        %vm562 = vcmp.eq.s32.totalorder %v529, %v516
        %vm563 = vcmp.eq.s32.totalorder %v530, %v515
        %vm564 = vcmp.eq.s32.totalorder %v530, %v516
        %vm565 = vcmp.eq.s32.totalorder %v531, %v515
        %vm566 = vcmp.eq.s32.totalorder %v531, %v516
        %vm567 = vcmp.eq.s32.totalorder %v532, %v515
        %vm568 = vcmp.eq.s32.totalorder %v532, %v516
        %vm569 = vcmp.eq.s32.totalorder %v533, %v515
        %vm570 = vcmp.eq.s32.totalorder %v533, %v516
        %vm571 = vcmp.eq.s32.totalorder %v534, %v515
        %vm572 = vcmp.eq.s32.totalorder %v534, %v516
        %vm573 = vcmp.eq.s32.totalorder %v535, %v515
        %vm574 = vcmp.eq.s32.totalorder %v535, %v516
        %vm575 = vcmp.eq.s32.totalorder %v536, %v515
        %vm576 = vcmp.eq.s32.totalorder %v536, %v516
        %v577 = vsel %vm537, 1.0, 0.0
        %v578 = vsel %vm538, 1.0, 0.0
        %v579 = vsel %vm539, 1.0, 0.0
        %v580 = vsel %vm540, 1.0, 0.0
        %v581 = vsel %vm541, 1.0, 0.0
        %v582 = vsel %vm542, 1.0, 0.0
        %v583 = vsel %vm543, 1.0, 0.0
        %v584 = vsel %vm544, 1.0, 0.0
        %v585 = vsel %vm545, 1.0, 0.0
        %v586 = vsel %vm546, 1.0, 0.0
        %v587 = vsel %vm547, 1.0, 0.0
        %v588 = vsel %vm548, 1.0, 0.0
        %v589 = vsel %vm549, 1.0, 0.0
        %v590 = vsel %vm550, 1.0, 0.0
        %v591 = vsel %vm551, 1.0, 0.0
        %v592 = vsel %vm552, 1.0, 0.0
        %v593 = vsel %vm553, 1.0, 0.0
        %v594 = vsel %vm554, 1.0, 0.0
        %v595 = vsel %vm555, 1.0, 0.0
        %v596 = vsel %vm556, 1.0, 0.0
        %v597 = vsel %vm557, 1.0, 0.0
        %v598 = vsel %vm558, 1.0, 0.0
        %v599 = vsel %vm559, 1.0, 0.0
        %v600 = vsel %vm560, 1.0, 0.0
        %v601 = vsel %vm561, 1.0, 0.0
        %v602 = vsel %vm562, 1.0, 0.0
        %v603 = vsel %vm563, 1.0, 0.0
        %v604 = vsel %vm564, 1.0, 0.0
        %v605 = vsel %vm565, 1.0, 0.0
        %v606 = vsel %vm566, 1.0, 0.0
        %v607 = vsel %vm567, 1.0, 0.0
        %v608 = vsel %vm568, 1.0, 0.0
        %v609 = vsel %vm569, 1.0, 0.0
        %v610 = vsel %vm570, 1.0, 0.0
        %v611 = vsel %vm571, 1.0, 0.0
        %v612 = vsel %vm572, 1.0, 0.0
        %v613 = vsel %vm573, 1.0, 0.0
        %v614 = vsel %vm574, 1.0, 0.0
        %v615 = vsel %vm575, 1.0, 0.0
        %v616 = vsel %vm576, 1.0, 0.0
        %v617 = vld [vmem:[%s2] sm:$0xff]
        %s618 = scalar_lea.vmem %s1, 8
        %v619 = vld [vmem:[%s618] sm:$0xff]
        %v621 = vcombine.high %v492, %v492
        %vm622 = vcmask 31744
        %v624 = vsel %vm622, %v619, 0
        %vm626 = vcmask 1043456
        %v627 = vsel %vm626, %v492, 0
        %v629 = vsel %vm626, %v621, 0
        %631 = vmatprep.subr.mxu0 %v629
        %632 = vmatpush1.msra.mxu0 %v627
        %633 = vmatprep.subr.mxu0 0.0
        %634 = vmatpush1.msra.mxu0 0.0
        %635 = vmatprep.subr.mxu0 0.0
        %636 = vmatpush1.msra.mxu0 0.0
        %637 = vmatprep.subr.mxu0 0.0
        %638 = vmatpush1.msra.mxu0 0.0
        %639 = vmatprep.subr.mxu0 0.0
        %640 = vmatpush1.msra.mxu0 0.0
        %641 = vmatprep.subr.mxu0 0.0
        %642 = vmatpush1.msra.mxu0 0.0
        %643 = vmatprep.subr.mxu0 0.0
        %644 = vmatpush1.msra.mxu0 0.0
        %645 = vmatprep.subr.mxu0 0.0
        %646 = vmatpush1.msra.mxu0 0.0
        %647 = vmatprep.subr.mxu0 0.0
        %648 = vmatpush1.msra.mxu0 0.0
        %649 = vmatprep.subr.mxu0 0.0
        %650 = vmatpush1.msra.mxu0 0.0
        %651 = vmatprep.subr.mxu0 0.0
        %652 = vmatpush1.msra.mxu0 0.0
        %653 = vmatprep.subr.mxu0 0.0
        %654 = vmatpush1.msra.mxu0 0.0
        %655 = vmatprep.subr.mxu0 0.0
        %656 = vmatpush1.msra.mxu0 0.0
        %657 = vmatprep.subr.mxu0 0.0
        %658 = vmatpush1.msra.mxu0 0.0
        %659 = vmatprep.subr.mxu0 0.0
        %660 = vmatpush1.msra.mxu0 0.0
        %661 = vmatprep.subr.mxu0 0.0
        %662 = vmatpush1.msra.mxu0 0.0
        %663 = vmatprep.subr.mxu0 0.0
        %664 = vmatpush1.msra.mxu0 0.0
        %665 = vmatprep.subr.mxu0 0.0
        %666 = vmatpush1.msra.mxu0 0.0
        %667 = vmatprep.subr.mxu0 0.0
        %668 = vmatpush1.msra.mxu0 0.0
        %669 = vmatprep.subr.mxu0 0.0
        %670 = vmatpush1.msra.mxu0 0.0
        %671 = vmatprep.subr.mxu0 0.0
        %672 = vmatpush1.msra.mxu0 0.0
        %673 = vmatprep.subr.mxu0 0.0
        %674 = vmatpush1.msra.mxu0 0.0
        %675 = vmatprep.subr.mxu0 0.0
        %676 = vmatpush1.msra.mxu0 0.0
        %677 = vmatprep.subr.mxu0 0.0
        %678 = vmatpush1.msra.mxu0 0.0
        %679 = vmatprep.subr.mxu0 0.0
        %680 = vmatpush1.msra.mxu0 0.0
        %681 = vmatprep.subr.mxu0 0.0
        %682 = vmatpush1.msra.mxu0 0.0
        %683 = vmatprep.subr.mxu0 0.0
        %684 = vmatpush1.msra.mxu0 0.0
        %685 = vmatprep.subr.mxu0 0.0
        %686 = vmatpush1.msra.mxu0 0.0
        %687 = vmatprep.subr.mxu0 0.0
        %688 = vmatpush1.msra.mxu0 0.0
        %689 = vmatprep.subr.mxu0 0.0
        %690 = vmatpush1.msra.mxu0 0.0
        %691 = vmatprep.subr.mxu0 0.0
        %692 = vmatpush1.msra.mxu0 0.0
        %693 = vmatprep.subr.mxu0 0.0
        %694 = vmatpush1.msra.mxu0 0.0
        %695 = vmatprep.mubr.f32.mxu0 0.0
        %696 = vmatmul.mubr.f32.gmra.mrb[0].mxu0 %v624
        %v697 = vpop.f32.mrb[0].mxu0
        %v698 = vadd.f32 0.0, %v697
        %v699 = vpop.f32.mrb[0].mxu0
        %v700 = vadd.f32 0.0, %v699
        %701 = vdwg.mxu0
        %703 = vset.pattern.permute.xlu0 0
        %704 = vperm.xlu0 %703, %v617
        %v705 = vpop.permute.xlu0 %704
        %v707 = vadd.f32 %v705, %v698
        %v708 = vadd.f32 %v705, %v700
        %vm709 = vcmask 261120
        %v710 = vsel %vm709, %v621, 0
        %712 = vmatprep.subr.mxu0 %v578
        %713 = vmatpush1.msra.mxu0 %v577
        %714 = vmatprep.subr.mxu0 %v580
        %715 = vmatpush1.msra.mxu0 %v579
        %716 = vmatprep.subr.mxu0 %v582
        %717 = vmatpush1.msra.mxu0 %v581
        %718 = vmatprep.subr.mxu0 %v584
        %719 = vmatpush1.msra.mxu0 %v583
        %720 = vmatprep.subr.mxu0 %v586
        %721 = vmatpush1.msra.mxu0 %v585
        %722 = vmatprep.subr.mxu0 %v588
        %723 = vmatpush1.msra.mxu0 %v587
        %724 = vmatprep.subr.mxu0 %v590
        %725 = vmatpush1.msra.mxu0 %v589
        %726 = vmatprep.subr.mxu0 %v592
        %727 = vmatpush1.msra.mxu0 %v591
        %728 = vmatprep.subr.mxu0 %v594
        %729 = vmatpush1.msra.mxu0 %v593
        %730 = vmatprep.subr.mxu0 %v596
        %731 = vmatpush1.msra.mxu0 %v595
        %732 = vmatprep.subr.mxu0 %v598
        %733 = vmatpush1.msra.mxu0 %v597
        %734 = vmatprep.subr.mxu0 %v600
        %735 = vmatpush1.msra.mxu0 %v599
        %736 = vmatprep.subr.mxu0 %v602
        %737 = vmatpush1.msra.mxu0 %v601
        %738 = vmatprep.subr.mxu0 %v604
        %739 = vmatpush1.msra.mxu0 %v603
        %740 = vmatprep.subr.mxu0 %v606
        %741 = vmatpush1.msra.mxu0 %v605
        %742 = vmatprep.subr.mxu0 %v608
        %743 = vmatpush1.msra.mxu0 %v607
        %744 = vmatprep.subr.mxu0 %v610
        %745 = vmatpush1.msra.mxu0 %v609
        %746 = vmatprep.subr.mxu0 %v612
        %747 = vmatpush1.msra.mxu0 %v611
        %748 = vmatprep.subr.mxu0 %v614
        %749 = vmatpush1.msra.mxu0 %v613
        %750 = vmatprep.subr.mxu0 %v616
        %751 = vmatpush1.msra.mxu0 %v615
        %752 = vmatprep.subr.mxu0 0.0
        %753 = vmatpush1.msra.mxu0 0.0
        %754 = vmatprep.subr.mxu0 0.0
        %755 = vmatpush1.msra.mxu0 0.0
        %756 = vmatprep.subr.mxu0 0.0
        %757 = vmatpush1.msra.mxu0 0.0
        %758 = vmatprep.subr.mxu0 0.0
        %759 = vmatpush1.msra.mxu0 0.0
        %760 = vmatprep.subr.mxu0 0.0
        %761 = vmatpush1.msra.mxu0 0.0
        %762 = vmatprep.subr.mxu0 0.0
        %763 = vmatpush1.msra.mxu0 0.0
        %764 = vmatprep.subr.mxu0 0.0
        %765 = vmatpush1.msra.mxu0 0.0
        %766 = vmatprep.subr.mxu0 0.0
        %767 = vmatpush1.msra.mxu0 0.0
        %768 = vmatprep.subr.mxu0 0.0
        %769 = vmatpush1.msra.mxu0 0.0
        %770 = vmatprep.subr.mxu0 0.0
        %771 = vmatpush1.msra.mxu0 0.0
        %772 = vmatprep.subr.mxu0 0.0
        %773 = vmatpush1.msra.mxu0 0.0
        %774 = vmatprep.subr.mxu0 0.0
        %775 = vmatpush1.msra.mxu0 0.0
        %776 = vmatprep.mubr.f32.mxu0 %v710
        %777 = vmatmul.mubr.f32.gmra.mrb[0].mxu0 %v492
        %v778 = vpop.f32.mrb[0].mxu0
        %v779 = vadd.f32 0.0, %v778
        %v780 = vpop.f32.mrb[0].mxu0
        %v781 = vadd.f32 0.0, %v780
        %782 = vdwg.mxu0
        %v783 = vld [vmem:[%s1] sm:$0xff]
        %v785 = vsel %vm622, %v783, 0
        %v788 = vsel %vm626, %v779, 0
        %v791 = vsel %vm626, %v781, 0
        %793 = vmatprep.subr.mxu0 %v791
        %794 = vmatpush1.msra.mxu0 %v788
        %795 = vmatprep.subr.mxu0 0.0
        %796 = vmatpush1.msra.mxu0 0.0
        %797 = vmatprep.subr.mxu0 0.0
        %798 = vmatpush1.msra.mxu0 0.0
        %799 = vmatprep.subr.mxu0 0.0
        %800 = vmatpush1.msra.mxu0 0.0
        %801 = vmatprep.subr.mxu0 0.0
        %802 = vmatpush1.msra.mxu0 0.0
        %803 = vmatprep.subr.mxu0 0.0
        %804 = vmatpush1.msra.mxu0 0.0
        %805 = vmatprep.subr.mxu0 0.0
        %806 = vmatpush1.msra.mxu0 0.0
        %807 = vmatprep.subr.mxu0 0.0
        %808 = vmatpush1.msra.mxu0 0.0
        %809 = vmatprep.subr.mxu0 0.0
        %810 = vmatpush1.msra.mxu0 0.0
        %811 = vmatprep.subr.mxu0 0.0
        %812 = vmatpush1.msra.mxu0 0.0
        %813 = vmatprep.subr.mxu0 0.0
        %814 = vmatpush1.msra.mxu0 0.0
        %815 = vmatprep.subr.mxu0 0.0
        %816 = vmatpush1.msra.mxu0 0.0
        %817 = vmatprep.subr.mxu0 0.0
        %818 = vmatpush1.msra.mxu0 0.0
        %819 = vmatprep.subr.mxu0 0.0
        %820 = vmatpush1.msra.mxu0 0.0
        %821 = vmatprep.subr.mxu0 0.0
        %822 = vmatpush1.msra.mxu0 0.0
        %823 = vmatprep.subr.mxu0 0.0
        %824 = vmatpush1.msra.mxu0 0.0
        %825 = vmatprep.subr.mxu0 0.0
        %826 = vmatpush1.msra.mxu0 0.0
        %827 = vmatprep.subr.mxu0 0.0
        %828 = vmatpush1.msra.mxu0 0.0
        %829 = vmatprep.subr.mxu0 0.0
        %830 = vmatpush1.msra.mxu0 0.0
        %831 = vmatprep.subr.mxu0 0.0
        %832 = vmatpush1.msra.mxu0 0.0
        %833 = vmatprep.subr.mxu0 0.0
        %834 = vmatpush1.msra.mxu0 0.0
        %835 = vmatprep.subr.mxu0 0.0
        %836 = vmatpush1.msra.mxu0 0.0
        %837 = vmatprep.subr.mxu0 0.0
        %838 = vmatpush1.msra.mxu0 0.0
        %839 = vmatprep.subr.mxu0 0.0
        %840 = vmatpush1.msra.mxu0 0.0
        %841 = vmatprep.subr.mxu0 0.0
        %842 = vmatpush1.msra.mxu0 0.0
        %843 = vmatprep.subr.mxu0 0.0
        %844 = vmatpush1.msra.mxu0 0.0
        %845 = vmatprep.subr.mxu0 0.0
        %846 = vmatpush1.msra.mxu0 0.0
        %847 = vmatprep.subr.mxu0 0.0
        %848 = vmatpush1.msra.mxu0 0.0
        %849 = vmatprep.subr.mxu0 0.0
        %850 = vmatpush1.msra.mxu0 0.0
        %851 = vmatprep.subr.mxu0 0.0
        %852 = vmatpush1.msra.mxu0 0.0
        %853 = vmatprep.subr.mxu0 0.0
        %854 = vmatpush1.msra.mxu0 0.0
        %855 = vmatprep.subr.mxu0 0.0
        %856 = vmatpush1.msra.mxu0 0.0
        %857 = vmatprep.mubr.f32.mxu0 0.0
        %858 = vmatmul.mubr.f32.gmra.mrb[0].mxu0 %v785
        %v859 = vpop.f32.mrb[0].mxu0
        %v860 = vadd.f32 0.0, %v859
        %v861 = vpop.f32.mrb[0].mxu0
        %v862 = vadd.f32 0.0, %v861
        %863 = vdwg.mxu0
        %v864 = vadd.f32 %v707, %v860
        %v865 = vadd.f32 %v708, %v862
        %v866 = vmax.f32 %v864, 0.0
        %v867 = vmax.f32 %v865, 0.0
        %v868 = vld [vmem:[%s4] sm:$0xff]
        %s869 = scalar_lea.vmem %s3, 8
        %v870 = vld [vmem:[%s869] sm:$0xff]
        %vm871 = vcmask 64512
        %v873 = vsel %vm871, %v870, 0
        %875 = vmatprep.subr.mxu0 %v867
        %876 = vmatpush1.msra.mxu0 %v866
        %877 = vmatprep.subr.mxu0 0.0
        %878 = vmatpush1.msra.mxu0 0.0
        %879 = vmatprep.subr.mxu0 0.0
        %880 = vmatpush1.msra.mxu0 0.0
        %881 = vmatprep.subr.mxu0 0.0
        %882 = vmatpush1.msra.mxu0 0.0
        %883 = vmatprep.subr.mxu0 0.0
        %884 = vmatpush1.msra.mxu0 0.0
        %885 = vmatprep.subr.mxu0 0.0
        %886 = vmatpush1.msra.mxu0 0.0
        %887 = vmatprep.subr.mxu0 0.0
        %888 = vmatpush1.msra.mxu0 0.0
        %889 = vmatprep.subr.mxu0 0.0
        %890 = vmatpush1.msra.mxu0 0.0
        %891 = vmatprep.subr.mxu0 0.0
        %892 = vmatpush1.msra.mxu0 0.0
        %893 = vmatprep.subr.mxu0 0.0
        %894 = vmatpush1.msra.mxu0 0.0
        %895 = vmatprep.subr.mxu0 0.0
        %896 = vmatpush1.msra.mxu0 0.0
        %897 = vmatprep.subr.mxu0 0.0
        %898 = vmatpush1.msra.mxu0 0.0
        %899 = vmatprep.subr.mxu0 0.0
        %900 = vmatpush1.msra.mxu0 0.0
        %901 = vmatprep.subr.mxu0 0.0
        %902 = vmatpush1.msra.mxu0 0.0
        %903 = vmatprep.subr.mxu0 0.0
        %904 = vmatpush1.msra.mxu0 0.0
        %905 = vmatprep.subr.mxu0 0.0
        %906 = vmatpush1.msra.mxu0 0.0
        %907 = vmatprep.subr.mxu0 0.0
        %908 = vmatpush1.msra.mxu0 0.0
        %909 = vmatprep.subr.mxu0 0.0
        %910 = vmatpush1.msra.mxu0 0.0
        %911 = vmatprep.subr.mxu0 0.0
        %912 = vmatpush1.msra.mxu0 0.0
        %913 = vmatprep.subr.mxu0 0.0
        %914 = vmatpush1.msra.mxu0 0.0
        %915 = vmatprep.subr.mxu0 0.0
        %916 = vmatpush1.msra.mxu0 0.0
        %917 = vmatprep.subr.mxu0 0.0
        %918 = vmatpush1.msra.mxu0 0.0
        %919 = vmatprep.subr.mxu0 0.0
        %920 = vmatpush1.msra.mxu0 0.0
        %921 = vmatprep.subr.mxu0 0.0
        %922 = vmatpush1.msra.mxu0 0.0
        %923 = vmatprep.subr.mxu0 0.0
        %924 = vmatpush1.msra.mxu0 0.0
        %925 = vmatprep.subr.mxu0 0.0
        %926 = vmatpush1.msra.mxu0 0.0
        %927 = vmatprep.subr.mxu0 0.0
        %928 = vmatpush1.msra.mxu0 0.0
        %929 = vmatprep.subr.mxu0 0.0
        %930 = vmatpush1.msra.mxu0 0.0
        %931 = vmatprep.subr.mxu0 0.0
        %932 = vmatpush1.msra.mxu0 0.0
        %933 = vmatprep.subr.mxu0 0.0
        %934 = vmatpush1.msra.mxu0 0.0
        %935 = vmatprep.subr.mxu0 0.0
        %936 = vmatpush1.msra.mxu0 0.0
        %937 = vmatprep.subr.mxu0 0.0
        %938 = vmatpush1.msra.mxu0 0.0
        %939 = vmatprep.mubr.f32.mxu0 0.0
        %940 = vmatmul.mubr.f32.gmra.mrb[0].mxu0 %v873
        %v941 = vpop.f32.mrb[0].mxu0
        %v942 = vadd.f32 0.0, %v941
        %v943 = vpop.f32.mrb[0].mxu0
        %v944 = vadd.f32 0.0, %v943
        %945 = vdwg.mxu0
        %947 = vset.pattern.permute.xlu0 0
        %948 = vperm.xlu0 %947, %v868
        %v949 = vpop.permute.xlu0 %948
        %v951 = vadd.f32 %v949, %v942
        %v952 = vadd.f32 %v949, %v944
        %v954 = vsel %vm709, %v867, 0
        %956 = vmatprep.subr.mxu0 %v578
        %957 = vmatpush1.msra.mxu0 %v577
        %958 = vmatprep.subr.mxu0 %v580
        %959 = vmatpush1.msra.mxu0 %v579
        %960 = vmatprep.subr.mxu0 %v582
        %961 = vmatpush1.msra.mxu0 %v581
        %962 = vmatprep.subr.mxu0 %v584
        %963 = vmatpush1.msra.mxu0 %v583
        %964 = vmatprep.subr.mxu0 %v586
        %965 = vmatpush1.msra.mxu0 %v585
        %966 = vmatprep.subr.mxu0 %v588
        %967 = vmatpush1.msra.mxu0 %v587
        %968 = vmatprep.subr.mxu0 %v590
        %969 = vmatpush1.msra.mxu0 %v589
        %970 = vmatprep.subr.mxu0 %v592
        %971 = vmatpush1.msra.mxu0 %v591
        %972 = vmatprep.subr.mxu0 %v594
        %973 = vmatpush1.msra.mxu0 %v593
        %974 = vmatprep.subr.mxu0 %v596
        %975 = vmatpush1.msra.mxu0 %v595
        %976 = vmatprep.subr.mxu0 %v598
        %977 = vmatpush1.msra.mxu0 %v597
        %978 = vmatprep.subr.mxu0 %v600
        %979 = vmatpush1.msra.mxu0 %v599
        %980 = vmatprep.subr.mxu0 %v602
        %981 = vmatpush1.msra.mxu0 %v601
        %982 = vmatprep.subr.mxu0 %v604
        %983 = vmatpush1.msra.mxu0 %v603
        %984 = vmatprep.subr.mxu0 %v606
        %985 = vmatpush1.msra.mxu0 %v605
        %986 = vmatprep.subr.mxu0 %v608
        %987 = vmatpush1.msra.mxu0 %v607
        %988 = vmatprep.subr.mxu0 %v610
        %989 = vmatpush1.msra.mxu0 %v609
        %990 = vmatprep.subr.mxu0 %v612
        %991 = vmatpush1.msra.mxu0 %v611
        %992 = vmatprep.subr.mxu0 %v614
        %993 = vmatpush1.msra.mxu0 %v613
        %994 = vmatprep.subr.mxu0 %v616
        %995 = vmatpush1.msra.mxu0 %v615
        %996 = vmatprep.subr.mxu0 0.0
        %997 = vmatpush1.msra.mxu0 0.0
        %998 = vmatprep.subr.mxu0 0.0
        %999 = vmatpush1.msra.mxu0 0.0
        %1000 = vmatprep.subr.mxu0 0.0
        %1001 = vmatpush1.msra.mxu0 0.0
        %1002 = vmatprep.subr.mxu0 0.0
        %1003 = vmatpush1.msra.mxu0 0.0
        %1004 = vmatprep.subr.mxu0 0.0
        %1005 = vmatpush1.msra.mxu0 0.0
        %1006 = vmatprep.subr.mxu0 0.0
        %1007 = vmatpush1.msra.mxu0 0.0
        %1008 = vmatprep.subr.mxu0 0.0
        %1009 = vmatpush1.msra.mxu0 0.0
        %1010 = vmatprep.subr.mxu0 0.0
        %1011 = vmatpush1.msra.mxu0 0.0
        %1012 = vmatprep.subr.mxu0 0.0
        %1013 = vmatpush1.msra.mxu0 0.0
        %1014 = vmatprep.subr.mxu0 0.0
        %1015 = vmatpush1.msra.mxu0 0.0
        %1016 = vmatprep.subr.mxu0 0.0
        %1017 = vmatpush1.msra.mxu0 0.0
        %1018 = vmatprep.subr.mxu0 0.0
        %1019 = vmatpush1.msra.mxu0 0.0
        %1020 = vmatprep.mubr.f32.mxu0 %v954
        %1021 = vmatmul.mubr.f32.gmra.mrb[0].mxu0 %v866
        %v1022 = vpop.f32.mrb[0].mxu0
        %v1023 = vadd.f32 0.0, %v1022
        %v1024 = vpop.f32.mrb[0].mxu0
        %v1025 = vadd.f32 0.0, %v1024
        %1026 = vdwg.mxu0
        %v1027 = vld [vmem:[%s3] sm:$0xff]
        %v1029 = vsel %vm871, %v1027, 0
        %1031 = vmatprep.subr.mxu0 %v1025
        %1032 = vmatpush1.msra.mxu0 %v1023
        %1033 = vmatprep.subr.mxu0 0.0
        %1034 = vmatpush1.msra.mxu0 0.0
        %1035 = vmatprep.subr.mxu0 0.0
        %1036 = vmatpush1.msra.mxu0 0.0
        %1037 = vmatprep.subr.mxu0 0.0
        %1038 = vmatpush1.msra.mxu0 0.0
        %1039 = vmatprep.subr.mxu0 0.0
        %1040 = vmatpush1.msra.mxu0 0.0
        %1041 = vmatprep.subr.mxu0 0.0
        %1042 = vmatpush1.msra.mxu0 0.0
        %1043 = vmatprep.subr.mxu0 0.0
        %1044 = vmatpush1.msra.mxu0 0.0
        %1045 = vmatprep.subr.mxu0 0.0
        %1046 = vmatpush1.msra.mxu0 0.0
        %1047 = vmatprep.subr.mxu0 0.0
        %1048 = vmatpush1.msra.mxu0 0.0
        %1049 = vmatprep.subr.mxu0 0.0
        %1050 = vmatpush1.msra.mxu0 0.0
        %1051 = vmatprep.subr.mxu0 0.0
        %1052 = vmatpush1.msra.mxu0 0.0
        %1053 = vmatprep.subr.mxu0 0.0
        %1054 = vmatpush1.msra.mxu0 0.0
        %1055 = vmatprep.subr.mxu0 0.0
        %1056 = vmatpush1.msra.mxu0 0.0
        %1057 = vmatprep.subr.mxu0 0.0
        %1058 = vmatpush1.msra.mxu0 0.0
        %1059 = vmatprep.subr.mxu0 0.0
        %1060 = vmatpush1.msra.mxu0 0.0
        %1061 = vmatprep.subr.mxu0 0.0
        %1062 = vmatpush1.msra.mxu0 0.0
        %1063 = vmatprep.subr.mxu0 0.0
        %1064 = vmatpush1.msra.mxu0 0.0
        %1065 = vmatprep.subr.mxu0 0.0
        %1066 = vmatpush1.msra.mxu0 0.0
        %1067 = vmatprep.subr.mxu0 0.0
        %1068 = vmatpush1.msra.mxu0 0.0
        %1069 = vmatprep.subr.mxu0 0.0
        %1070 = vmatpush1.msra.mxu0 0.0
        %1071 = vmatprep.subr.mxu0 0.0
        %1072 = vmatpush1.msra.mxu0 0.0
        %1073 = vmatprep.subr.mxu0 0.0
        %1074 = vmatpush1.msra.mxu0 0.0
        %1075 = vmatprep.subr.mxu0 0.0
        %1076 = vmatpush1.msra.mxu0 0.0
        %1077 = vmatprep.subr.mxu0 0.0
        %1078 = vmatpush1.msra.mxu0 0.0
        %1079 = vmatprep.subr.mxu0 0.0
        %1080 = vmatpush1.msra.mxu0 0.0
        %1081 = vmatprep.subr.mxu0 0.0
        %1082 = vmatpush1.msra.mxu0 0.0
        %1083 = vmatprep.subr.mxu0 0.0
        %1084 = vmatpush1.msra.mxu0 0.0
        %1085 = vmatprep.subr.mxu0 0.0
        %1086 = vmatpush1.msra.mxu0 0.0
        %1087 = vmatprep.subr.mxu0 0.0
        %1088 = vmatpush1.msra.mxu0 0.0
        %1089 = vmatprep.subr.mxu0 0.0
        %1090 = vmatpush1.msra.mxu0 0.0
        %1091 = vmatprep.subr.mxu0 0.0
        %1092 = vmatpush1.msra.mxu0 0.0
        %1093 = vmatprep.subr.mxu0 0.0
        %1094 = vmatpush1.msra.mxu0 0.0
        %1095 = vmatprep.mubr.f32.mxu0 0.0
        %1096 = vmatmul.mubr.f32.gmra.mrb[0].mxu0 %v1029
        %v1097 = vpop.f32.mrb[0].mxu0
        %v1098 = vadd.f32 0.0, %v1097
        %v1099 = vpop.f32.mrb[0].mxu0
        %v1100 = vadd.f32 0.0, %v1099
        %1101 = vdwg.mxu0
        %v1102 = vadd.f32 %v951, %v1098
        %v1103 = vadd.f32 %v952, %v1100
        %v1104 = vmax.f32 %v1102, 0.0
        %v1105 = vmax.f32 %v1103, 0.0
        %v1106 = vld [vmem:[%s5] sm:$0xff]
        %v1107 = vld [vmem:[%s6] sm:$0xff]
        %1109 = vset.pattern.permute.xlu0 0
        %1110 = vperm.xlu0 %1109, %v1107
        %v1111 = vpop.permute.xlu0 %1110
        %v1114 = vsel %vm622, %v1106, 0
        %1116 = vmatprep.subr.mxu0 %v629
        %1117 = vmatpush1.msra.mxu0 %v627
        %1118 = vmatprep.subr.mxu0 0.0
        %1119 = vmatpush1.msra.mxu0 0.0
        %1120 = vmatprep.subr.mxu0 0.0
        %1121 = vmatpush1.msra.mxu0 0.0
        %1122 = vmatprep.subr.mxu0 0.0
        %1123 = vmatpush1.msra.mxu0 0.0
        %1124 = vmatprep.subr.mxu0 0.0
        %1125 = vmatpush1.msra.mxu0 0.0
        %1126 = vmatprep.subr.mxu0 0.0
        %1127 = vmatpush1.msra.mxu0 0.0
        %1128 = vmatprep.subr.mxu0 0.0
        %1129 = vmatpush1.msra.mxu0 0.0
        %1130 = vmatprep.subr.mxu0 0.0
        %1131 = vmatpush1.msra.mxu0 0.0
        %1132 = vmatprep.subr.mxu0 0.0
        %1133 = vmatpush1.msra.mxu0 0.0
        %1134 = vmatprep.subr.mxu0 0.0
        %1135 = vmatpush1.msra.mxu0 0.0
        %1136 = vmatprep.subr.mxu0 0.0
        %1137 = vmatpush1.msra.mxu0 0.0
        %1138 = vmatprep.subr.mxu0 0.0
        %1139 = vmatpush1.msra.mxu0 0.0
        %1140 = vmatprep.subr.mxu0 0.0
        %1141 = vmatpush1.msra.mxu0 0.0
        %1142 = vmatprep.subr.mxu0 0.0
        %1143 = vmatpush1.msra.mxu0 0.0
        %1144 = vmatprep.subr.mxu0 0.0
        %1145 = vmatpush1.msra.mxu0 0.0
        %1146 = vmatprep.subr.mxu0 0.0
        %1147 = vmatpush1.msra.mxu0 0.0
        %1148 = vmatprep.subr.mxu0 0.0
        %1149 = vmatpush1.msra.mxu0 0.0
        %1150 = vmatprep.subr.mxu0 0.0
        %1151 = vmatpush1.msra.mxu0 0.0
        %1152 = vmatprep.subr.mxu0 0.0
        %1153 = vmatpush1.msra.mxu0 0.0
        %1154 = vmatprep.subr.mxu0 0.0
        %1155 = vmatpush1.msra.mxu0 0.0
        %1156 = vmatprep.subr.mxu0 0.0
        %1157 = vmatpush1.msra.mxu0 0.0
        %1158 = vmatprep.subr.mxu0 0.0
        %1159 = vmatpush1.msra.mxu0 0.0
        %1160 = vmatprep.subr.mxu0 0.0
        %1161 = vmatpush1.msra.mxu0 0.0
        %1162 = vmatprep.subr.mxu0 0.0
        %1163 = vmatpush1.msra.mxu0 0.0
        %1164 = vmatprep.subr.mxu0 0.0
        %1165 = vmatpush1.msra.mxu0 0.0
        %1166 = vmatprep.subr.mxu0 0.0
        %1167 = vmatpush1.msra.mxu0 0.0
        %1168 = vmatprep.subr.mxu0 0.0
        %1169 = vmatpush1.msra.mxu0 0.0
        %1170 = vmatprep.subr.mxu0 0.0
        %1171 = vmatpush1.msra.mxu0 0.0
        %1172 = vmatprep.subr.mxu0 0.0
        %1173 = vmatpush1.msra.mxu0 0.0
        %1174 = vmatprep.subr.mxu0 0.0
        %1175 = vmatpush1.msra.mxu0 0.0
        %1176 = vmatprep.subr.mxu0 0.0
        %1177 = vmatpush1.msra.mxu0 0.0
        %1178 = vmatprep.subr.mxu0 0.0
        %1179 = vmatpush1.msra.mxu0 0.0
        %1180 = vmatprep.mubr.f32.mxu0 0.0
        %1181 = vmatmul.mubr.f32.gmra.mrb[0].mxu0 %v1114
        %v1182 = vpop.f32.mrb[0].mxu0
        %v1183 = vadd.f32 %v1111, %v1182
        %v1184 = vpop.f32.mrb[0].mxu0
        %v1185 = vadd.f32 %v1111, %v1184
        %1186 = vdwg.mxu0
        %v1187 = vadd.f32 %v1104, %v1183
        %v1188 = vadd.f32 %v1105, %v1185
        %v1189 = vmax.f32 %v1187, 0.0
        %v1190 = vmax.f32 %v1188, 0.0
        %v1191 = vadd.s32 %v494, 2
        %v1192 = vadd.s32 %v495, 2
        %v1193 = vadd.s32 %v496, 2
        %v1194 = vadd.s32 %v497, 2
        %v1195 = vadd.s32 %v498, 2
        %v1196 = vadd.s32 %v499, 2
        %v1197 = vadd.s32 %v500, 2
        %v1198 = vadd.s32 %v501, 2
        %v1199 = vadd.s32 %v502, 2
        %v1200 = vadd.s32 %v503, 2
        %v1201 = vadd.s32 %v504, 2
        %v1202 = vadd.s32 %v505, 2
        %v1203 = vadd.s32 %v506, 2
        %v1204 = vadd.s32 %v507, 2
        %v1205 = vadd.s32 %v508, 2
        %v1206 = vadd.s32 %v509, 2
        %v1207 = vadd.s32 %v510, 2
        %v1208 = vadd.s32 %v511, 2
        %v1209 = vadd.s32 %v512, 2
        %v1210 = vadd.s32 %v513, 2
        %vm1211 = vcmp.eq.s32.totalorder %v1191, %v515
        %vm1212 = vcmp.eq.s32.totalorder %v1191, %v516
        %vm1213 = vcmp.eq.s32.totalorder %v1192, %v515
        %vm1214 = vcmp.eq.s32.totalorder %v1192, %v516
        %vm1215 = vcmp.eq.s32.totalorder %v1193, %v515
        %vm1216 = vcmp.eq.s32.totalorder %v1193, %v516
        %vm1217 = vcmp.eq.s32.totalorder %v1194, %v515
        %vm1218 = vcmp.eq.s32.totalorder %v1194, %v516
        %vm1219 = vcmp.eq.s32.totalorder %v1195, %v515
        %vm1220 = vcmp.eq.s32.totalorder %v1195, %v516
        %vm1221 = vcmp.eq.s32.totalorder %v1196, %v515
        %vm1222 = vcmp.eq.s32.totalorder %v1196, %v516
        %vm1223 = vcmp.eq.s32.totalorder %v1197, %v515
        %vm1224 = vcmp.eq.s32.totalorder %v1197, %v516
        %vm1225 = vcmp.eq.s32.totalorder %v1198, %v515
        %vm1226 = vcmp.eq.s32.totalorder %v1198, %v516
        %vm1227 = vcmp.eq.s32.totalorder %v1199, %v515
        %vm1228 = vcmp.eq.s32.totalorder %v1199, %v516
        %vm1229 = vcmp.eq.s32.totalorder %v1200, %v515
        %vm1230 = vcmp.eq.s32.totalorder %v1200, %v516
        %vm1231 = vcmp.eq.s32.totalorder %v1201, %v515
        %vm1232 = vcmp.eq.s32.totalorder %v1201, %v516
        %vm1233 = vcmp.eq.s32.totalorder %v1202, %v515
        %vm1234 = vcmp.eq.s32.totalorder %v1202, %v516
        %vm1235 = vcmp.eq.s32.totalorder %v1203, %v515
        %vm1236 = vcmp.eq.s32.totalorder %v1203, %v516
        %vm1237 = vcmp.eq.s32.totalorder %v1204, %v515
        %vm1238 = vcmp.eq.s32.totalorder %v1204, %v516
        %vm1239 = vcmp.eq.s32.totalorder %v1205, %v515
        %vm1240 = vcmp.eq.s32.totalorder %v1205, %v516
        %vm1241 = vcmp.eq.s32.totalorder %v1206, %v515
        %vm1242 = vcmp.eq.s32.totalorder %v1206, %v516
        %vm1243 = vcmp.eq.s32.totalorder %v1207, %v515
        %vm1244 = vcmp.eq.s32.totalorder %v1207, %v516
        %vm1245 = vcmp.eq.s32.totalorder %v1208, %v515
        %vm1246 = vcmp.eq.s32.totalorder %v1208, %v516
        %vm1247 = vcmp.eq.s32.totalorder %v1209, %v515
        %vm1248 = vcmp.eq.s32.totalorder %v1209, %v516
        %vm1249 = vcmp.eq.s32.totalorder %v1210, %v515
        %vm1250 = vcmp.eq.s32.totalorder %v1210, %v516
        %v1251 = vsel %vm1211, 1.0, 0.0
        %v1252 = vsel %vm1212, 1.0, 0.0
        %v1253 = vsel %vm1213, 1.0, 0.0
        %v1254 = vsel %vm1214, 1.0, 0.0
        %v1255 = vsel %vm1215, 1.0, 0.0
        %v1256 = vsel %vm1216, 1.0, 0.0
        %v1257 = vsel %vm1217, 1.0, 0.0
        %v1258 = vsel %vm1218, 1.0, 0.0
        %v1259 = vsel %vm1219, 1.0, 0.0
        %v1260 = vsel %vm1220, 1.0, 0.0
        %v1261 = vsel %vm1221, 1.0, 0.0
        %v1262 = vsel %vm1222, 1.0, 0.0
        %v1263 = vsel %vm1223, 1.0, 0.0
        %v1264 = vsel %vm1224, 1.0, 0.0
        %v1265 = vsel %vm1225, 1.0, 0.0
        %v1266 = vsel %vm1226, 1.0, 0.0
        %v1267 = vsel %vm1227, 1.0, 0.0
        %v1268 = vsel %vm1228, 1.0, 0.0
        %v1269 = vsel %vm1229, 1.0, 0.0
        %v1270 = vsel %vm1230, 1.0, 0.0
        %v1271 = vsel %vm1231, 1.0, 0.0
        %v1272 = vsel %vm1232, 1.0, 0.0
        %v1273 = vsel %vm1233, 1.0, 0.0
        %v1274 = vsel %vm1234, 1.0, 0.0
        %v1275 = vsel %vm1235, 1.0, 0.0
        %v1276 = vsel %vm1236, 1.0, 0.0
        %v1277 = vsel %vm1237, 1.0, 0.0
        %v1278 = vsel %vm1238, 1.0, 0.0
        %v1279 = vsel %vm1239, 1.0, 0.0
        %v1280 = vsel %vm1240, 1.0, 0.0
        %v1281 = vsel %vm1241, 1.0, 0.0
        %v1282 = vsel %vm1242, 1.0, 0.0
        %v1283 = vsel %vm1243, 1.0, 0.0
        %v1284 = vsel %vm1244, 1.0, 0.0
        %v1285 = vsel %vm1245, 1.0, 0.0
        %v1286 = vsel %vm1246, 1.0, 0.0
        %v1287 = vsel %vm1247, 1.0, 0.0
        %v1288 = vsel %vm1248, 1.0, 0.0
        %v1289 = vsel %vm1249, 1.0, 0.0
        %v1290 = vsel %vm1250, 1.0, 0.0
        %v1291 = vld [vmem:[%s8] sm:$0xff]
        %s1292 = scalar_lea.vmem %s7, 8
        %v1293 = vld [vmem:[%s1292] sm:$0xff]
        %v1295 = vsel %vm871, %v1293, 0
        %1297 = vmatprep.subr.mxu0 %v1190
        %1298 = vmatpush1.msra.mxu0 %v1189
        %1299 = vmatprep.subr.mxu0 0.0
        %1300 = vmatpush1.msra.mxu0 0.0
        %1301 = vmatprep.subr.mxu0 0.0
        %1302 = vmatpush1.msra.mxu0 0.0
        %1303 = vmatprep.subr.mxu0 0.0
        %1304 = vmatpush1.msra.mxu0 0.0
        %1305 = vmatprep.subr.mxu0 0.0
        %1306 = vmatpush1.msra.mxu0 0.0
        %1307 = vmatprep.subr.mxu0 0.0
        %1308 = vmatpush1.msra.mxu0 0.0
        %1309 = vmatprep.subr.mxu0 0.0
        %1310 = vmatpush1.msra.mxu0 0.0
        %1311 = vmatprep.subr.mxu0 0.0
        %1312 = vmatpush1.msra.mxu0 0.0
        %1313 = vmatprep.subr.mxu0 0.0
        %1314 = vmatpush1.msra.mxu0 0.0
        %1315 = vmatprep.subr.mxu0 0.0
        %1316 = vmatpush1.msra.mxu0 0.0
        %1317 = vmatprep.subr.mxu0 0.0
        %1318 = vmatpush1.msra.mxu0 0.0
        %1319 = vmatprep.subr.mxu0 0.0
        %1320 = vmatpush1.msra.mxu0 0.0
        %1321 = vmatprep.subr.mxu0 0.0
        %1322 = vmatpush1.msra.mxu0 0.0
        %1323 = vmatprep.subr.mxu0 0.0
        %1324 = vmatpush1.msra.mxu0 0.0
        %1325 = vmatprep.subr.mxu0 0.0
        %1326 = vmatpush1.msra.mxu0 0.0
        %1327 = vmatprep.subr.mxu0 0.0
        %1328 = vmatpush1.msra.mxu0 0.0
        %1329 = vmatprep.subr.mxu0 0.0
        %1330 = vmatpush1.msra.mxu0 0.0
        %1331 = vmatprep.subr.mxu0 0.0
        %1332 = vmatpush1.msra.mxu0 0.0
        %1333 = vmatprep.subr.mxu0 0.0
        %1334 = vmatpush1.msra.mxu0 0.0
        %1335 = vmatprep.subr.mxu0 0.0
        %1336 = vmatpush1.msra.mxu0 0.0
        %1337 = vmatprep.subr.mxu0 0.0
        %1338 = vmatpush1.msra.mxu0 0.0
        %1339 = vmatprep.subr.mxu0 0.0
        %1340 = vmatpush1.msra.mxu0 0.0
        %1341 = vmatprep.subr.mxu0 0.0
        %1342 = vmatpush1.msra.mxu0 0.0
        %1343 = vmatprep.subr.mxu0 0.0
        %1344 = vmatpush1.msra.mxu0 0.0
        %1345 = vmatprep.subr.mxu0 0.0
        %1346 = vmatpush1.msra.mxu0 0.0
        %1347 = vmatprep.subr.mxu0 0.0
        %1348 = vmatpush1.msra.mxu0 0.0
        %1349 = vmatprep.subr.mxu0 0.0
        %1350 = vmatpush1.msra.mxu0 0.0
        %1351 = vmatprep.subr.mxu0 0.0
        %1352 = vmatpush1.msra.mxu0 0.0
        %1353 = vmatprep.subr.mxu0 0.0
        %1354 = vmatpush1.msra.mxu0 0.0
        %1355 = vmatprep.subr.mxu0 0.0
        %1356 = vmatpush1.msra.mxu0 0.0
        %1357 = vmatprep.subr.mxu0 0.0
        %1358 = vmatpush1.msra.mxu0 0.0
        %1359 = vmatprep.subr.mxu0 0.0
        %1360 = vmatpush1.msra.mxu0 0.0
        %1361 = vmatprep.mubr.f32.mxu0 0.0
        %1362 = vmatmul.mubr.f32.gmra.mrb[0].mxu0 %v1295
        %v1363 = vpop.f32.mrb[0].mxu0
        %v1364 = vadd.f32 0.0, %v1363
        %v1365 = vpop.f32.mrb[0].mxu0
        %v1366 = vadd.f32 0.0, %v1365
        %1367 = vdwg.mxu0
        %1369 = vset.pattern.permute.xlu0 0
        %1370 = vperm.xlu0 %1369, %v1291
        %v1371 = vpop.permute.xlu0 %1370
        %v1373 = vadd.f32 %v1371, %v1364
        %v1374 = vadd.f32 %v1371, %v1366
        %v1376 = vsel %vm709, %v1190, 0
        %1378 = vmatprep.subr.mxu0 %v1252
        %1379 = vmatpush1.msra.mxu0 %v1251
        %1380 = vmatprep.subr.mxu0 %v1254
        %1381 = vmatpush1.msra.mxu0 %v1253
        %1382 = vmatprep.subr.mxu0 %v1256
        %1383 = vmatpush1.msra.mxu0 %v1255
        %1384 = vmatprep.subr.mxu0 %v1258
        %1385 = vmatpush1.msra.mxu0 %v1257
        %1386 = vmatprep.subr.mxu0 %v1260
        %1387 = vmatpush1.msra.mxu0 %v1259
        %1388 = vmatprep.subr.mxu0 %v1262
        %1389 = vmatpush1.msra.mxu0 %v1261
        %1390 = vmatprep.subr.mxu0 %v1264
        %1391 = vmatpush1.msra.mxu0 %v1263
        %1392 = vmatprep.subr.mxu0 %v1266
        %1393 = vmatpush1.msra.mxu0 %v1265
        %1394 = vmatprep.subr.mxu0 %v1268
        %1395 = vmatpush1.msra.mxu0 %v1267
        %1396 = vmatprep.subr.mxu0 %v1270
        %1397 = vmatpush1.msra.mxu0 %v1269
        %1398 = vmatprep.subr.mxu0 %v1272
        %1399 = vmatpush1.msra.mxu0 %v1271
        %1400 = vmatprep.subr.mxu0 %v1274
        %1401 = vmatpush1.msra.mxu0 %v1273
        %1402 = vmatprep.subr.mxu0 %v1276
        %1403 = vmatpush1.msra.mxu0 %v1275
        %1404 = vmatprep.subr.mxu0 %v1278
        %1405 = vmatpush1.msra.mxu0 %v1277
        %1406 = vmatprep.subr.mxu0 %v1280
        %1407 = vmatpush1.msra.mxu0 %v1279
        %1408 = vmatprep.subr.mxu0 %v1282
        %1409 = vmatpush1.msra.mxu0 %v1281
        %1410 = vmatprep.subr.mxu0 %v1284
        %1411 = vmatpush1.msra.mxu0 %v1283
        %1412 = vmatprep.subr.mxu0 %v1286
        %1413 = vmatpush1.msra.mxu0 %v1285
        %1414 = vmatprep.subr.mxu0 %v1288
        %1415 = vmatpush1.msra.mxu0 %v1287
        %1416 = vmatprep.subr.mxu0 %v1290
        %1417 = vmatpush1.msra.mxu0 %v1289
        %1418 = vmatprep.subr.mxu0 0.0
        %1419 = vmatpush1.msra.mxu0 0.0
        %1420 = vmatprep.subr.mxu0 0.0
        %1421 = vmatpush1.msra.mxu0 0.0
        %1422 = vmatprep.subr.mxu0 0.0
        %1423 = vmatpush1.msra.mxu0 0.0
        %1424 = vmatprep.subr.mxu0 0.0
        %1425 = vmatpush1.msra.mxu0 0.0
        %1426 = vmatprep.subr.mxu0 0.0
        %1427 = vmatpush1.msra.mxu0 0.0
        %1428 = vmatprep.subr.mxu0 0.0
        %1429 = vmatpush1.msra.mxu0 0.0
        %1430 = vmatprep.subr.mxu0 0.0
        %1431 = vmatpush1.msra.mxu0 0.0
        %1432 = vmatprep.subr.mxu0 0.0
        %1433 = vmatpush1.msra.mxu0 0.0
        %1434 = vmatprep.subr.mxu0 0.0
        %1435 = vmatpush1.msra.mxu0 0.0
        %1436 = vmatprep.subr.mxu0 0.0
        %1437 = vmatpush1.msra.mxu0 0.0
        %1438 = vmatprep.subr.mxu0 0.0
        %1439 = vmatpush1.msra.mxu0 0.0
        %1440 = vmatprep.subr.mxu0 0.0
        %1441 = vmatpush1.msra.mxu0 0.0
        %1442 = vmatprep.mubr.f32.mxu0 %v1376
        %1443 = vmatmul.mubr.f32.gmra.mrb[0].mxu0 %v1189
        %v1444 = vpop.f32.mrb[0].mxu0
        %v1445 = vadd.f32 0.0, %v1444
        %v1446 = vpop.f32.mrb[0].mxu0
        %v1447 = vadd.f32 0.0, %v1446
        %1448 = vdwg.mxu0
        %v1449 = vld [vmem:[%s7] sm:$0xff]
        %v1451 = vsel %vm871, %v1449, 0
        %1453 = vmatprep.subr.mxu0 %v1447
        %1454 = vmatpush1.msra.mxu0 %v1445
        %1455 = vmatprep.subr.mxu0 0.0
        %1456 = vmatpush1.msra.mxu0 0.0
        %1457 = vmatprep.subr.mxu0 0.0
        %1458 = vmatpush1.msra.mxu0 0.0
        %1459 = vmatprep.subr.mxu0 0.0
        %1460 = vmatpush1.msra.mxu0 0.0
        %1461 = vmatprep.subr.mxu0 0.0
        %1462 = vmatpush1.msra.mxu0 0.0
        %1463 = vmatprep.subr.mxu0 0.0
        %1464 = vmatpush1.msra.mxu0 0.0
        %1465 = vmatprep.subr.mxu0 0.0
        %1466 = vmatpush1.msra.mxu0 0.0
        %1467 = vmatprep.subr.mxu0 0.0
        %1468 = vmatpush1.msra.mxu0 0.0
        %1469 = vmatprep.subr.mxu0 0.0
        %1470 = vmatpush1.msra.mxu0 0.0
        %1471 = vmatprep.subr.mxu0 0.0
        %1472 = vmatpush1.msra.mxu0 0.0
        %1473 = vmatprep.subr.mxu0 0.0
        %1474 = vmatpush1.msra.mxu0 0.0
        %1475 = vmatprep.subr.mxu0 0.0
        %1476 = vmatpush1.msra.mxu0 0.0
        %1477 = vmatprep.subr.mxu0 0.0
        %1478 = vmatpush1.msra.mxu0 0.0
        %1479 = vmatprep.subr.mxu0 0.0
        %1480 = vmatpush1.msra.mxu0 0.0
        %1481 = vmatprep.subr.mxu0 0.0
        %1482 = vmatpush1.msra.mxu0 0.0
        %1483 = vmatprep.subr.mxu0 0.0
        %1484 = vmatpush1.msra.mxu0 0.0
        %1485 = vmatprep.subr.mxu0 0.0
        %1486 = vmatpush1.msra.mxu0 0.0
        %1487 = vmatprep.subr.mxu0 0.0
        %1488 = vmatpush1.msra.mxu0 0.0
        %1489 = vmatprep.subr.mxu0 0.0
        %1490 = vmatpush1.msra.mxu0 0.0
        %1491 = vmatprep.subr.mxu0 0.0
        %1492 = vmatpush1.msra.mxu0 0.0
        %1493 = vmatprep.subr.mxu0 0.0
        %1494 = vmatpush1.msra.mxu0 0.0
        %1495 = vmatprep.subr.mxu0 0.0
        %1496 = vmatpush1.msra.mxu0 0.0
        %1497 = vmatprep.subr.mxu0 0.0
        %1498 = vmatpush1.msra.mxu0 0.0
        %1499 = vmatprep.subr.mxu0 0.0
        %1500 = vmatpush1.msra.mxu0 0.0
        %1501 = vmatprep.subr.mxu0 0.0
        %1502 = vmatpush1.msra.mxu0 0.0
        %1503 = vmatprep.subr.mxu0 0.0
        %1504 = vmatpush1.msra.mxu0 0.0
        %1505 = vmatprep.subr.mxu0 0.0
        %1506 = vmatpush1.msra.mxu0 0.0
        %1507 = vmatprep.subr.mxu0 0.0
        %1508 = vmatpush1.msra.mxu0 0.0
        %1509 = vmatprep.subr.mxu0 0.0
        %1510 = vmatpush1.msra.mxu0 0.0
        %1511 = vmatprep.subr.mxu0 0.0
        %1512 = vmatpush1.msra.mxu0 0.0
        %1513 = vmatprep.subr.mxu0 0.0
        %1514 = vmatpush1.msra.mxu0 0.0
        %1515 = vmatprep.subr.mxu0 0.0
        %1516 = vmatpush1.msra.mxu0 0.0
        %1517 = vmatprep.mubr.f32.mxu0 0.0
        %1518 = vmatmul.mubr.f32.gmra.mrb[0].mxu0 %v1451
        %v1519 = vpop.f32.mrb[0].mxu0
        %v1520 = vadd.f32 0.0, %v1519
        %v1521 = vpop.f32.mrb[0].mxu0
        %v1522 = vadd.f32 0.0, %v1521
        %1523 = vdwg.mxu0
        %v1524 = vadd.f32 %v1373, %v1520
        %v1525 = vadd.f32 %v1374, %v1522
        %v1526 = vmax.f32 %v1524, 0.0
        %v1527 = vmax.f32 %v1525, 0.0
        %v1528 = vld [vmem:[%s10] sm:$0xff]
        %s1529 = scalar_lea.vmem %s9, 8
        %v1530 = vld [vmem:[%s1529] sm:$0xff]
        %v1532 = vsel %vm871, %v1530, 0
        %1534 = vmatprep.subr.mxu0 %v1527
        %1535 = vmatpush1.msra.mxu0 %v1526
        %1536 = vmatprep.subr.mxu0 0.0
        %1537 = vmatpush1.msra.mxu0 0.0
        %1538 = vmatprep.subr.mxu0 0.0
        %1539 = vmatpush1.msra.mxu0 0.0
        %1540 = vmatprep.subr.mxu0 0.0
        %1541 = vmatpush1.msra.mxu0 0.0
        %1542 = vmatprep.subr.mxu0 0.0
        %1543 = vmatpush1.msra.mxu0 0.0
        %1544 = vmatprep.subr.mxu0 0.0
        %1545 = vmatpush1.msra.mxu0 0.0
        %1546 = vmatprep.subr.mxu0 0.0
        %1547 = vmatpush1.msra.mxu0 0.0
        %1548 = vmatprep.subr.mxu0 0.0
        %1549 = vmatpush1.msra.mxu0 0.0
        %1550 = vmatprep.subr.mxu0 0.0
        %1551 = vmatpush1.msra.mxu0 0.0
        %1552 = vmatprep.subr.mxu0 0.0
        %1553 = vmatpush1.msra.mxu0 0.0
        %1554 = vmatprep.subr.mxu0 0.0
        %1555 = vmatpush1.msra.mxu0 0.0
        %1556 = vmatprep.subr.mxu0 0.0
        %1557 = vmatpush1.msra.mxu0 0.0
        %1558 = vmatprep.subr.mxu0 0.0
        %1559 = vmatpush1.msra.mxu0 0.0
        %1560 = vmatprep.subr.mxu0 0.0
        %1561 = vmatpush1.msra.mxu0 0.0
        %1562 = vmatprep.subr.mxu0 0.0
        %1563 = vmatpush1.msra.mxu0 0.0
        %1564 = vmatprep.subr.mxu0 0.0
        %1565 = vmatpush1.msra.mxu0 0.0
        %1566 = vmatprep.subr.mxu0 0.0
        %1567 = vmatpush1.msra.mxu0 0.0
        %1568 = vmatprep.subr.mxu0 0.0
        %1569 = vmatpush1.msra.mxu0 0.0
        %1570 = vmatprep.subr.mxu0 0.0
        %1571 = vmatpush1.msra.mxu0 0.0
        %1572 = vmatprep.subr.mxu0 0.0
        %1573 = vmatpush1.msra.mxu0 0.0
        %1574 = vmatprep.subr.mxu0 0.0
        %1575 = vmatpush1.msra.mxu0 0.0
        %1576 = vmatprep.subr.mxu0 0.0
        %1577 = vmatpush1.msra.mxu0 0.0
        %1578 = vmatprep.subr.mxu0 0.0
        %1579 = vmatpush1.msra.mxu0 0.0
        %1580 = vmatprep.subr.mxu0 0.0
        %1581 = vmatpush1.msra.mxu0 0.0
        %1582 = vmatprep.subr.mxu0 0.0
        %1583 = vmatpush1.msra.mxu0 0.0
        %1584 = vmatprep.subr.mxu0 0.0
        %1585 = vmatpush1.msra.mxu0 0.0
        %1586 = vmatprep.subr.mxu0 0.0
        %1587 = vmatpush1.msra.mxu0 0.0
        %1588 = vmatprep.subr.mxu0 0.0
        %1589 = vmatpush1.msra.mxu0 0.0
        %1590 = vmatprep.subr.mxu0 0.0
        %1591 = vmatpush1.msra.mxu0 0.0
        %1592 = vmatprep.subr.mxu0 0.0
        %1593 = vmatpush1.msra.mxu0 0.0
        %1594 = vmatprep.subr.mxu0 0.0
        %1595 = vmatpush1.msra.mxu0 0.0
        %1596 = vmatprep.subr.mxu0 0.0
        %1597 = vmatpush1.msra.mxu0 0.0
        %1598 = vmatprep.mubr.f32.mxu0 0.0
        %1599 = vmatmul.mubr.f32.gmra.mrb[0].mxu0 %v1532
        %v1600 = vpop.f32.mrb[0].mxu0
        %v1601 = vadd.f32 0.0, %v1600
        %v1602 = vpop.f32.mrb[0].mxu0
        %v1603 = vadd.f32 0.0, %v1602
        %1604 = vdwg.mxu0
        %1606 = vset.pattern.permute.xlu0 0
        %1607 = vperm.xlu0 %1606, %v1528
        %v1608 = vpop.permute.xlu0 %1607
        %v1610 = vadd.f32 %v1608, %v1601
        %v1611 = vadd.f32 %v1608, %v1603
        %v1613 = vsel %vm709, %v1527, 0
        %1615 = vmatprep.subr.mxu0 %v1252
        %1616 = vmatpush1.msra.mxu0 %v1251
        %1617 = vmatprep.subr.mxu0 %v1254
        %1618 = vmatpush1.msra.mxu0 %v1253
        %1619 = vmatprep.subr.mxu0 %v1256
        %1620 = vmatpush1.msra.mxu0 %v1255
        %1621 = vmatprep.subr.mxu0 %v1258
        %1622 = vmatpush1.msra.mxu0 %v1257
        %1623 = vmatprep.subr.mxu0 %v1260
        %1624 = vmatpush1.msra.mxu0 %v1259
        %1625 = vmatprep.subr.mxu0 %v1262
        %1626 = vmatpush1.msra.mxu0 %v1261
        %1627 = vmatprep.subr.mxu0 %v1264
        %1628 = vmatpush1.msra.mxu0 %v1263
        %1629 = vmatprep.subr.mxu0 %v1266
        %1630 = vmatpush1.msra.mxu0 %v1265
        %1631 = vmatprep.subr.mxu0 %v1268
        %1632 = vmatpush1.msra.mxu0 %v1267
        %1633 = vmatprep.subr.mxu0 %v1270
        %1634 = vmatpush1.msra.mxu0 %v1269
        %1635 = vmatprep.subr.mxu0 %v1272
        %1636 = vmatpush1.msra.mxu0 %v1271
        %1637 = vmatprep.subr.mxu0 %v1274
        %1638 = vmatpush1.msra.mxu0 %v1273
        %1639 = vmatprep.subr.mxu0 %v1276
        %1640 = vmatpush1.msra.mxu0 %v1275
        %1641 = vmatprep.subr.mxu0 %v1278
        %1642 = vmatpush1.msra.mxu0 %v1277
        %1643 = vmatprep.subr.mxu0 %v1280
        %1644 = vmatpush1.msra.mxu0 %v1279
        %1645 = vmatprep.subr.mxu0 %v1282
        %1646 = vmatpush1.msra.mxu0 %v1281
        %1647 = vmatprep.subr.mxu0 %v1284
        %1648 = vmatpush1.msra.mxu0 %v1283
        %1649 = vmatprep.subr.mxu0 %v1286
        %1650 = vmatpush1.msra.mxu0 %v1285
        %1651 = vmatprep.subr.mxu0 %v1288
        %1652 = vmatpush1.msra.mxu0 %v1287
        %1653 = vmatprep.subr.mxu0 %v1290
        %1654 = vmatpush1.msra.mxu0 %v1289
        %1655 = vmatprep.subr.mxu0 0.0
        %1656 = vmatpush1.msra.mxu0 0.0
        %1657 = vmatprep.subr.mxu0 0.0
        %1658 = vmatpush1.msra.mxu0 0.0
        %1659 = vmatprep.subr.mxu0 0.0
        %1660 = vmatpush1.msra.mxu0 0.0
        %1661 = vmatprep.subr.mxu0 0.0
        %1662 = vmatpush1.msra.mxu0 0.0
        %1663 = vmatprep.subr.mxu0 0.0
        %1664 = vmatpush1.msra.mxu0 0.0
        %1665 = vmatprep.subr.mxu0 0.0
        %1666 = vmatpush1.msra.mxu0 0.0
        %1667 = vmatprep.subr.mxu0 0.0
        %1668 = vmatpush1.msra.mxu0 0.0
        %1669 = vmatprep.subr.mxu0 0.0
        %1670 = vmatpush1.msra.mxu0 0.0
        %1671 = vmatprep.subr.mxu0 0.0
        %1672 = vmatpush1.msra.mxu0 0.0
        %1673 = vmatprep.subr.mxu0 0.0
        %1674 = vmatpush1.msra.mxu0 0.0
        %1675 = vmatprep.subr.mxu0 0.0
        %1676 = vmatpush1.msra.mxu0 0.0
        %1677 = vmatprep.subr.mxu0 0.0
        %1678 = vmatpush1.msra.mxu0 0.0
        %1679 = vmatprep.mubr.f32.mxu0 %v1613
        %1680 = vmatmul.mubr.f32.gmra.mrb[0].mxu0 %v1526
        %v1681 = vpop.f32.mrb[0].mxu0
        %v1682 = vadd.f32 0.0, %v1681
        %v1683 = vpop.f32.mrb[0].mxu0
        %v1684 = vadd.f32 0.0, %v1683
        %1685 = vdwg.mxu0
        %v1686 = vld [vmem:[%s9] sm:$0xff]
        %v1688 = vsel %vm871, %v1686, 0
        %1690 = vmatprep.subr.mxu0 %v1684
        %1691 = vmatpush1.msra.mxu0 %v1682
        %1692 = vmatprep.subr.mxu0 0.0
        %1693 = vmatpush1.msra.mxu0 0.0
        %1694 = vmatprep.subr.mxu0 0.0
        %1695 = vmatpush1.msra.mxu0 0.0
        %1696 = vmatprep.subr.mxu0 0.0
        %1697 = vmatpush1.msra.mxu0 0.0
        %1698 = vmatprep.subr.mxu0 0.0
        %1699 = vmatpush1.msra.mxu0 0.0
        %1700 = vmatprep.subr.mxu0 0.0
        %1701 = vmatpush1.msra.mxu0 0.0
        %1702 = vmatprep.subr.mxu0 0.0
        %1703 = vmatpush1.msra.mxu0 0.0
        %1704 = vmatprep.subr.mxu0 0.0
        %1705 = vmatpush1.msra.mxu0 0.0
        %1706 = vmatprep.subr.mxu0 0.0
        %1707 = vmatpush1.msra.mxu0 0.0
        %1708 = vmatprep.subr.mxu0 0.0
        %1709 = vmatpush1.msra.mxu0 0.0
        %1710 = vmatprep.subr.mxu0 0.0
        %1711 = vmatpush1.msra.mxu0 0.0
        %1712 = vmatprep.subr.mxu0 0.0
        %1713 = vmatpush1.msra.mxu0 0.0
        %1714 = vmatprep.subr.mxu0 0.0
        %1715 = vmatpush1.msra.mxu0 0.0
        %1716 = vmatprep.subr.mxu0 0.0
        %1717 = vmatpush1.msra.mxu0 0.0
        %1718 = vmatprep.subr.mxu0 0.0
        %1719 = vmatpush1.msra.mxu0 0.0
        %1720 = vmatprep.subr.mxu0 0.0
        %1721 = vmatpush1.msra.mxu0 0.0
        %1722 = vmatprep.subr.mxu0 0.0
        %1723 = vmatpush1.msra.mxu0 0.0
        %1724 = vmatprep.subr.mxu0 0.0
        %1725 = vmatpush1.msra.mxu0 0.0
        %1726 = vmatprep.subr.mxu0 0.0
        %1727 = vmatpush1.msra.mxu0 0.0
        %1728 = vmatprep.subr.mxu0 0.0
        %1729 = vmatpush1.msra.mxu0 0.0
        %1730 = vmatprep.subr.mxu0 0.0
        %1731 = vmatpush1.msra.mxu0 0.0
        %1732 = vmatprep.subr.mxu0 0.0
        %1733 = vmatpush1.msra.mxu0 0.0
        %1734 = vmatprep.subr.mxu0 0.0
        %1735 = vmatpush1.msra.mxu0 0.0
        %1736 = vmatprep.subr.mxu0 0.0
        %1737 = vmatpush1.msra.mxu0 0.0
        %1738 = vmatprep.subr.mxu0 0.0
        %1739 = vmatpush1.msra.mxu0 0.0
        %1740 = vmatprep.subr.mxu0 0.0
        %1741 = vmatpush1.msra.mxu0 0.0
        %1742 = vmatprep.subr.mxu0 0.0
        %1743 = vmatpush1.msra.mxu0 0.0
        %1744 = vmatprep.subr.mxu0 0.0
        %1745 = vmatpush1.msra.mxu0 0.0
        %1746 = vmatprep.subr.mxu0 0.0
        %1747 = vmatpush1.msra.mxu0 0.0
        %1748 = vmatprep.subr.mxu0 0.0
        %1749 = vmatpush1.msra.mxu0 0.0
        %1750 = vmatprep.subr.mxu0 0.0
        %1751 = vmatpush1.msra.mxu0 0.0
        %1752 = vmatprep.subr.mxu0 0.0
        %1753 = vmatpush1.msra.mxu0 0.0
        %1754 = vmatprep.mubr.f32.mxu0 0.0
        %1755 = vmatmul.mubr.f32.gmra.mrb[0].mxu0 %v1688
        %v1756 = vpop.f32.mrb[0].mxu0
        %v1757 = vadd.f32 0.0, %v1756
        %v1758 = vpop.f32.mrb[0].mxu0
        %v1759 = vadd.f32 0.0, %v1758
        %1760 = vdwg.mxu0
        %v1761 = vadd.f32 %v1610, %v1757
        %v1762 = vadd.f32 %v1611, %v1759
        %v1763 = vmax.f32 %v1761, 0.0
        %v1764 = vmax.f32 %v1762, 0.0
        %v1765 = vadd.f32 %v1763, %v1189
        %v1766 = vadd.f32 %v1764, %v1190
        %v1767 = vmax.f32 %v1765, 0.0
        %v1768 = vmax.f32 %v1766, 0.0
        %1769 = vst [vmem:[#allocation2] sm:$0xff] %v1767
        %1770 = vst.msk [vmem:[#allocation2 + $0x8] sm:$0xff] %vm709, %v1768
        %v1771 = vld [vmem:[%s12] sm:$0x1]
        %v1772 = vld [vmem:[#allocation2] ss:$8 sm:$0x3]
        %v1773 = vld [vmem:[%s11] sm:$0xff]
        %v1774 = vld [vmem:[%s11 + $0x8] sm:$0xff]
        %v1775 = vld [vmem:[%s11 + $0x10] sm:$0xff]
        %v1776 = vld [vmem:[%s11 + $0x18] sm:$0xff]
        %v1777 = vld [vmem:[%s11 + $0x20] sm:$0xff]
        %v1778 = vld [vmem:[%s11 + $0x28] sm:$0xff]
        %v1779 = vld [vmem:[%s11 + $0x30] sm:$0xff]
        %v1780 = vld [vmem:[%s11 + $0x38] sm:$0xff]
        %v1781 = vld [vmem:[%s11 + $0x40] sm:$0xff]
        %v1782 = vld [vmem:[%s11 + $0x48] sm:$0xff]
        %v1783 = vld [vmem:[%s11 + $0x50] sm:$0xff]
        %v1784 = vld [vmem:[%s11 + $0x58] sm:$0xff]
        %v1785 = vld [vmem:[%s11 + $0x60] sm:$0xff]
        %v1786 = vld [vmem:[%s11 + $0x68] sm:$0xff]
        %v1787 = vld [vmem:[%s11 + $0x70] sm:$0xff]
        %v1788 = vld [vmem:[%s11 + $0x78] sm:$0xff]
        %v1789 = vld [vmem:[%s11 + $0x80] sm:$0xff]
        %v1790 = vld [vmem:[%s11 + $0x88] sm:$0xff]
        %v1791 = vld [vmem:[%s11 + $0x90] sm:$0xff]
        %v1792 = vld [vmem:[%s11 + $0x98] sm:$0xff]
        %v1794 = vlaneseq
        %v1795 = vshrl.u32 %v1794, 7
        %v1796 = vsub.s32 0, %v1795
        %v1797 = vrot.slane %v1772, %v1796
        %v1798 = vlaneseq
        %v1799 = vshrl.u32 %v1798, 7
        %v1800 = vsub.s32 1, %v1799
        %v1801 = vrot.slane %v1772, %v1800
        %v1803 = vsel %vm709, %v1801, 0
        %1805 = vmatprep.subr.mxu0 0.0
        %1806 = vmatpush1.msra.mxu0 %v1773
        %1807 = vmatprep.subr.mxu0 0.0
        %1808 = vmatpush1.msra.mxu0 %v1774
        %1809 = vmatprep.subr.mxu0 0.0
        %1810 = vmatpush1.msra.mxu0 %v1775
        %1811 = vmatprep.subr.mxu0 0.0
        %1812 = vmatpush1.msra.mxu0 %v1776
        %1813 = vmatprep.subr.mxu0 0.0
        %1814 = vmatpush1.msra.mxu0 %v1777
        %1815 = vmatprep.subr.mxu0 0.0
        %1816 = vmatpush1.msra.mxu0 %v1778
        %1817 = vmatprep.subr.mxu0 0.0
        %1818 = vmatpush1.msra.mxu0 %v1779
        %1819 = vmatprep.subr.mxu0 0.0
        %1820 = vmatpush1.msra.mxu0 %v1780
        %1821 = vmatprep.subr.mxu0 0.0
        %1822 = vmatpush1.msra.mxu0 %v1781
        %1823 = vmatprep.subr.mxu0 0.0
        %1824 = vmatpush1.msra.mxu0 %v1782
        %1825 = vmatprep.subr.mxu0 0.0
        %1826 = vmatpush1.msra.mxu0 %v1783
        %1827 = vmatprep.subr.mxu0 0.0
        %1828 = vmatpush1.msra.mxu0 %v1784
        %1829 = vmatprep.subr.mxu0 0.0
        %1830 = vmatpush1.msra.mxu0 %v1785
        %1831 = vmatprep.subr.mxu0 0.0
        %1832 = vmatpush1.msra.mxu0 %v1786
        %1833 = vmatprep.subr.mxu0 0.0
        %1834 = vmatpush1.msra.mxu0 %v1787
        %1835 = vmatprep.subr.mxu0 0.0
        %1836 = vmatpush1.msra.mxu0 %v1788
        %1837 = vmatprep.subr.mxu0 0.0
        %1838 = vmatpush1.msra.mxu0 %v1789
        %1839 = vmatprep.subr.mxu0 0.0
        %1840 = vmatpush1.msra.mxu0 %v1790
        %1841 = vmatprep.subr.mxu0 0.0
        %1842 = vmatpush1.msra.mxu0 %v1791
        %1843 = vmatprep.subr.mxu0 0.0
        %1844 = vmatpush1.msra.mxu0 %v1792
        %1845 = vmatprep.subr.mxu0 0.0
        %1846 = vmatpush1.msra.mxu0 0.0
        %1847 = vmatprep.subr.mxu0 0.0
        %1848 = vmatpush1.msra.mxu0 0.0
        %1849 = vmatprep.subr.mxu0 0.0
        %1850 = vmatpush1.msra.mxu0 0.0
        %1851 = vmatprep.subr.mxu0 0.0
        %1852 = vmatpush1.msra.mxu0 0.0
        %1853 = vmatprep.subr.mxu0 0.0
        %1854 = vmatpush1.msra.mxu0 0.0
        %1855 = vmatprep.subr.mxu0 0.0
        %1856 = vmatpush1.msra.mxu0 0.0
        %1857 = vmatprep.subr.mxu0 0.0
        %1858 = vmatpush1.msra.mxu0 0.0
        %1859 = vmatprep.subr.mxu0 0.0
        %1860 = vmatpush1.msra.mxu0 0.0
        %1861 = vmatprep.subr.mxu0 0.0
        %1862 = vmatpush1.msra.mxu0 0.0
        %1863 = vmatprep.subr.mxu0 0.0
        %1864 = vmatpush1.msra.mxu0 0.0
        %1865 = vmatprep.subr.mxu0 0.0
        %1866 = vmatpush1.msra.mxu0 0.0
        %1867 = vmatprep.subr.mxu0 0.0
        %1868 = vmatpush1.msra.mxu0 0.0
        %1869 = vmatprep.mubr.f32.mxu0 %v1803
        %1870 = vmatmul.mubr.f32.gmra.mrb[0].mxu0 %v1797
        %v1871 = vpop.f32.mrb[0].mxu0
        %v1872 = vadd.f32 0.0, %v1871
        %v1873 = vpop.f32.mrb[0].mxu0
        %1874 = vdwg.mxu0
        %v1875 = vadd.f32 %v1771, %v1872
        %s1876 = scalar_lea.vmem [#allocation2], 1
        %v1877 = vld [vmem:[%s1876] ss:$8 sm:$0x3]
        %s1878 = scalar_lea.vmem %s11, 160
        %v1879 = vld [vmem:[%s1878] sm:$0xff]
        %v1880 = vld [vmem:[%s1878 + $0x8] sm:$0xff]
        %v1881 = vld [vmem:[%s1878 + $0x10] sm:$0xff]
        %v1882 = vld [vmem:[%s1878 + $0x18] sm:$0xff]
        %v1883 = vld [vmem:[%s1878 + $0x20] sm:$0xff]
        %v1884 = vld [vmem:[%s1878 + $0x28] sm:$0xff]
        %v1885 = vld [vmem:[%s1878 + $0x30] sm:$0xff]
        %v1886 = vld [vmem:[%s1878 + $0x38] sm:$0xff]
        %v1887 = vld [vmem:[%s1878 + $0x40] sm:$0xff]
        %v1888 = vld [vmem:[%s1878 + $0x48] sm:$0xff]
        %v1889 = vld [vmem:[%s1878 + $0x50] sm:$0xff]
        %v1890 = vld [vmem:[%s1878 + $0x58] sm:$0xff]
        %v1891 = vld [vmem:[%s1878 + $0x60] sm:$0xff]
        %v1892 = vld [vmem:[%s1878 + $0x68] sm:$0xff]
        %v1893 = vld [vmem:[%s1878 + $0x70] sm:$0xff]
        %v1894 = vld [vmem:[%s1878 + $0x78] sm:$0xff]
        %v1895 = vld [vmem:[%s1878 + $0x80] sm:$0xff]
        %v1896 = vld [vmem:[%s1878 + $0x88] sm:$0xff]
        %v1897 = vld [vmem:[%s1878 + $0x90] sm:$0xff]
        %v1898 = vld [vmem:[%s1878 + $0x98] sm:$0xff]
        %v1900 = vlaneseq
        %v1901 = vshrl.u32 %v1900, 7
        %v1902 = vsub.s32 0, %v1901
        %v1903 = vrot.slane %v1877, %v1902
        %v1904 = vlaneseq
        %v1905 = vshrl.u32 %v1904, 7
        %v1906 = vsub.s32 1, %v1905
        %v1907 = vrot.slane %v1877, %v1906
        %v1909 = vsel %vm709, %v1907, 0
        %1911 = vmatprep.subr.mxu0 0.0
        %1912 = vmatpush1.msra.mxu0 %v1879
        %1913 = vmatprep.subr.mxu0 0.0
        %1914 = vmatpush1.msra.mxu0 %v1880
        %1915 = vmatprep.subr.mxu0 0.0
        %1916 = vmatpush1.msra.mxu0 %v1881
        %1917 = vmatprep.subr.mxu0 0.0
        %1918 = vmatpush1.msra.mxu0 %v1882
        %1919 = vmatprep.subr.mxu0 0.0
        %1920 = vmatpush1.msra.mxu0 %v1883
        %1921 = vmatprep.subr.mxu0 0.0
        %1922 = vmatpush1.msra.mxu0 %v1884
        %1923 = vmatprep.subr.mxu0 0.0
        %1924 = vmatpush1.msra.mxu0 %v1885
        %1925 = vmatprep.subr.mxu0 0.0
        %1926 = vmatpush1.msra.mxu0 %v1886
        %1927 = vmatprep.subr.mxu0 0.0
        %1928 = vmatpush1.msra.mxu0 %v1887
        %1929 = vmatprep.subr.mxu0 0.0
        %1930 = vmatpush1.msra.mxu0 %v1888
        %1931 = vmatprep.subr.mxu0 0.0
        %1932 = vmatpush1.msra.mxu0 %v1889
        %1933 = vmatprep.subr.mxu0 0.0
        %1934 = vmatpush1.msra.mxu0 %v1890
        %1935 = vmatprep.subr.mxu0 0.0
        %1936 = vmatpush1.msra.mxu0 %v1891
        %1937 = vmatprep.subr.mxu0 0.0
        %1938 = vmatpush1.msra.mxu0 %v1892
        %1939 = vmatprep.subr.mxu0 0.0
        %1940 = vmatpush1.msra.mxu0 %v1893
        %1941 = vmatprep.subr.mxu0 0.0
        %1942 = vmatpush1.msra.mxu0 %v1894
        %1943 = vmatprep.subr.mxu0 0.0
        %1944 = vmatpush1.msra.mxu0 %v1895
        %1945 = vmatprep.subr.mxu0 0.0
        %1946 = vmatpush1.msra.mxu0 %v1896
        %1947 = vmatprep.subr.mxu0 0.0
        %1948 = vmatpush1.msra.mxu0 %v1897
        %1949 = vmatprep.subr.mxu0 0.0
        %1950 = vmatpush1.msra.mxu0 %v1898
        %1951 = vmatprep.subr.mxu0 0.0
        %1952 = vmatpush1.msra.mxu0 0.0
        %1953 = vmatprep.subr.mxu0 0.0
        %1954 = vmatpush1.msra.mxu0 0.0
        %1955 = vmatprep.subr.mxu0 0.0
        %1956 = vmatpush1.msra.mxu0 0.0
        %1957 = vmatprep.subr.mxu0 0.0
        %1958 = vmatpush1.msra.mxu0 0.0
        %1959 = vmatprep.subr.mxu0 0.0
        %1960 = vmatpush1.msra.mxu0 0.0
        %1961 = vmatprep.subr.mxu0 0.0
        %1962 = vmatpush1.msra.mxu0 0.0
        %1963 = vmatprep.subr.mxu0 0.0
        %1964 = vmatpush1.msra.mxu0 0.0
        %1965 = vmatprep.subr.mxu0 0.0
        %1966 = vmatpush1.msra.mxu0 0.0
        %1967 = vmatprep.subr.mxu0 0.0
        %1968 = vmatpush1.msra.mxu0 0.0
        %1969 = vmatprep.subr.mxu0 0.0
        %1970 = vmatpush1.msra.mxu0 0.0
        %1971 = vmatprep.subr.mxu0 0.0
        %1972 = vmatpush1.msra.mxu0 0.0
        %1973 = vmatprep.subr.mxu0 0.0
        %1974 = vmatpush1.msra.mxu0 0.0
        %1975 = vmatprep.mubr.f32.mxu0 %v1909
        %1976 = vmatmul.mubr.f32.gmra.mrb[0].mxu0 %v1903
        %v1977 = vpop.f32.mrb[0].mxu0
        %v1978 = vadd.f32 0.0, %v1977
        %v1979 = vpop.f32.mrb[0].mxu0
        %1980 = vdwg.mxu0
        %v1981 = vadd.f32 %v1875, %v1978
        %s1982 = scalar_lea.vmem [#allocation2], 2
        %v1983 = vld [vmem:[%s1982] ss:$8 sm:$0x3]
        %s1984 = scalar_lea.vmem %s11, 320
        %v1985 = vld [vmem:[%s1984] sm:$0xff]
        %v1986 = vld [vmem:[%s1984 + $0x8] sm:$0xff]
        %v1987 = vld [vmem:[%s1984 + $0x10] sm:$0xff]
        %v1988 = vld [vmem:[%s1984 + $0x18] sm:$0xff]
        %v1989 = vld [vmem:[%s1984 + $0x20] sm:$0xff]
        %v1990 = vld [vmem:[%s1984 + $0x28] sm:$0xff]
        %v1991 = vld [vmem:[%s1984 + $0x30] sm:$0xff]
        %v1992 = vld [vmem:[%s1984 + $0x38] sm:$0xff]
        %v1993 = vld [vmem:[%s1984 + $0x40] sm:$0xff]
        %v1994 = vld [vmem:[%s1984 + $0x48] sm:$0xff]
        %v1995 = vld [vmem:[%s1984 + $0x50] sm:$0xff]
        %v1996 = vld [vmem:[%s1984 + $0x58] sm:$0xff]
        %v1997 = vld [vmem:[%s1984 + $0x60] sm:$0xff]
        %v1998 = vld [vmem:[%s1984 + $0x68] sm:$0xff]
        %v1999 = vld [vmem:[%s1984 + $0x70] sm:$0xff]
        %v2000 = vld [vmem:[%s1984 + $0x78] sm:$0xff]
        %v2001 = vld [vmem:[%s1984 + $0x80] sm:$0xff]
        %v2002 = vld [vmem:[%s1984 + $0x88] sm:$0xff]
        %v2003 = vld [vmem:[%s1984 + $0x90] sm:$0xff]
        %v2004 = vld [vmem:[%s1984 + $0x98] sm:$0xff]
        %v2006 = vlaneseq
        %v2007 = vshrl.u32 %v2006, 7
        %v2008 = vsub.s32 0, %v2007
        %v2009 = vrot.slane %v1983, %v2008
        %v2010 = vlaneseq
        %v2011 = vshrl.u32 %v2010, 7
        %v2012 = vsub.s32 1, %v2011
        %v2013 = vrot.slane %v1983, %v2012
        %v2015 = vsel %vm709, %v2013, 0
        %2017 = vmatprep.subr.mxu0 0.0
        %2018 = vmatpush1.msra.mxu0 %v1985
        %2019 = vmatprep.subr.mxu0 0.0
        %2020 = vmatpush1.msra.mxu0 %v1986
        %2021 = vmatprep.subr.mxu0 0.0
        %2022 = vmatpush1.msra.mxu0 %v1987
        %2023 = vmatprep.subr.mxu0 0.0
        %2024 = vmatpush1.msra.mxu0 %v1988
        %2025 = vmatprep.subr.mxu0 0.0
        %2026 = vmatpush1.msra.mxu0 %v1989
        %2027 = vmatprep.subr.mxu0 0.0
        %2028 = vmatpush1.msra.mxu0 %v1990
        %2029 = vmatprep.subr.mxu0 0.0
        %2030 = vmatpush1.msra.mxu0 %v1991
        %2031 = vmatprep.subr.mxu0 0.0
        %2032 = vmatpush1.msra.mxu0 %v1992
        %2033 = vmatprep.subr.mxu0 0.0
        %2034 = vmatpush1.msra.mxu0 %v1993
        %2035 = vmatprep.subr.mxu0 0.0
        %2036 = vmatpush1.msra.mxu0 %v1994
        %2037 = vmatprep.subr.mxu0 0.0
        %2038 = vmatpush1.msra.mxu0 %v1995
        %2039 = vmatprep.subr.mxu0 0.0
        %2040 = vmatpush1.msra.mxu0 %v1996
        %2041 = vmatprep.subr.mxu0 0.0
        %2042 = vmatpush1.msra.mxu0 %v1997
        %2043 = vmatprep.subr.mxu0 0.0
        %2044 = vmatpush1.msra.mxu0 %v1998
        %2045 = vmatprep.subr.mxu0 0.0
        %2046 = vmatpush1.msra.mxu0 %v1999
        %2047 = vmatprep.subr.mxu0 0.0
        %2048 = vmatpush1.msra.mxu0 %v2000
        %2049 = vmatprep.subr.mxu0 0.0
        %2050 = vmatpush1.msra.mxu0 %v2001
        %2051 = vmatprep.subr.mxu0 0.0
        %2052 = vmatpush1.msra.mxu0 %v2002
        %2053 = vmatprep.subr.mxu0 0.0
        %2054 = vmatpush1.msra.mxu0 %v2003
        %2055 = vmatprep.subr.mxu0 0.0
        %2056 = vmatpush1.msra.mxu0 %v2004
        %2057 = vmatprep.subr.mxu0 0.0
        %2058 = vmatpush1.msra.mxu0 0.0
        %2059 = vmatprep.subr.mxu0 0.0
        %2060 = vmatpush1.msra.mxu0 0.0
        %2061 = vmatprep.subr.mxu0 0.0
        %2062 = vmatpush1.msra.mxu0 0.0
        %2063 = vmatprep.subr.mxu0 0.0
        %2064 = vmatpush1.msra.mxu0 0.0
        %2065 = vmatprep.subr.mxu0 0.0
        %2066 = vmatpush1.msra.mxu0 0.0
        %2067 = vmatprep.subr.mxu0 0.0
        %2068 = vmatpush1.msra.mxu0 0.0
        %2069 = vmatprep.subr.mxu0 0.0
        %2070 = vmatpush1.msra.mxu0 0.0
        %2071 = vmatprep.subr.mxu0 0.0
        %2072 = vmatpush1.msra.mxu0 0.0
        %2073 = vmatprep.subr.mxu0 0.0
        %2074 = vmatpush1.msra.mxu0 0.0
        %2075 = vmatprep.subr.mxu0 0.0
        %2076 = vmatpush1.msra.mxu0 0.0
        %2077 = vmatprep.subr.mxu0 0.0
        %2078 = vmatpush1.msra.mxu0 0.0
        %2079 = vmatprep.subr.mxu0 0.0
        %2080 = vmatpush1.msra.mxu0 0.0
        %2081 = vmatprep.mubr.f32.mxu0 %v2015
        %2082 = vmatmul.mubr.f32.gmra.mrb[0].mxu0 %v2009
        %v2083 = vpop.f32.mrb[0].mxu0
        %v2084 = vadd.f32 0.0, %v2083
        %v2085 = vpop.f32.mrb[0].mxu0
        %2086 = vdwg.mxu0
        %v2087 = vadd.f32 %v1981, %v2084
        %s2088 = scalar_lea.vmem [#allocation2], 3
        %v2089 = vld [vmem:[%s2088] ss:$8 sm:$0x3]
        %s2090 = scalar_lea.vmem %s11, 480
        %v2091 = vld [vmem:[%s2090] sm:$0xff]
        %v2092 = vld [vmem:[%s2090 + $0x8] sm:$0xff]
        %v2093 = vld [vmem:[%s2090 + $0x10] sm:$0xff]
        %v2094 = vld [vmem:[%s2090 + $0x18] sm:$0xff]
        %v2095 = vld [vmem:[%s2090 + $0x20] sm:$0xff]
        %v2096 = vld [vmem:[%s2090 + $0x28] sm:$0xff]
        %v2097 = vld [vmem:[%s2090 + $0x30] sm:$0xff]
        %v2098 = vld [vmem:[%s2090 + $0x38] sm:$0xff]
        %v2099 = vld [vmem:[%s2090 + $0x40] sm:$0xff]
        %v2100 = vld [vmem:[%s2090 + $0x48] sm:$0xff]
        %v2101 = vld [vmem:[%s2090 + $0x50] sm:$0xff]
        %v2102 = vld [vmem:[%s2090 + $0x58] sm:$0xff]
        %v2103 = vld [vmem:[%s2090 + $0x60] sm:$0xff]
        %v2104 = vld [vmem:[%s2090 + $0x68] sm:$0xff]
        %v2105 = vld [vmem:[%s2090 + $0x70] sm:$0xff]
        %v2106 = vld [vmem:[%s2090 + $0x78] sm:$0xff]
        %v2107 = vld [vmem:[%s2090 + $0x80] sm:$0xff]
        %v2108 = vld [vmem:[%s2090 + $0x88] sm:$0xff]
        %v2109 = vld [vmem:[%s2090 + $0x90] sm:$0xff]
        %v2110 = vld [vmem:[%s2090 + $0x98] sm:$0xff]
        %v2112 = vlaneseq
        %v2113 = vshrl.u32 %v2112, 7
        %v2114 = vsub.s32 0, %v2113
        %v2115 = vrot.slane %v2089, %v2114
        %v2116 = vlaneseq
        %v2117 = vshrl.u32 %v2116, 7
        %v2118 = vsub.s32 1, %v2117
        %v2119 = vrot.slane %v2089, %v2118
        %v2121 = vsel %vm709, %v2119, 0
        %2123 = vmatprep.subr.mxu0 0.0
        %2124 = vmatpush1.msra.mxu0 %v2091
        %2125 = vmatprep.subr.mxu0 0.0
        %2126 = vmatpush1.msra.mxu0 %v2092
        %2127 = vmatprep.subr.mxu0 0.0
        %2128 = vmatpush1.msra.mxu0 %v2093
        %2129 = vmatprep.subr.mxu0 0.0
        %2130 = vmatpush1.msra.mxu0 %v2094
        %2131 = vmatprep.subr.mxu0 0.0
        %2132 = vmatpush1.msra.mxu0 %v2095
        %2133 = vmatprep.subr.mxu0 0.0
        %2134 = vmatpush1.msra.mxu0 %v2096
        %2135 = vmatprep.subr.mxu0 0.0
        %2136 = vmatpush1.msra.mxu0 %v2097
        %2137 = vmatprep.subr.mxu0 0.0
        %2138 = vmatpush1.msra.mxu0 %v2098
        %2139 = vmatprep.subr.mxu0 0.0
        %2140 = vmatpush1.msra.mxu0 %v2099
        %2141 = vmatprep.subr.mxu0 0.0
        %2142 = vmatpush1.msra.mxu0 %v2100
        %2143 = vmatprep.subr.mxu0 0.0
        %2144 = vmatpush1.msra.mxu0 %v2101
        %2145 = vmatprep.subr.mxu0 0.0
        %2146 = vmatpush1.msra.mxu0 %v2102
        %2147 = vmatprep.subr.mxu0 0.0
        %2148 = vmatpush1.msra.mxu0 %v2103
        %2149 = vmatprep.subr.mxu0 0.0
        %2150 = vmatpush1.msra.mxu0 %v2104
        %2151 = vmatprep.subr.mxu0 0.0
        %2152 = vmatpush1.msra.mxu0 %v2105
        %2153 = vmatprep.subr.mxu0 0.0
        %2154 = vmatpush1.msra.mxu0 %v2106
        %2155 = vmatprep.subr.mxu0 0.0
        %2156 = vmatpush1.msra.mxu0 %v2107
        %2157 = vmatprep.subr.mxu0 0.0
        %2158 = vmatpush1.msra.mxu0 %v2108
        %2159 = vmatprep.subr.mxu0 0.0
        %2160 = vmatpush1.msra.mxu0 %v2109
        %2161 = vmatprep.subr.mxu0 0.0
        %2162 = vmatpush1.msra.mxu0 %v2110
        %2163 = vmatprep.subr.mxu0 0.0
        %2164 = vmatpush1.msra.mxu0 0.0
        %2165 = vmatprep.subr.mxu0 0.0
        %2166 = vmatpush1.msra.mxu0 0.0
        %2167 = vmatprep.subr.mxu0 0.0
        %2168 = vmatpush1.msra.mxu0 0.0
        %2169 = vmatprep.subr.mxu0 0.0
        %2170 = vmatpush1.msra.mxu0 0.0
        %2171 = vmatprep.subr.mxu0 0.0
        %2172 = vmatpush1.msra.mxu0 0.0
        %2173 = vmatprep.subr.mxu0 0.0
        %2174 = vmatpush1.msra.mxu0 0.0
        %2175 = vmatprep.subr.mxu0 0.0
        %2176 = vmatpush1.msra.mxu0 0.0
        %2177 = vmatprep.subr.mxu0 0.0
        %2178 = vmatpush1.msra.mxu0 0.0
        %2179 = vmatprep.subr.mxu0 0.0
        %2180 = vmatpush1.msra.mxu0 0.0
        %2181 = vmatprep.subr.mxu0 0.0
        %2182 = vmatpush1.msra.mxu0 0.0
        %2183 = vmatprep.subr.mxu0 0.0
        %2184 = vmatpush1.msra.mxu0 0.0
        %2185 = vmatprep.subr.mxu0 0.0
        %2186 = vmatpush1.msra.mxu0 0.0
        %2187 = vmatprep.mubr.f32.mxu0 %v2121
        %2188 = vmatmul.mubr.f32.gmra.mrb[0].mxu0 %v2115
        %v2189 = vpop.f32.mrb[0].mxu0
        %v2190 = vadd.f32 0.0, %v2189
        %v2191 = vpop.f32.mrb[0].mxu0
        %2192 = vdwg.mxu0
        %v2193 = vadd.f32 %v2087, %v2190
        %s2194 = scalar_lea.vmem [#allocation2], 4
        %v2195 = vld [vmem:[%s2194] ss:$8 sm:$0x3]
        %s2196 = scalar_lea.vmem %s11, 640
        %v2197 = vld [vmem:[%s2196] sm:$0xff]
        %v2198 = vld [vmem:[%s2196 + $0x8] sm:$0xff]
        %v2199 = vld [vmem:[%s2196 + $0x10] sm:$0xff]
        %v2200 = vld [vmem:[%s2196 + $0x18] sm:$0xff]
        %v2201 = vld [vmem:[%s2196 + $0x20] sm:$0xff]
        %v2202 = vld [vmem:[%s2196 + $0x28] sm:$0xff]
        %v2203 = vld [vmem:[%s2196 + $0x30] sm:$0xff]
        %v2204 = vld [vmem:[%s2196 + $0x38] sm:$0xff]
        %v2205 = vld [vmem:[%s2196 + $0x40] sm:$0xff]
        %v2206 = vld [vmem:[%s2196 + $0x48] sm:$0xff]
        %v2207 = vld [vmem:[%s2196 + $0x50] sm:$0xff]
        %v2208 = vld [vmem:[%s2196 + $0x58] sm:$0xff]
        %v2209 = vld [vmem:[%s2196 + $0x60] sm:$0xff]
        %v2210 = vld [vmem:[%s2196 + $0x68] sm:$0xff]
        %v2211 = vld [vmem:[%s2196 + $0x70] sm:$0xff]
        %v2212 = vld [vmem:[%s2196 + $0x78] sm:$0xff]
        %v2213 = vld [vmem:[%s2196 + $0x80] sm:$0xff]
        %v2214 = vld [vmem:[%s2196 + $0x88] sm:$0xff]
        %v2215 = vld [vmem:[%s2196 + $0x90] sm:$0xff]
        %v2216 = vld [vmem:[%s2196 + $0x98] sm:$0xff]
        %v2218 = vlaneseq
        %v2219 = vshrl.u32 %v2218, 7
        %v2220 = vsub.s32 0, %v2219
        %v2221 = vrot.slane %v2195, %v2220
        %v2222 = vlaneseq
        %v2223 = vshrl.u32 %v2222, 7
        %v2224 = vsub.s32 1, %v2223
        %v2225 = vrot.slane %v2195, %v2224
        %v2227 = vsel %vm709, %v2225, 0
        %2229 = vmatprep.subr.mxu0 0.0
        %2230 = vmatpush1.msra.mxu0 %v2197
        %2231 = vmatprep.subr.mxu0 0.0
        %2232 = vmatpush1.msra.mxu0 %v2198
        %2233 = vmatprep.subr.mxu0 0.0
        %2234 = vmatpush1.msra.mxu0 %v2199
        %2235 = vmatprep.subr.mxu0 0.0
        %2236 = vmatpush1.msra.mxu0 %v2200
        %2237 = vmatprep.subr.mxu0 0.0
        %2238 = vmatpush1.msra.mxu0 %v2201
        %2239 = vmatprep.subr.mxu0 0.0
        %2240 = vmatpush1.msra.mxu0 %v2202
        %2241 = vmatprep.subr.mxu0 0.0
        %2242 = vmatpush1.msra.mxu0 %v2203
        %2243 = vmatprep.subr.mxu0 0.0
        %2244 = vmatpush1.msra.mxu0 %v2204
        %2245 = vmatprep.subr.mxu0 0.0
        %2246 = vmatpush1.msra.mxu0 %v2205
        %2247 = vmatprep.subr.mxu0 0.0
        %2248 = vmatpush1.msra.mxu0 %v2206
        %2249 = vmatprep.subr.mxu0 0.0
        %2250 = vmatpush1.msra.mxu0 %v2207
        %2251 = vmatprep.subr.mxu0 0.0
        %2252 = vmatpush1.msra.mxu0 %v2208
        %2253 = vmatprep.subr.mxu0 0.0
        %2254 = vmatpush1.msra.mxu0 %v2209
        %2255 = vmatprep.subr.mxu0 0.0
        %2256 = vmatpush1.msra.mxu0 %v2210
        %2257 = vmatprep.subr.mxu0 0.0
        %2258 = vmatpush1.msra.mxu0 %v2211
        %2259 = vmatprep.subr.mxu0 0.0
        %2260 = vmatpush1.msra.mxu0 %v2212
        %2261 = vmatprep.subr.mxu0 0.0
        %2262 = vmatpush1.msra.mxu0 %v2213
        %2263 = vmatprep.subr.mxu0 0.0
        %2264 = vmatpush1.msra.mxu0 %v2214
        %2265 = vmatprep.subr.mxu0 0.0
        %2266 = vmatpush1.msra.mxu0 %v2215
        %2267 = vmatprep.subr.mxu0 0.0
        %2268 = vmatpush1.msra.mxu0 %v2216
        %2269 = vmatprep.subr.mxu0 0.0
        %2270 = vmatpush1.msra.mxu0 0.0
        %2271 = vmatprep.subr.mxu0 0.0
        %2272 = vmatpush1.msra.mxu0 0.0
        %2273 = vmatprep.subr.mxu0 0.0
        %2274 = vmatpush1.msra.mxu0 0.0
        %2275 = vmatprep.subr.mxu0 0.0
        %2276 = vmatpush1.msra.mxu0 0.0
        %2277 = vmatprep.subr.mxu0 0.0
        %2278 = vmatpush1.msra.mxu0 0.0
        %2279 = vmatprep.subr.mxu0 0.0
        %2280 = vmatpush1.msra.mxu0 0.0
        %2281 = vmatprep.subr.mxu0 0.0
        %2282 = vmatpush1.msra.mxu0 0.0
        %2283 = vmatprep.subr.mxu0 0.0
        %2284 = vmatpush1.msra.mxu0 0.0
        %2285 = vmatprep.subr.mxu0 0.0
        %2286 = vmatpush1.msra.mxu0 0.0
        %2287 = vmatprep.subr.mxu0 0.0
        %2288 = vmatpush1.msra.mxu0 0.0
        %2289 = vmatprep.subr.mxu0 0.0
        %2290 = vmatpush1.msra.mxu0 0.0
        %2291 = vmatprep.subr.mxu0 0.0
        %2292 = vmatpush1.msra.mxu0 0.0
        %2293 = vmatprep.mubr.f32.mxu0 %v2227
        %2294 = vmatmul.mubr.f32.gmra.mrb[0].mxu0 %v2221
        %v2295 = vpop.f32.mrb[0].mxu0
        %v2296 = vadd.f32 0.0, %v2295
        %v2297 = vpop.f32.mrb[0].mxu0
        %2298 = vdwg.mxu0
        %v2299 = vadd.f32 %v2193, %v2296
        %s2300 = scalar_lea.vmem [#allocation2], 5
        %v2301 = vld [vmem:[%s2300] ss:$8 sm:$0x3]
        %s2302 = scalar_lea.vmem %s11, 800
        %v2303 = vld [vmem:[%s2302] sm:$0xff]
        %v2304 = vld [vmem:[%s2302 + $0x8] sm:$0xff]
        %v2305 = vld [vmem:[%s2302 + $0x10] sm:$0xff]
        %v2306 = vld [vmem:[%s2302 + $0x18] sm:$0xff]
        %v2307 = vld [vmem:[%s2302 + $0x20] sm:$0xff]
        %v2308 = vld [vmem:[%s2302 + $0x28] sm:$0xff]
        %v2309 = vld [vmem:[%s2302 + $0x30] sm:$0xff]
        %v2310 = vld [vmem:[%s2302 + $0x38] sm:$0xff]
        %v2311 = vld [vmem:[%s2302 + $0x40] sm:$0xff]
        %v2312 = vld [vmem:[%s2302 + $0x48] sm:$0xff]
        %v2313 = vld [vmem:[%s2302 + $0x50] sm:$0xff]
        %v2314 = vld [vmem:[%s2302 + $0x58] sm:$0xff]
        %v2315 = vld [vmem:[%s2302 + $0x60] sm:$0xff]
        %v2316 = vld [vmem:[%s2302 + $0x68] sm:$0xff]
        %v2317 = vld [vmem:[%s2302 + $0x70] sm:$0xff]
        %v2318 = vld [vmem:[%s2302 + $0x78] sm:$0xff]
        %v2319 = vld [vmem:[%s2302 + $0x80] sm:$0xff]
        %v2320 = vld [vmem:[%s2302 + $0x88] sm:$0xff]
        %v2321 = vld [vmem:[%s2302 + $0x90] sm:$0xff]
        %v2322 = vld [vmem:[%s2302 + $0x98] sm:$0xff]
        %v2324 = vlaneseq
        %v2325 = vshrl.u32 %v2324, 7
        %v2326 = vsub.s32 0, %v2325
        %v2327 = vrot.slane %v2301, %v2326
        %v2328 = vlaneseq
        %v2329 = vshrl.u32 %v2328, 7
        %v2330 = vsub.s32 1, %v2329
        %v2331 = vrot.slane %v2301, %v2330
        %v2333 = vsel %vm709, %v2331, 0
        %2335 = vmatprep.subr.mxu0 0.0
        %2336 = vmatpush1.msra.mxu0 %v2303
        %2337 = vmatprep.subr.mxu0 0.0
        %2338 = vmatpush1.msra.mxu0 %v2304
        %2339 = vmatprep.subr.mxu0 0.0
        %2340 = vmatpush1.msra.mxu0 %v2305
        %2341 = vmatprep.subr.mxu0 0.0
        %2342 = vmatpush1.msra.mxu0 %v2306
        %2343 = vmatprep.subr.mxu0 0.0
        %2344 = vmatpush1.msra.mxu0 %v2307
        %2345 = vmatprep.subr.mxu0 0.0
        %2346 = vmatpush1.msra.mxu0 %v2308
        %2347 = vmatprep.subr.mxu0 0.0
        %2348 = vmatpush1.msra.mxu0 %v2309
        %2349 = vmatprep.subr.mxu0 0.0
        %2350 = vmatpush1.msra.mxu0 %v2310
        %2351 = vmatprep.subr.mxu0 0.0
        %2352 = vmatpush1.msra.mxu0 %v2311
        %2353 = vmatprep.subr.mxu0 0.0
        %2354 = vmatpush1.msra.mxu0 %v2312
        %2355 = vmatprep.subr.mxu0 0.0
        %2356 = vmatpush1.msra.mxu0 %v2313
        %2357 = vmatprep.subr.mxu0 0.0
        %2358 = vmatpush1.msra.mxu0 %v2314
        %2359 = vmatprep.subr.mxu0 0.0
        %2360 = vmatpush1.msra.mxu0 %v2315
        %2361 = vmatprep.subr.mxu0 0.0
        %2362 = vmatpush1.msra.mxu0 %v2316
        %2363 = vmatprep.subr.mxu0 0.0
        %2364 = vmatpush1.msra.mxu0 %v2317
        %2365 = vmatprep.subr.mxu0 0.0
        %2366 = vmatpush1.msra.mxu0 %v2318
        %2367 = vmatprep.subr.mxu0 0.0
        %2368 = vmatpush1.msra.mxu0 %v2319
        %2369 = vmatprep.subr.mxu0 0.0
        %2370 = vmatpush1.msra.mxu0 %v2320
        %2371 = vmatprep.subr.mxu0 0.0
        %2372 = vmatpush1.msra.mxu0 %v2321
        %2373 = vmatprep.subr.mxu0 0.0
        %2374 = vmatpush1.msra.mxu0 %v2322
        %2375 = vmatprep.subr.mxu0 0.0
        %2376 = vmatpush1.msra.mxu0 0.0
        %2377 = vmatprep.subr.mxu0 0.0
        %2378 = vmatpush1.msra.mxu0 0.0
        %2379 = vmatprep.subr.mxu0 0.0
        %2380 = vmatpush1.msra.mxu0 0.0
        %2381 = vmatprep.subr.mxu0 0.0
        %2382 = vmatpush1.msra.mxu0 0.0
        %2383 = vmatprep.subr.mxu0 0.0
        %2384 = vmatpush1.msra.mxu0 0.0
        %2385 = vmatprep.subr.mxu0 0.0
        %2386 = vmatpush1.msra.mxu0 0.0
        %2387 = vmatprep.subr.mxu0 0.0
        %2388 = vmatpush1.msra.mxu0 0.0
        %2389 = vmatprep.subr.mxu0 0.0
        %2390 = vmatpush1.msra.mxu0 0.0
        %2391 = vmatprep.subr.mxu0 0.0
        %2392 = vmatpush1.msra.mxu0 0.0
        %2393 = vmatprep.subr.mxu0 0.0
        %2394 = vmatpush1.msra.mxu0 0.0
        %2395 = vmatprep.subr.mxu0 0.0
        %2396 = vmatpush1.msra.mxu0 0.0
        %2397 = vmatprep.subr.mxu0 0.0
        %2398 = vmatpush1.msra.mxu0 0.0
        %2399 = vmatprep.mubr.f32.mxu0 %v2333
        %2400 = vmatmul.mubr.f32.gmra.mrb[0].mxu0 %v2327
        %v2401 = vpop.f32.mrb[0].mxu0
        %v2402 = vadd.f32 0.0, %v2401
        %v2403 = vpop.f32.mrb[0].mxu0
        %2404 = vdwg.mxu0
        %v2405 = vadd.f32 %v2299, %v2402
        %s2406 = scalar_lea.vmem [#allocation2], 6
        %v2407 = vld [vmem:[%s2406] ss:$8 sm:$0x3]
        %s2408 = scalar_lea.vmem %s11, 960
        %v2409 = vld [vmem:[%s2408] sm:$0xff]
        %v2410 = vld [vmem:[%s2408 + $0x8] sm:$0xff]
        %v2411 = vld [vmem:[%s2408 + $0x10] sm:$0xff]
        %v2412 = vld [vmem:[%s2408 + $0x18] sm:$0xff]
        %v2413 = vld [vmem:[%s2408 + $0x20] sm:$0xff]
        %v2414 = vld [vmem:[%s2408 + $0x28] sm:$0xff]
        %v2415 = vld [vmem:[%s2408 + $0x30] sm:$0xff]
        %v2416 = vld [vmem:[%s2408 + $0x38] sm:$0xff]
        %v2417 = vld [vmem:[%s2408 + $0x40] sm:$0xff]
        %v2418 = vld [vmem:[%s2408 + $0x48] sm:$0xff]
        %v2419 = vld [vmem:[%s2408 + $0x50] sm:$0xff]
        %v2420 = vld [vmem:[%s2408 + $0x58] sm:$0xff]
        %v2421 = vld [vmem:[%s2408 + $0x60] sm:$0xff]
        %v2422 = vld [vmem:[%s2408 + $0x68] sm:$0xff]
        %v2423 = vld [vmem:[%s2408 + $0x70] sm:$0xff]
        %v2424 = vld [vmem:[%s2408 + $0x78] sm:$0xff]
        %v2425 = vld [vmem:[%s2408 + $0x80] sm:$0xff]
        %v2426 = vld [vmem:[%s2408 + $0x88] sm:$0xff]
        %v2427 = vld [vmem:[%s2408 + $0x90] sm:$0xff]
        %v2428 = vld [vmem:[%s2408 + $0x98] sm:$0xff]
        %v2430 = vlaneseq
        %v2431 = vshrl.u32 %v2430, 7
        %v2432 = vsub.s32 0, %v2431
        %v2433 = vrot.slane %v2407, %v2432
        %v2434 = vlaneseq
        %v2435 = vshrl.u32 %v2434, 7
        %v2436 = vsub.s32 1, %v2435
        %v2437 = vrot.slane %v2407, %v2436
        %v2439 = vsel %vm709, %v2437, 0
        %2441 = vmatprep.subr.mxu0 0.0
        %2442 = vmatpush1.msra.mxu0 %v2409
        %2443 = vmatprep.subr.mxu0 0.0
        %2444 = vmatpush1.msra.mxu0 %v2410
        %2445 = vmatprep.subr.mxu0 0.0
        %2446 = vmatpush1.msra.mxu0 %v2411
        %2447 = vmatprep.subr.mxu0 0.0
        %2448 = vmatpush1.msra.mxu0 %v2412
        %2449 = vmatprep.subr.mxu0 0.0
        %2450 = vmatpush1.msra.mxu0 %v2413
        %2451 = vmatprep.subr.mxu0 0.0
        %2452 = vmatpush1.msra.mxu0 %v2414
        %2453 = vmatprep.subr.mxu0 0.0
        %2454 = vmatpush1.msra.mxu0 %v2415
        %2455 = vmatprep.subr.mxu0 0.0
        %2456 = vmatpush1.msra.mxu0 %v2416
        %2457 = vmatprep.subr.mxu0 0.0
        %2458 = vmatpush1.msra.mxu0 %v2417
        %2459 = vmatprep.subr.mxu0 0.0
        %2460 = vmatpush1.msra.mxu0 %v2418
        %2461 = vmatprep.subr.mxu0 0.0
        %2462 = vmatpush1.msra.mxu0 %v2419
        %2463 = vmatprep.subr.mxu0 0.0
        %2464 = vmatpush1.msra.mxu0 %v2420
        %2465 = vmatprep.subr.mxu0 0.0
        %2466 = vmatpush1.msra.mxu0 %v2421
        %2467 = vmatprep.subr.mxu0 0.0
        %2468 = vmatpush1.msra.mxu0 %v2422
        %2469 = vmatprep.subr.mxu0 0.0
        %2470 = vmatpush1.msra.mxu0 %v2423
        %2471 = vmatprep.subr.mxu0 0.0
        %2472 = vmatpush1.msra.mxu0 %v2424
        %2473 = vmatprep.subr.mxu0 0.0
        %2474 = vmatpush1.msra.mxu0 %v2425
        %2475 = vmatprep.subr.mxu0 0.0
        %2476 = vmatpush1.msra.mxu0 %v2426
        %2477 = vmatprep.subr.mxu0 0.0
        %2478 = vmatpush1.msra.mxu0 %v2427
        %2479 = vmatprep.subr.mxu0 0.0
        %2480 = vmatpush1.msra.mxu0 %v2428
        %2481 = vmatprep.subr.mxu0 0.0
        %2482 = vmatpush1.msra.mxu0 0.0
        %2483 = vmatprep.subr.mxu0 0.0
        %2484 = vmatpush1.msra.mxu0 0.0
        %2485 = vmatprep.subr.mxu0 0.0
        %2486 = vmatpush1.msra.mxu0 0.0
        %2487 = vmatprep.subr.mxu0 0.0
        %2488 = vmatpush1.msra.mxu0 0.0
        %2489 = vmatprep.subr.mxu0 0.0
        %2490 = vmatpush1.msra.mxu0 0.0
        %2491 = vmatprep.subr.mxu0 0.0
        %2492 = vmatpush1.msra.mxu0 0.0
        %2493 = vmatprep.subr.mxu0 0.0
        %2494 = vmatpush1.msra.mxu0 0.0
        %2495 = vmatprep.subr.mxu0 0.0
        %2496 = vmatpush1.msra.mxu0 0.0
        %2497 = vmatprep.subr.mxu0 0.0
        %2498 = vmatpush1.msra.mxu0 0.0
        %2499 = vmatprep.subr.mxu0 0.0
        %2500 = vmatpush1.msra.mxu0 0.0
        %2501 = vmatprep.subr.mxu0 0.0
        %2502 = vmatpush1.msra.mxu0 0.0
        %2503 = vmatprep.subr.mxu0 0.0
        %2504 = vmatpush1.msra.mxu0 0.0
        %2505 = vmatprep.mubr.f32.mxu0 %v2439
        %2506 = vmatmul.mubr.f32.gmra.mrb[0].mxu0 %v2433
        %v2507 = vpop.f32.mrb[0].mxu0
        %v2508 = vadd.f32 0.0, %v2507
        %v2509 = vpop.f32.mrb[0].mxu0
        %2510 = vdwg.mxu0
        %v2511 = vadd.f32 %v2405, %v2508
        %s2512 = scalar_lea.vmem [#allocation2], 7
        %v2513 = vld [vmem:[%s2512] ss:$8 sm:$0x3]
        %s2514 = scalar_lea.vmem %s11, 1120
        %v2515 = vld [vmem:[%s2514] sm:$0xff]
        %v2516 = vld [vmem:[%s2514 + $0x8] sm:$0xff]
        %v2517 = vld [vmem:[%s2514 + $0x10] sm:$0xff]
        %v2518 = vld [vmem:[%s2514 + $0x18] sm:$0xff]
        %v2519 = vld [vmem:[%s2514 + $0x20] sm:$0xff]
        %v2520 = vld [vmem:[%s2514 + $0x28] sm:$0xff]
        %v2521 = vld [vmem:[%s2514 + $0x30] sm:$0xff]
        %v2522 = vld [vmem:[%s2514 + $0x38] sm:$0xff]
        %v2523 = vld [vmem:[%s2514 + $0x40] sm:$0xff]
        %v2524 = vld [vmem:[%s2514 + $0x48] sm:$0xff]
        %v2525 = vld [vmem:[%s2514 + $0x50] sm:$0xff]
        %v2526 = vld [vmem:[%s2514 + $0x58] sm:$0xff]
        %v2527 = vld [vmem:[%s2514 + $0x60] sm:$0xff]
        %v2528 = vld [vmem:[%s2514 + $0x68] sm:$0xff]
        %v2529 = vld [vmem:[%s2514 + $0x70] sm:$0xff]
        %v2530 = vld [vmem:[%s2514 + $0x78] sm:$0xff]
        %v2531 = vld [vmem:[%s2514 + $0x80] sm:$0xff]
        %v2532 = vld [vmem:[%s2514 + $0x88] sm:$0xff]
        %v2533 = vld [vmem:[%s2514 + $0x90] sm:$0xff]
        %v2534 = vld [vmem:[%s2514 + $0x98] sm:$0xff]
        %v2536 = vlaneseq
        %v2537 = vshrl.u32 %v2536, 7
        %v2538 = vsub.s32 0, %v2537
        %v2539 = vrot.slane %v2513, %v2538
        %v2540 = vlaneseq
        %v2541 = vshrl.u32 %v2540, 7
        %v2542 = vsub.s32 1, %v2541
        %v2543 = vrot.slane %v2513, %v2542
        %v2545 = vsel %vm709, %v2543, 0
        %2547 = vmatprep.subr.mxu0 0.0
        %2548 = vmatpush1.msra.mxu0 %v2515
        %2549 = vmatprep.subr.mxu0 0.0
        %2550 = vmatpush1.msra.mxu0 %v2516
        %2551 = vmatprep.subr.mxu0 0.0
        %2552 = vmatpush1.msra.mxu0 %v2517
        %2553 = vmatprep.subr.mxu0 0.0
        %2554 = vmatpush1.msra.mxu0 %v2518
        %2555 = vmatprep.subr.mxu0 0.0
        %2556 = vmatpush1.msra.mxu0 %v2519
        %2557 = vmatprep.subr.mxu0 0.0
        %2558 = vmatpush1.msra.mxu0 %v2520
        %2559 = vmatprep.subr.mxu0 0.0
        %2560 = vmatpush1.msra.mxu0 %v2521
        %2561 = vmatprep.subr.mxu0 0.0
        %2562 = vmatpush1.msra.mxu0 %v2522
        %2563 = vmatprep.subr.mxu0 0.0
        %2564 = vmatpush1.msra.mxu0 %v2523
        %2565 = vmatprep.subr.mxu0 0.0
        %2566 = vmatpush1.msra.mxu0 %v2524
        %2567 = vmatprep.subr.mxu0 0.0
        %2568 = vmatpush1.msra.mxu0 %v2525
        %2569 = vmatprep.subr.mxu0 0.0
        %2570 = vmatpush1.msra.mxu0 %v2526
        %2571 = vmatprep.subr.mxu0 0.0
        %2572 = vmatpush1.msra.mxu0 %v2527
        %2573 = vmatprep.subr.mxu0 0.0
        %2574 = vmatpush1.msra.mxu0 %v2528
        %2575 = vmatprep.subr.mxu0 0.0
        %2576 = vmatpush1.msra.mxu0 %v2529
        %2577 = vmatprep.subr.mxu0 0.0
        %2578 = vmatpush1.msra.mxu0 %v2530
        %2579 = vmatprep.subr.mxu0 0.0
        %2580 = vmatpush1.msra.mxu0 %v2531
        %2581 = vmatprep.subr.mxu0 0.0
        %2582 = vmatpush1.msra.mxu0 %v2532
        %2583 = vmatprep.subr.mxu0 0.0
        %2584 = vmatpush1.msra.mxu0 %v2533
        %2585 = vmatprep.subr.mxu0 0.0
        %2586 = vmatpush1.msra.mxu0 %v2534
        %2587 = vmatprep.subr.mxu0 0.0
        %2588 = vmatpush1.msra.mxu0 0.0
        %2589 = vmatprep.subr.mxu0 0.0
        %2590 = vmatpush1.msra.mxu0 0.0
        %2591 = vmatprep.subr.mxu0 0.0
        %2592 = vmatpush1.msra.mxu0 0.0
        %2593 = vmatprep.subr.mxu0 0.0
        %2594 = vmatpush1.msra.mxu0 0.0
        %2595 = vmatprep.subr.mxu0 0.0
        %2596 = vmatpush1.msra.mxu0 0.0
        %2597 = vmatprep.subr.mxu0 0.0
        %2598 = vmatpush1.msra.mxu0 0.0
        %2599 = vmatprep.subr.mxu0 0.0
        %2600 = vmatpush1.msra.mxu0 0.0
        %2601 = vmatprep.subr.mxu0 0.0
        %2602 = vmatpush1.msra.mxu0 0.0
        %2603 = vmatprep.subr.mxu0 0.0
        %2604 = vmatpush1.msra.mxu0 0.0
        %2605 = vmatprep.subr.mxu0 0.0
        %2606 = vmatpush1.msra.mxu0 0.0
        %2607 = vmatprep.subr.mxu0 0.0
        %2608 = vmatpush1.msra.mxu0 0.0
        %2609 = vmatprep.subr.mxu0 0.0
        %2610 = vmatpush1.msra.mxu0 0.0
        %2611 = vmatprep.mubr.f32.mxu0 %v2545
        %2612 = vmatmul.mubr.f32.gmra.mrb[0].mxu0 %v2539
        %v2613 = vpop.f32.mrb[0].mxu0
        %v2614 = vadd.f32 0.0, %v2613
        %v2615 = vpop.f32.mrb[0].mxu0
        %2616 = vdwg.mxu0
        %v2617 = vadd.f32 %v2511, %v2614
        %v2618 = vmax.f32 %v2617, 0.0
        %v2619 = vld [vmem:[%s13] sm:$0xff]
        %v2620 = vld [vmem:[%s13 + $0x8] sm:$0xff]
        %v2621 = vld [vmem:[%s13 + $0x10] sm:$0xff]
        %v2622 = vld [vmem:[%s13 + $0x18] sm:$0xff]
        %v2623 = vld [vmem:[%s14] sm:$0x1]
        %v2625 = vsel %vm709, %v2618, 0
        %2627 = vmatprep.subr.mxu0 0.0
        %2628 = vmatpush1.msra.mxu0 %v2619
        %2629 = vmatprep.subr.mxu0 0.0
        %2630 = vmatpush1.msra.mxu0 %v2620
        %2631 = vmatprep.subr.mxu0 0.0
        %2632 = vmatpush1.msra.mxu0 %v2621
        %2633 = vmatprep.subr.mxu0 0.0
        %2634 = vmatpush1.msra.mxu0 %v2622
        %2635 = vmatprep.subr.mxu0 0.0
        %2636 = vmatpush1.msra.mxu0 0.0
        %2637 = vmatprep.subr.mxu0 0.0
        %2638 = vmatpush1.msra.mxu0 0.0
        %2639 = vmatprep.subr.mxu0 0.0
        %2640 = vmatpush1.msra.mxu0 0.0
        %2641 = vmatprep.subr.mxu0 0.0
        %2642 = vmatpush1.msra.mxu0 0.0
        %2643 = vmatprep.subr.mxu0 0.0
        %2644 = vmatpush1.msra.mxu0 0.0
        %2645 = vmatprep.subr.mxu0 0.0
        %2646 = vmatpush1.msra.mxu0 0.0
        %2647 = vmatprep.subr.mxu0 0.0
        %2648 = vmatpush1.msra.mxu0 0.0
        %2649 = vmatprep.subr.mxu0 0.0
        %2650 = vmatpush1.msra.mxu0 0.0
        %2651 = vmatprep.subr.mxu0 0.0
        %2652 = vmatpush1.msra.mxu0 0.0
        %2653 = vmatprep.subr.mxu0 0.0
        %2654 = vmatpush1.msra.mxu0 0.0
        %2655 = vmatprep.subr.mxu0 0.0
        %2656 = vmatpush1.msra.mxu0 0.0
        %2657 = vmatprep.subr.mxu0 0.0
        %2658 = vmatpush1.msra.mxu0 0.0
        %2659 = vmatprep.subr.mxu0 0.0
        %2660 = vmatpush1.msra.mxu0 0.0
        %2661 = vmatprep.subr.mxu0 0.0
        %2662 = vmatpush1.msra.mxu0 0.0
        %2663 = vmatprep.subr.mxu0 0.0
        %2664 = vmatpush1.msra.mxu0 0.0
        %2665 = vmatprep.subr.mxu0 0.0
        %2666 = vmatpush1.msra.mxu0 0.0
        %2667 = vmatprep.subr.mxu0 0.0
        %2668 = vmatpush1.msra.mxu0 0.0
        %2669 = vmatprep.subr.mxu0 0.0
        %2670 = vmatpush1.msra.mxu0 0.0
        %2671 = vmatprep.subr.mxu0 0.0
        %2672 = vmatpush1.msra.mxu0 0.0
        %2673 = vmatprep.subr.mxu0 0.0
        %2674 = vmatpush1.msra.mxu0 0.0
        %2675 = vmatprep.subr.mxu0 0.0
        %2676 = vmatpush1.msra.mxu0 0.0
        %2677 = vmatprep.subr.mxu0 0.0
        %2678 = vmatpush1.msra.mxu0 0.0
        %2679 = vmatprep.subr.mxu0 0.0
        %2680 = vmatpush1.msra.mxu0 0.0
        %2681 = vmatprep.subr.mxu0 0.0
        %2682 = vmatpush1.msra.mxu0 0.0
        %2683 = vmatprep.subr.mxu0 0.0
        %2684 = vmatpush1.msra.mxu0 0.0
        %2685 = vmatprep.subr.mxu0 0.0
        %2686 = vmatpush1.msra.mxu0 0.0
        %2687 = vmatprep.subr.mxu0 0.0
        %2688 = vmatpush1.msra.mxu0 0.0
        %2689 = vmatprep.subr.mxu0 0.0
        %2690 = vmatpush1.msra.mxu0 0.0
        %2691 = vmatprep.mubr.f32.mxu0 0.0
        %2692 = vmatmul.mubr.f32.gmra.mrb[0].mxu0 %v2625
        %v2693 = vpop.f32.mrb[0].mxu0
        %v2694 = vadd.f32 %v2623, %v2693
        %v2695 = vpop.f32.mrb[0].mxu0
        %2696 = vdwg.mxu0
        %vm2697 = vcmask 32768
        %2698 = vst.msk [vmem:[%s486] sm:$0x1] %vm2697, %v2694
        %s2699 = sand.u32 %s357, 1
        %s2700 = scalar_lea.sflag [#allocation4], %s2699
        %s2701 = sand.u32 %s357, 1
        %s2702 = scalar_lea.vmem [#allocation3], %s2701
        // Predicated region
        $region81: #{tpu_custom_call.1} parent=79 // pred_check
          %p2703 = pneg %p367
        $region82: #{tpu_custom_call.1} parent=79 // pred_check_branch
          %2705 = sbr.rel (%p2703) target = $region84
        $region83: #{tpu_custom_call.1} parent=79 // pred_region
          %s2707 = ssub.s32 16, 16
          %2708 = vsyncadd %s2700, %s2707
          %s2709 = smul.addr %s29, 16
          %s2710 = scalar_lea.hbm %s15, %s2709
          %s2712 = sshll.u32 %s2702, 4
          %s2713 = int_to_ptr.vmem [resolvable:$true] %s2712
          %2715 = dma.vmem_to_hbm [thread:$0]  %s2713, 16, %s2710, %s2700
        $region84: #{tpu_custom_call.1} parent=79 // pred_fallthru
          _
      $region80: #{tpu_custom_call.1} parent=5 // pred_fallthru
        _
      %p2716 = scmp.le.s32.totalorder 2, %s24
      // Predicated region
      $region85: #{tpu_custom_call.1} parent=5 // pred_check
        %p2717 = pneg %p2716
      $region86: #{tpu_custom_call.1} parent=5 // pred_check_branch
        %2719 = sbr.rel (%p2717) target = $region88
      $region87: #{tpu_custom_call.1} parent=5 // pred_region
        %s2720 = ssub.s32 %s24, 2
        // Predicated region
        $region89: #{tpu_custom_call.1} parent=87 // pred_check
          %p2721 = pneg %p373
        $region90: #{tpu_custom_call.1} parent=87 // pred_check_branch
          %2723 = sbr.rel (%p2721) target = $region92
        $region91: #{tpu_custom_call.1} parent=87 // pred_region
          %s2724 = sand.u32 %s358, 1
          %s2725 = scalar_lea.sflag [#allocation4], %s2724
          %s2726 = sand.u32 %s358, 1
          %s2727 = scalar_lea.vmem [#allocation3], %s2726
          %2728 = dma.done %s2725, 16
        $region92: #{tpu_custom_call.1} parent=87 // pred_fallthru
          _
      $region88: #{tpu_custom_call.1} parent=5 // pred_fallthru
        _
    $region6: #{tpu_custom_call.1} parent=1 // loop_footer
      %s28 = sadd.s32 1, %s24
    $region7: #{tpu_custom_call.1} parent=1 // loop_footer_branch
      %23 = sbr.rel target = $region3
    $region8: #{tpu_custom_call.1} parent=1 // loop_exit
      _
    %2729 = vsyncpa [#allocation4], 1
    %s2730 = scalar_lea.sflag [#allocation4], 1
    %2731 = vsyncpa %s2730, 1

</llo_original>
